<compile_context>
chip_gen: v7x
topology: tpu7x:2x2x1
jax: 0.10.0
libtpu: 0.0.40
codegen_flags: <defaults>
</compile_context>

<pallas_src>
import jax
import jax.numpy as jnp
from jax.experimental import pallas as pl
from jax.experimental.pallas import tpu as pltpu

# ----- model hyper-parameters (small, consistent with the module) -----------
D_MODEL = 32
NHEAD = 4
HEAD_DIM = D_MODEL // NHEAD
DIM_FF = 64
SCALE = 1.0 / float(HEAD_DIM) ** 0.5
EPS = 1e-5

# problem sizes
B = 2          # batch
S_T = 8        # tgt sequence length
S_M = 16       # memory sequence length
BT = B * S_T   # flattened tgt rows      (16)
BM = B * S_M   # flattened memory rows   (32)

W_ROWS = 200   # weight-slab rows (sublane aligned)


# ----------------------------- kernel helpers -------------------------------
def _dot(a, b):
    return jnp.dot(a, b, preferred_element_type=jnp.float32)


def _dot_nt(a, b):
    # a @ b.T without materialising an explicit transpose node.
    return jax.lax.dot_general(a, b, (((1,), (1,)), ((), ())),
                               preferred_element_type=jnp.float32)


def decoder_layer_kernel(acts_ref, w_ref, out_ref):
    # ---- lane-packed activations: [tgt | query_pos | memory | pos] ----------
    acts = acts_ref[...]                      # (32, 128)
    tgt = acts[0:BT, 0:D_MODEL]
    qpos = acts[0:BT, D_MODEL:2 * D_MODEL]
    mem = acts[:, 2 * D_MODEL:3 * D_MODEL]
    pos = acts[:, 3 * D_MODEL:4 * D_MODEL]

    # ---- weight blocks (lane-dense, loaded as whole row blocks) -------------
    qkw = w_ref[0:32, :]                      # saQ*scale | saK | caQ*scale | caK
    sa_vow = w_ref[32:64, :]                  # 4 folded Wvo heads along lanes
    ca_vow = w_ref[64:96, :]
    w1 = w_ref[96:128, :][:, 0:DIM_FF]        # (32, 64)
    w2 = w_ref[128:192, :][:, 0:D_MODEL]      # (64, 32)

    # ---- hoisted constant rows (loaded once, reused everywhere) -------------
    const = w_ref[192:W_ROWS, :]              # (8, 128)
    qk_b = const[0:1, :]                      # packed q/k biases (q pre-scaled)
    sa_bvo = const[1:2, :]                    # folded V biases, heads along lanes
    ca_bvo = const[2:3, :]
    sa_bo = const[3:4, 0:32]
    ca_bo = const[3:4, 32:64]
    b2 = const[3:4, 64:96]
    b1 = const[4:5, 0:DIM_FF]
    n1w, n1b = const[5:6, 0:32], const[5:6, 32:64]
    n2w, n2b = const[5:6, 64:96], const[5:6, 96:128]
    n3w, n3b = const[6:7, 0:32], const[6:7, 32:64]

    def layernorm(x, wln, bln):
        mu = jnp.mean(x, axis=-1, keepdims=True)
        xc = x - mu
        var = jnp.mean(xc * xc, axis=-1, keepdims=True)
        return xc * jax.lax.rsqrt(var + EPS) * wln + bln

    def attention(q_all, k_all, v_all, bo, sq, sk):
        """q_all: (B*sq, D) heads along lanes; k_all: (B*sk, D) heads along
        lanes; v_all: (B*sk, H*D) folded per-head V(+O) along lanes.

        Scores for all (batch, head) pairs are stacked along sublanes so the
        whole attention runs ONE softmax (one max, one exp, one sum, one
        approx reciprocal).  Per-head outputs accumulate via dot-accumulate
        chains into one (sq, D) tile per batch (MRB-friendly on v7x)."""
        s_list = []
        for b in range(B):
            for h in range(NHEAD):
                qbh = q_all[b * sq:(b + 1) * sq, h * HEAD_DIM:(h + 1) * HEAD_DIM]
                kbh = k_all[b * sk:(b + 1) * sk, h * HEAD_DIM:(h + 1) * HEAD_DIM]
                s_list.append(_dot_nt(qbh, kbh))            # (sq, sk)
        s = jnp.concatenate(s_list, axis=0)                 # (B*H*sq, sk)
        s = s - jnp.max(s, axis=-1, keepdims=True)
        p = jnp.exp(s)
        p = p * pl.reciprocal(jnp.sum(p, axis=-1, keepdims=True), approx=True)

        rows = []
        for b in range(B):
            acc = None
            for h in range(NHEAD):
                idx = b * NHEAD + h
                pbh = p[idx * sq:(idx + 1) * sq, :]                       # (sq, sk)
                vbh = v_all[b * sk:(b + 1) * sk,
                            h * D_MODEL:(h + 1) * D_MODEL]               # (sk, D)
                d = _dot(pbh, vbh)                                       # (sq, D)
                acc = d if acc is None else acc + d
            rows.append(acc)
        return jnp.concatenate(rows, axis=0) + bo           # (B*sq, D)

    # --- self attention (q = k = tgt + query_pos, value = tgt) ---------------
    qk_in = tgt + qpos
    sa_qk = _dot(qk_in, qkw[:, 0:2 * D_MODEL]) + qk_b[:, 0:2 * D_MODEL]   # (16, 64)
    sa_v = _dot(tgt, sa_vow) + sa_bvo                                      # (16, 128)
    sa = attention(sa_qk[:, 0:D_MODEL], sa_qk[:, D_MODEL:2 * D_MODEL],
                   sa_v, sa_bo, S_T, S_T)
    x = layernorm(tgt + sa, n1w, n1b)                       # dropout1 = identity

    # --- cross attention (q = x + query_pos, k = memory + pos, v = memory) ---
    ca_q = _dot(x + qpos, qkw[:, 2 * D_MODEL:3 * D_MODEL]) \
        + qk_b[:, 2 * D_MODEL:3 * D_MODEL]                                 # (16, 32)
    ca_k = _dot(mem + pos, qkw[:, 3 * D_MODEL:4 * D_MODEL]) \
        + qk_b[:, 3 * D_MODEL:4 * D_MODEL]                                 # (32, 32)
    ca_v = _dot(mem, ca_vow) + ca_bvo                                      # (32, 128)
    ca = attention(ca_q, ca_k, ca_v, ca_bo, S_T, S_M)
    x = layernorm(x + ca, n2w, n2b)                         # dropout2 = identity

    # --- feed-forward (linear1 -> relu -> linear2) ----------------------------
    ffn_h = jnp.maximum(_dot(x, w1) + b1, 0.0)              # relu; dropout = identity
    f = _dot(ffn_h, w2) + b2
    x = layernorm(x + f, n3w, n3b)                          # dropout3 = identity

    out_ref[...] = x.astype(out_ref.dtype)


# ------------------------- wrapper-side weight packing ------------------------
def _pack_weights(p):
    """Pack every weight / bias / LN constant into one lane-dense (200, 128)
    f32 slab.  The 1/sqrt(head_dim) scale is folded into Wq/bq; the per-head
    V and output projections are folded into per-head Wvo = Wv_h @ Wo_h."""
    hp = jax.lax.Precision.HIGHEST

    def fold_vo(pre):
        wv, wo = p[f"{pre}_wv"], p[f"{pre}_wo"]
        bv = p[f"{pre}_bv"][0]
        w_cols, b_cols = [], []
        for h in range(NHEAD):
            sl = slice(h * HEAD_DIM, (h + 1) * HEAD_DIM)
            w_cols.append(jnp.dot(wv[:, sl], wo[sl, :], precision=hp))   # (32, 32)
            b_cols.append(jnp.dot(bv[sl], wo[sl, :], precision=hp))      # (32,)
        return jnp.concatenate(w_cols, axis=1), jnp.concatenate(b_cols, axis=0)

    sa_vo_w, sa_bvo = fold_vo("sa")          # (32, 128), (128,)
    ca_vo_w, ca_bvo = fold_vo("ca")

    qk_w = jnp.concatenate([p["sa_wq"] * SCALE, p["sa_wk"],
                            p["ca_wq"] * SCALE, p["ca_wk"]], axis=1)     # (32, 128)
    qk_b = jnp.concatenate([p["sa_bq"][0] * SCALE, p["sa_bk"][0],
                            p["ca_bq"][0] * SCALE, p["ca_bk"][0]], axis=0)  # (128,)

    W = jnp.zeros((W_ROWS, 128), jnp.float32)
    W = W.at[0:32, :].set(qk_w)
    W = W.at[32:64, :].set(sa_vo_w)
    W = W.at[64:96, :].set(ca_vo_w)
    W = W.at[96:128, 0:DIM_FF].set(p["w1"])
    W = W.at[128:192, 0:D_MODEL].set(p["w2"])
    W = W.at[192, :].set(qk_b)
    W = W.at[193, :].set(sa_bvo)
    W = W.at[194, :].set(ca_bvo)
    W = W.at[195, 0:32].set(p["sa_bo"][0])
    W = W.at[195, 32:64].set(p["ca_bo"][0])
    W = W.at[195, 64:96].set(p["b2"][0])
    W = W.at[196, 0:DIM_FF].set(p["b1"][0])
    W = W.at[197, 0:32].set(p["n1_w"][0])
    W = W.at[197, 32:64].set(p["n1_b"][0])
    W = W.at[197, 64:96].set(p["n2_w"][0])
    W = W.at[197, 96:128].set(p["n2_b"][0])
    W = W.at[198, 0:32].set(p["n3_w"][0])
    W = W.at[198, 32:64].set(p["n3_b"][0])
    return W


def _pack_acts(tgt, memory, query_pos, pos):
    """Lane-pack the four activation streams side by side: (32, 128)."""
    def flat(x):   # (S, B, E) -> batch-major (B*S, E)
        return jnp.transpose(x, (1, 0, 2)).reshape(-1, D_MODEL)

    acts = jnp.zeros((BM, 4 * D_MODEL), jnp.float32)
    acts = acts.at[0:BT, 0:D_MODEL].set(flat(tgt))
    acts = acts.at[0:BT, D_MODEL:2 * D_MODEL].set(flat(query_pos))
    acts = acts.at[:, 2 * D_MODEL:3 * D_MODEL].set(flat(memory))
    acts = acts.at[:, 3 * D_MODEL:4 * D_MODEL].set(flat(pos))
    return acts


def transformer_decoder_layer(tgt, memory, query_pos, pos, params):
    """tgt/query_pos: (S_T, B, E); memory/pos: (S_M, B, E).  Returns (S_T, B, E)."""
    acts = _pack_acts(tgt, memory, query_pos, pos)
    W = _pack_weights(params)

    out = pl.pallas_call(
        decoder_layer_kernel,
        out_shape=jax.ShapeDtypeStruct((BT, D_MODEL), tgt.dtype),
        compiler_params=pltpu.CompilerParams(vmem_limit_bytes=4 * 1024 * 1024),
    )(acts, W)

    return jnp.transpose(out.reshape(B, S_T, D_MODEL), (1, 0, 2))


# ----------------------- deterministic parameter init ------------------------
def init_params(key):
    ks = iter(jax.random.split(key, 32))

    def w(shape, scale=0.08):
        return (scale * jax.random.normal(next(ks), shape)).astype(jnp.float32)

    p = {}
    for pre in ("sa", "ca"):
        p[f"{pre}_wq"] = w((D_MODEL, D_MODEL))
        p[f"{pre}_wk"] = w((D_MODEL, D_MODEL))
        p[f"{pre}_wv"] = w((D_MODEL, D_MODEL))
        p[f"{pre}_bq"] = w((1, D_MODEL))
        p[f"{pre}_bk"] = w((1, D_MODEL))
        p[f"{pre}_bv"] = w((1, D_MODEL))
        p[f"{pre}_wo"] = w((D_MODEL, D_MODEL))
        p[f"{pre}_bo"] = w((1, D_MODEL))
    p["w1"] = w((D_MODEL, DIM_FF))
    p["b1"] = w((1, DIM_FF))
    p["w2"] = w((DIM_FF, D_MODEL))
    p["b2"] = w((1, D_MODEL))
    for n in ("n1", "n2", "n3"):
        p[f"{n}_w"] = jnp.ones((1, D_MODEL), jnp.float32)
        p[f"{n}_b"] = jnp.zeros((1, D_MODEL), jnp.float32)
    return p


# --------------------------- pure-JAX reference ------------------------------
def reference_layer(tgt, memory, query_pos, pos, p):
    def ln(x, w, b):
        mu = x.mean(-1, keepdims=True)
        var = ((x - mu) ** 2).mean(-1, keepdims=True)
        return (x - mu) / jnp.sqrt(var + EPS) * w[0] + b[0]

    def mha(q_in, k_in, v_in, pre):
        q = q_in @ p[f"{pre}_wq"] + p[f"{pre}_bq"][0]
        k = k_in @ p[f"{pre}_wk"] + p[f"{pre}_bk"][0]
        v = v_in @ p[f"{pre}_wv"] + p[f"{pre}_bv"][0]
        Bq, Sq, _ = q.shape
        Sk = k.shape[1]
        qh = q.reshape(Bq, Sq, NHEAD, HEAD_DIM).transpose(0, 2, 1, 3)
        kh = k.reshape(Bq, Sk, NHEAD, HEAD_DIM).transpose(0, 2, 1, 3)
        vh = v.reshape(Bq, Sk, NHEAD, HEAD_DIM).transpose(0, 2, 1, 3)
        s = jnp.einsum("bhqd,bhkd->bhqk", qh * SCALE, kh)
        prob = jax.nn.softmax(s, axis=-1)
        o = jnp.einsum("bhqk,bhkd->bhqd", prob, vh)
        o = o.transpose(0, 2, 1, 3).reshape(Bq, Sq, D_MODEL)
        return o @ p[f"{pre}_wo"] + p[f"{pre}_bo"][0]

    t = jnp.transpose(tgt, (1, 0, 2))
    m = jnp.transpose(memory, (1, 0, 2))
    qp = jnp.transpose(query_pos, (1, 0, 2))
    ps = jnp.transpose(pos, (1, 0, 2))

    qk = t + qp
    x = ln(t + mha(qk, qk, t, "sa"), p["n1_w"], p["n1_b"])
    x = ln(x + mha(x + qp, m + ps, m, "ca"), p["n2_w"], p["n2_b"])
    h = jnp.maximum(x @ p["w1"] + p["b1"][0], 0.0)
    x = ln(x + (h @ p["w2"] + p["b2"][0]), p["n3_w"], p["n3_b"])
    return jnp.transpose(x, (1, 0, 2))


if __name__ == "__main__":
    key = jax.random.PRNGKey(0)
    k1, k2, k3, k4, kp = jax.random.split(key, 5)
    tgt = jax.random.normal(k1, (S_T, B, D_MODEL), jnp.float32)
    memory = jax.random.normal(k2, (S_M, B, D_MODEL), jnp.float32)
    query_pos = jax.random.normal(k3, (S_T, B, D_MODEL), jnp.float32)
    pos = jax.random.normal(k4, (S_M, B, D_MODEL), jnp.float32)
    params = init_params(kp)

    out = transformer_decoder_layer(tgt, memory, query_pos, pos, params)
    out = jax.block_until_ready(out)

    ref = reference_layer(tgt, memory, query_pos, pos, params)
    assert out.shape == (S_T, B, D_MODEL)
    # Tolerance slightly relaxed vs. 1e-4 to allow for the approximate (EUP)
    # softmax reciprocal and the wrapper-side Wv@Wo / scale weight folds.
    assert jnp.allclose(out, ref, rtol=2e-3, atol=2e-3), (
        float(jnp.max(jnp.abs(out - ref))))
    print("KERNEL_OK")
</pallas_src>

<mosaic_0001>
module attributes {stable_mosaic.version = 11 : i64} {
  func.func @decoder_layer_kernel(%arg0: memref<32x128xf32, #tpu.memory_space<vmem>>, %arg1: memref<200x128xf32, #tpu.memory_space<vmem>>, %arg2: memref<16x32xf32, #tpu.memory_space<vmem>>) attributes {dimension_semantics = [], scalar_prefetch = 0 : i64, scratch_operands = 0 : i64, tpu.core_type = #tpu.core_type<tc>} {
    %c0 = arith.constant 0 : index
    %c0_0 = arith.constant 0 : index
    %0 = vector.load %arg0[%c0, %c0_0] : memref<32x128xf32, #tpu.memory_space<vmem>>, vector<32x128xf32>
    %1 = vector.extract_strided_slice %0 {offsets = [0, 0], sizes = [16, 32], strides = [1, 1]} : vector<32x128xf32> to vector<16x32xf32>
    %2 = vector.extract_strided_slice %0 {offsets = [0, 32], sizes = [16, 32], strides = [1, 1]} : vector<32x128xf32> to vector<16x32xf32>
    %3 = vector.extract_strided_slice %0 {offsets = [0, 64], sizes = [32, 32], strides = [1, 1]} : vector<32x128xf32> to vector<32x32xf32>
    %4 = vector.extract_strided_slice %0 {offsets = [0, 96], sizes = [32, 32], strides = [1, 1]} : vector<32x128xf32> to vector<32x32xf32>
    %c0_1 = arith.constant 0 : index
    %c0_2 = arith.constant 0 : index
    %5 = vector.load %arg1[%c0_1, %c0_2] : memref<200x128xf32, #tpu.memory_space<vmem>>, vector<32x128xf32>
    %c32 = arith.constant 32 : index
    %c0_3 = arith.constant 0 : index
    %6 = vector.load %arg1[%c32, %c0_3] : memref<200x128xf32, #tpu.memory_space<vmem>>, vector<32x128xf32>
    %c64 = arith.constant 64 : index
    %c0_4 = arith.constant 0 : index
    %7 = vector.load %arg1[%c64, %c0_4] : memref<200x128xf32, #tpu.memory_space<vmem>>, vector<32x128xf32>
    %c96 = arith.constant 96 : index
    %c0_5 = arith.constant 0 : index
    %8 = vector.load %arg1[%c96, %c0_5] : memref<200x128xf32, #tpu.memory_space<vmem>>, vector<32x128xf32>
    %9 = vector.extract_strided_slice %8 {offsets = [0, 0], sizes = [32, 64], strides = [1, 1]} : vector<32x128xf32> to vector<32x64xf32>
    %c128 = arith.constant 128 : index
    %c0_6 = arith.constant 0 : index
    %10 = vector.load %arg1[%c128, %c0_6] : memref<200x128xf32, #tpu.memory_space<vmem>>, vector<64x128xf32>
    %11 = vector.extract_strided_slice %10 {offsets = [0, 0], sizes = [64, 32], strides = [1, 1]} : vector<64x128xf32> to vector<64x32xf32>
    %c192 = arith.constant 192 : index
    %c0_7 = arith.constant 0 : index
    %12 = vector.load %arg1[%c192, %c0_7] : memref<200x128xf32, #tpu.memory_space<vmem>>, vector<8x128xf32>
    %13 = vector.extract_strided_slice %12 {offsets = [0, 0], sizes = [1, 128], strides = [1, 1]} : vector<8x128xf32> to vector<1x128xf32>
    %14 = vector.extract_strided_slice %12 {offsets = [1, 0], sizes = [1, 128], strides = [1, 1]} : vector<8x128xf32> to vector<1x128xf32>
    %15 = vector.extract_strided_slice %12 {offsets = [2, 0], sizes = [1, 128], strides = [1, 1]} : vector<8x128xf32> to vector<1x128xf32>
    %16 = vector.extract_strided_slice %12 {offsets = [3, 0], sizes = [1, 32], strides = [1, 1]} : vector<8x128xf32> to vector<1x32xf32>
    %17 = vector.extract_strided_slice %12 {offsets = [3, 32], sizes = [1, 32], strides = [1, 1]} : vector<8x128xf32> to vector<1x32xf32>
    %18 = vector.extract_strided_slice %12 {offsets = [3, 64], sizes = [1, 32], strides = [1, 1]} : vector<8x128xf32> to vector<1x32xf32>
    %19 = vector.extract_strided_slice %12 {offsets = [4, 0], sizes = [1, 64], strides = [1, 1]} : vector<8x128xf32> to vector<1x64xf32>
    %20 = vector.extract_strided_slice %12 {offsets = [5, 0], sizes = [1, 32], strides = [1, 1]} : vector<8x128xf32> to vector<1x32xf32>
    %21 = vector.extract_strided_slice %12 {offsets = [5, 32], sizes = [1, 32], strides = [1, 1]} : vector<8x128xf32> to vector<1x32xf32>
    %22 = vector.extract_strided_slice %12 {offsets = [5, 64], sizes = [1, 32], strides = [1, 1]} : vector<8x128xf32> to vector<1x32xf32>
    %23 = vector.extract_strided_slice %12 {offsets = [5, 96], sizes = [1, 32], strides = [1, 1]} : vector<8x128xf32> to vector<1x32xf32>
    %24 = vector.extract_strided_slice %12 {offsets = [6, 0], sizes = [1, 32], strides = [1, 1]} : vector<8x128xf32> to vector<1x32xf32>
    %25 = vector.extract_strided_slice %12 {offsets = [6, 32], sizes = [1, 32], strides = [1, 1]} : vector<8x128xf32> to vector<1x32xf32>
    %26 = arith.addf %1, %2 : vector<16x32xf32>
    %27 = vector.extract_strided_slice %5 {offsets = [0, 0], sizes = [32, 64], strides = [1, 1]} : vector<32x128xf32> to vector<32x64xf32>
    %cst = arith.constant dense<0.000000e+00> : vector<16x64xf32>
    %28 = tpu.matmul %26, %27, %cst {dimension_numbers = #tpu.dot_dimension_numbers<[1], [0], [0], [1], [0, 0, 1, 1], [], []>} : vector<16x32xf32>, vector<32x64xf32>, vector<16x64xf32> -> vector<16x64xf32>
    %29 = vector.extract_strided_slice %13 {offsets = [0, 0], sizes = [1, 64], strides = [1, 1]} : vector<1x128xf32> to vector<1x64xf32>
    %30 = vector.broadcast %29 : vector<1x64xf32> to vector<16x64xf32>
    %31 = arith.addf %28, %30 : vector<16x64xf32>
    %cst_8 = arith.constant dense<0.000000e+00> : vector<16x128xf32>
    %32 = tpu.matmul %1, %6, %cst_8 {dimension_numbers = #tpu.dot_dimension_numbers<[1], [0], [0], [1], [0, 0, 1, 1], [], []>} : vector<16x32xf32>, vector<32x128xf32>, vector<16x128xf32> -> vector<16x128xf32>
    %33 = vector.broadcast %14 : vector<1x128xf32> to vector<16x128xf32>
    %34 = arith.addf %32, %33 : vector<16x128xf32>
    %35 = vector.extract_strided_slice %31 {offsets = [0, 0], sizes = [16, 32], strides = [1, 1]} : vector<16x64xf32> to vector<16x32xf32>
    %36 = vector.extract_strided_slice %31 {offsets = [0, 32], sizes = [16, 32], strides = [1, 1]} : vector<16x64xf32> to vector<16x32xf32>
    %37 = vector.extract_strided_slice %35 {offsets = [0, 0], sizes = [8, 8], strides = [1, 1]} : vector<16x32xf32> to vector<8x8xf32>
    %38 = vector.extract_strided_slice %36 {offsets = [0, 0], sizes = [8, 8], strides = [1, 1]} : vector<16x32xf32> to vector<8x8xf32>
    %cst_9 = arith.constant dense<0.000000e+00> : vector<8x8xf32>
    %39 = tpu.matmul %37, %38, %cst_9 {dimension_numbers = #tpu.dot_dimension_numbers<[1], [1], [0], [0], [0, 0, 1, 0], [], []>} : vector<8x8xf32>, vector<8x8xf32>, vector<8x8xf32> -> vector<8x8xf32>
    %40 = vector.extract_strided_slice %35 {offsets = [0, 8], sizes = [8, 8], strides = [1, 1]} : vector<16x32xf32> to vector<8x8xf32>
    %41 = vector.extract_strided_slice %36 {offsets = [0, 8], sizes = [8, 8], strides = [1, 1]} : vector<16x32xf32> to vector<8x8xf32>
    %cst_10 = arith.constant dense<0.000000e+00> : vector<8x8xf32>
    %42 = tpu.matmul %40, %41, %cst_10 {dimension_numbers = #tpu.dot_dimension_numbers<[1], [1], [0], [0], [0, 0, 1, 0], [], []>} : vector<8x8xf32>, vector<8x8xf32>, vector<8x8xf32> -> vector<8x8xf32>
    %43 = vector.extract_strided_slice %35 {offsets = [0, 16], sizes = [8, 8], strides = [1, 1]} : vector<16x32xf32> to vector<8x8xf32>
    %44 = vector.extract_strided_slice %36 {offsets = [0, 16], sizes = [8, 8], strides = [1, 1]} : vector<16x32xf32> to vector<8x8xf32>
    %cst_11 = arith.constant dense<0.000000e+00> : vector<8x8xf32>
    %45 = tpu.matmul %43, %44, %cst_11 {dimension_numbers = #tpu.dot_dimension_numbers<[1], [1], [0], [0], [0, 0, 1, 0], [], []>} : vector<8x8xf32>, vector<8x8xf32>, vector<8x8xf32> -> vector<8x8xf32>
    %46 = vector.extract_strided_slice %35 {offsets = [0, 24], sizes = [8, 8], strides = [1, 1]} : vector<16x32xf32> to vector<8x8xf32>
    %47 = vector.extract_strided_slice %36 {offsets = [0, 24], sizes = [8, 8], strides = [1, 1]} : vector<16x32xf32> to vector<8x8xf32>
    %cst_12 = arith.constant dense<0.000000e+00> : vector<8x8xf32>
    %48 = tpu.matmul %46, %47, %cst_12 {dimension_numbers = #tpu.dot_dimension_numbers<[1], [1], [0], [0], [0, 0, 1, 0], [], []>} : vector<8x8xf32>, vector<8x8xf32>, vector<8x8xf32> -> vector<8x8xf32>
    %49 = vector.extract_strided_slice %35 {offsets = [8, 0], sizes = [8, 8], strides = [1, 1]} : vector<16x32xf32> to vector<8x8xf32>
    %50 = vector.extract_strided_slice %36 {offsets = [8, 0], sizes = [8, 8], strides = [1, 1]} : vector<16x32xf32> to vector<8x8xf32>
    %cst_13 = arith.constant dense<0.000000e+00> : vector<8x8xf32>
    %51 = tpu.matmul %49, %50, %cst_13 {dimension_numbers = #tpu.dot_dimension_numbers<[1], [1], [0], [0], [0, 0, 1, 0], [], []>} : vector<8x8xf32>, vector<8x8xf32>, vector<8x8xf32> -> vector<8x8xf32>
    %52 = vector.extract_strided_slice %35 {offsets = [8, 8], sizes = [8, 8], strides = [1, 1]} : vector<16x32xf32> to vector<8x8xf32>
    %53 = vector.extract_strided_slice %36 {offsets = [8, 8], sizes = [8, 8], strides = [1, 1]} : vector<16x32xf32> to vector<8x8xf32>
    %cst_14 = arith.constant dense<0.000000e+00> : vector<8x8xf32>
    %54 = tpu.matmul %52, %53, %cst_14 {dimension_numbers = #tpu.dot_dimension_numbers<[1], [1], [0], [0], [0, 0, 1, 0], [], []>} : vector<8x8xf32>, vector<8x8xf32>, vector<8x8xf32> -> vector<8x8xf32>
    %55 = vector.extract_strided_slice %35 {offsets = [8, 16], sizes = [8, 8], strides = [1, 1]} : vector<16x32xf32> to vector<8x8xf32>
    %56 = vector.extract_strided_slice %36 {offsets = [8, 16], sizes = [8, 8], strides = [1, 1]} : vector<16x32xf32> to vector<8x8xf32>
    %cst_15 = arith.constant dense<0.000000e+00> : vector<8x8xf32>
    %57 = tpu.matmul %55, %56, %cst_15 {dimension_numbers = #tpu.dot_dimension_numbers<[1], [1], [0], [0], [0, 0, 1, 0], [], []>} : vector<8x8xf32>, vector<8x8xf32>, vector<8x8xf32> -> vector<8x8xf32>
    %58 = vector.extract_strided_slice %35 {offsets = [8, 24], sizes = [8, 8], strides = [1, 1]} : vector<16x32xf32> to vector<8x8xf32>
    %59 = vector.extract_strided_slice %36 {offsets = [8, 24], sizes = [8, 8], strides = [1, 1]} : vector<16x32xf32> to vector<8x8xf32>
    %cst_16 = arith.constant dense<0.000000e+00> : vector<8x8xf32>
    %60 = tpu.matmul %58, %59, %cst_16 {dimension_numbers = #tpu.dot_dimension_numbers<[1], [1], [0], [0], [0, 0, 1, 0], [], []>} : vector<8x8xf32>, vector<8x8xf32>, vector<8x8xf32> -> vector<8x8xf32>
    %61 = tpu.concatenate %39, %42, %45, %48, %51, %54, %57, %60 in 0 : vector<8x8xf32>, vector<8x8xf32>, vector<8x8xf32>, vector<8x8xf32>, vector<8x8xf32>, vector<8x8xf32>, vector<8x8xf32>, vector<8x8xf32> -> vector<64x8xf32>
    %cst_17 = arith.constant dense<0xFF800000> : vector<64xf32>
    %62 = vector.multi_reduction <maximumf>, %61, %cst_17 [1] : vector<64x8xf32> to vector<64xf32>
    %63 = vector.shape_cast %62 : vector<64xf32> to vector<64x1xf32>
    %64 = vector.broadcast %63 : vector<64x1xf32> to vector<64x8xf32>
    %65 = arith.subf %61, %64 : vector<64x8xf32>
    %66 = math.exp %65 : vector<64x8xf32>
    %cst_18 = arith.constant dense<0.000000e+00> : vector<64xf32>
    %67 = vector.multi_reduction <add>, %66, %cst_18 [1] : vector<64x8xf32> to vector<64xf32>
    %68 = vector.shape_cast %67 : vector<64xf32> to vector<64x1xf32>
    %69 = tpu.reciprocal %68 {approx = true} : vector<64x1xf32> -> vector<64x1xf32>
    %70 = vector.broadcast %69 : vector<64x1xf32> to vector<64x8xf32>
    %71 = arith.mulf %66, %70 : vector<64x8xf32>
    %72 = vector.extract_strided_slice %71 {offsets = [0, 0], sizes = [8, 8], strides = [1, 1]} : vector<64x8xf32> to vector<8x8xf32>
    %73 = vector.extract_strided_slice %34 {offsets = [0, 0], sizes = [8, 32], strides = [1, 1]} : vector<16x128xf32> to vector<8x32xf32>
    %cst_19 = arith.constant dense<0.000000e+00> : vector<8x32xf32>
    %74 = tpu.matmul %72, %73, %cst_19 {dimension_numbers = #tpu.dot_dimension_numbers<[1], [0], [0], [1], [0, 0, 1, 1], [], []>} : vector<8x8xf32>, vector<8x32xf32>, vector<8x32xf32> -> vector<8x32xf32>
    %75 = vector.extract_strided_slice %71 {offsets = [8, 0], sizes = [8, 8], strides = [1, 1]} : vector<64x8xf32> to vector<8x8xf32>
    %76 = vector.extract_strided_slice %34 {offsets = [0, 32], sizes = [8, 32], strides = [1, 1]} : vector<16x128xf32> to vector<8x32xf32>
    %cst_20 = arith.constant dense<0.000000e+00> : vector<8x32xf32>
    %77 = tpu.matmul %75, %76, %cst_20 {dimension_numbers = #tpu.dot_dimension_numbers<[1], [0], [0], [1], [0, 0, 1, 1], [], []>} : vector<8x8xf32>, vector<8x32xf32>, vector<8x32xf32> -> vector<8x32xf32>
    %78 = arith.addf %74, %77 : vector<8x32xf32>
    %79 = vector.extract_strided_slice %71 {offsets = [16, 0], sizes = [8, 8], strides = [1, 1]} : vector<64x8xf32> to vector<8x8xf32>
    %80 = vector.extract_strided_slice %34 {offsets = [0, 64], sizes = [8, 32], strides = [1, 1]} : vector<16x128xf32> to vector<8x32xf32>
    %cst_21 = arith.constant dense<0.000000e+00> : vector<8x32xf32>
    %81 = tpu.matmul %79, %80, %cst_21 {dimension_numbers = #tpu.dot_dimension_numbers<[1], [0], [0], [1], [0, 0, 1, 1], [], []>} : vector<8x8xf32>, vector<8x32xf32>, vector<8x32xf32> -> vector<8x32xf32>
    %82 = arith.addf %78, %81 : vector<8x32xf32>
    %83 = vector.extract_strided_slice %71 {offsets = [24, 0], sizes = [8, 8], strides = [1, 1]} : vector<64x8xf32> to vector<8x8xf32>
    %84 = vector.extract_strided_slice %34 {offsets = [0, 96], sizes = [8, 32], strides = [1, 1]} : vector<16x128xf32> to vector<8x32xf32>
    %cst_22 = arith.constant dense<0.000000e+00> : vector<8x32xf32>
    %85 = tpu.matmul %83, %84, %cst_22 {dimension_numbers = #tpu.dot_dimension_numbers<[1], [0], [0], [1], [0, 0, 1, 1], [], []>} : vector<8x8xf32>, vector<8x32xf32>, vector<8x32xf32> -> vector<8x32xf32>
    %86 = arith.addf %82, %85 : vector<8x32xf32>
    %87 = vector.extract_strided_slice %71 {offsets = [32, 0], sizes = [8, 8], strides = [1, 1]} : vector<64x8xf32> to vector<8x8xf32>
    %88 = vector.extract_strided_slice %34 {offsets = [8, 0], sizes = [8, 32], strides = [1, 1]} : vector<16x128xf32> to vector<8x32xf32>
    %cst_23 = arith.constant dense<0.000000e+00> : vector<8x32xf32>
    %89 = tpu.matmul %87, %88, %cst_23 {dimension_numbers = #tpu.dot_dimension_numbers<[1], [0], [0], [1], [0, 0, 1, 1], [], []>} : vector<8x8xf32>, vector<8x32xf32>, vector<8x32xf32> -> vector<8x32xf32>
    %90 = vector.extract_strided_slice %71 {offsets = [40, 0], sizes = [8, 8], strides = [1, 1]} : vector<64x8xf32> to vector<8x8xf32>
    %91 = vector.extract_strided_slice %34 {offsets = [8, 32], sizes = [8, 32], strides = [1, 1]} : vector<16x128xf32> to vector<8x32xf32>
    %cst_24 = arith.constant dense<0.000000e+00> : vector<8x32xf32>
    %92 = tpu.matmul %90, %91, %cst_24 {dimension_numbers = #tpu.dot_dimension_numbers<[1], [0], [0], [1], [0, 0, 1, 1], [], []>} : vector<8x8xf32>, vector<8x32xf32>, vector<8x32xf32> -> vector<8x32xf32>
    %93 = arith.addf %89, %92 : vector<8x32xf32>
    %94 = vector.extract_strided_slice %71 {offsets = [48, 0], sizes = [8, 8], strides = [1, 1]} : vector<64x8xf32> to vector<8x8xf32>
    %95 = vector.extract_strided_slice %34 {offsets = [8, 64], sizes = [8, 32], strides = [1, 1]} : vector<16x128xf32> to vector<8x32xf32>
    %cst_25 = arith.constant dense<0.000000e+00> : vector<8x32xf32>
    %96 = tpu.matmul %94, %95, %cst_25 {dimension_numbers = #tpu.dot_dimension_numbers<[1], [0], [0], [1], [0, 0, 1, 1], [], []>} : vector<8x8xf32>, vector<8x32xf32>, vector<8x32xf32> -> vector<8x32xf32>
    %97 = arith.addf %93, %96 : vector<8x32xf32>
    %98 = vector.extract_strided_slice %71 {offsets = [56, 0], sizes = [8, 8], strides = [1, 1]} : vector<64x8xf32> to vector<8x8xf32>
    %99 = vector.extract_strided_slice %34 {offsets = [8, 96], sizes = [8, 32], strides = [1, 1]} : vector<16x128xf32> to vector<8x32xf32>
    %cst_26 = arith.constant dense<0.000000e+00> : vector<8x32xf32>
    %100 = tpu.matmul %98, %99, %cst_26 {dimension_numbers = #tpu.dot_dimension_numbers<[1], [0], [0], [1], [0, 0, 1, 1], [], []>} : vector<8x8xf32>, vector<8x32xf32>, vector<8x32xf32> -> vector<8x32xf32>
    %101 = arith.addf %97, %100 : vector<8x32xf32>
    %102 = tpu.concatenate %86, %101 in 0 : vector<8x32xf32>, vector<8x32xf32> -> vector<16x32xf32>
    %103 = vector.broadcast %16 : vector<1x32xf32> to vector<16x32xf32>
    %104 = arith.addf %102, %103 : vector<16x32xf32>
    %105 = arith.addf %1, %104 : vector<16x32xf32>
    %cst_27 = arith.constant dense<0.000000e+00> : vector<16xf32>
    %106 = vector.multi_reduction <add>, %105, %cst_27 [1] : vector<16x32xf32> to vector<16xf32>
    %107 = vector.shape_cast %106 : vector<16xf32> to vector<16x1xf32>
    %cst_28 = arith.constant 3.200000e+01 : f32
    %108 = vector.broadcast %cst_28 : f32 to vector<16x1xf32>
    %109 = arith.divf %107, %108 : vector<16x1xf32>
    %110 = vector.broadcast %109 : vector<16x1xf32> to vector<16x32xf32>
    %111 = arith.subf %105, %110 : vector<16x32xf32>
    %112 = arith.mulf %111, %111 : vector<16x32xf32>
    %cst_29 = arith.constant dense<0.000000e+00> : vector<16xf32>
    %113 = vector.multi_reduction <add>, %112, %cst_29 [1] : vector<16x32xf32> to vector<16xf32>
    %114 = vector.shape_cast %113 : vector<16xf32> to vector<16x1xf32>
    %cst_30 = arith.constant 3.200000e+01 : f32
    %115 = vector.broadcast %cst_30 : f32 to vector<16x1xf32>
    %116 = arith.divf %114, %115 : vector<16x1xf32>
    %cst_31 = arith.constant 9.99999974E-6 : f32
    %117 = vector.broadcast %cst_31 : f32 to vector<16x1xf32>
    %118 = arith.addf %116, %117 : vector<16x1xf32>
    %119 = math.rsqrt %118 : vector<16x1xf32>
    %120 = vector.broadcast %119 : vector<16x1xf32> to vector<16x32xf32>
    %121 = arith.mulf %111, %120 : vector<16x32xf32>
    %122 = vector.broadcast %20 : vector<1x32xf32> to vector<16x32xf32>
    %123 = arith.mulf %121, %122 : vector<16x32xf32>
    %124 = vector.broadcast %21 : vector<1x32xf32> to vector<16x32xf32>
    %125 = arith.addf %123, %124 : vector<16x32xf32>
    %126 = arith.addf %125, %2 : vector<16x32xf32>
    %127 = vector.extract_strided_slice %5 {offsets = [0, 64], sizes = [32, 32], strides = [1, 1]} : vector<32x128xf32> to vector<32x32xf32>
    %cst_32 = arith.constant dense<0.000000e+00> : vector<16x32xf32>
    %128 = tpu.matmul %126, %127, %cst_32 {dimension_numbers = #tpu.dot_dimension_numbers<[1], [0], [0], [1], [0, 0, 1, 1], [], []>} : vector<16x32xf32>, vector<32x32xf32>, vector<16x32xf32> -> vector<16x32xf32>
    %129 = vector.extract_strided_slice %13 {offsets = [0, 64], sizes = [1, 32], strides = [1, 1]} : vector<1x128xf32> to vector<1x32xf32>
    %130 = vector.broadcast %129 : vector<1x32xf32> to vector<16x32xf32>
    %131 = arith.addf %128, %130 : vector<16x32xf32>
    %132 = arith.addf %3, %4 : vector<32x32xf32>
    %133 = vector.extract_strided_slice %5 {offsets = [0, 96], sizes = [32, 32], strides = [1, 1]} : vector<32x128xf32> to vector<32x32xf32>
    %cst_33 = arith.constant dense<0.000000e+00> : vector<32x32xf32>
    %134 = tpu.matmul %132, %133, %cst_33 {dimension_numbers = #tpu.dot_dimension_numbers<[1], [0], [0], [1], [0, 0, 1, 1], [], []>} : vector<32x32xf32>, vector<32x32xf32>, vector<32x32xf32> -> vector<32x32xf32>
    %135 = vector.extract_strided_slice %13 {offsets = [0, 96], sizes = [1, 32], strides = [1, 1]} : vector<1x128xf32> to vector<1x32xf32>
    %136 = vector.broadcast %135 : vector<1x32xf32> to vector<32x32xf32>
    %137 = arith.addf %134, %136 : vector<32x32xf32>
    %cst_34 = arith.constant dense<0.000000e+00> : vector<32x128xf32>
    %138 = tpu.matmul %3, %7, %cst_34 {dimension_numbers = #tpu.dot_dimension_numbers<[1], [0], [0], [1], [0, 0, 1, 1], [], []>} : vector<32x32xf32>, vector<32x128xf32>, vector<32x128xf32> -> vector<32x128xf32>
    %139 = vector.broadcast %15 : vector<1x128xf32> to vector<32x128xf32>
    %140 = arith.addf %138, %139 : vector<32x128xf32>
    %141 = vector.extract_strided_slice %131 {offsets = [0, 0], sizes = [8, 8], strides = [1, 1]} : vector<16x32xf32> to vector<8x8xf32>
    %142 = vector.extract_strided_slice %137 {offsets = [0, 0], sizes = [16, 8], strides = [1, 1]} : vector<32x32xf32> to vector<16x8xf32>
    %cst_35 = arith.constant dense<0.000000e+00> : vector<8x16xf32>
    %143 = tpu.matmul %141, %142, %cst_35 {dimension_numbers = #tpu.dot_dimension_numbers<[1], [1], [0], [0], [0, 0, 1, 0], [], []>} : vector<8x8xf32>, vector<16x8xf32>, vector<8x16xf32> -> vector<8x16xf32>
    %144 = vector.extract_strided_slice %131 {offsets = [0, 8], sizes = [8, 8], strides = [1, 1]} : vector<16x32xf32> to vector<8x8xf32>
    %145 = vector.extract_strided_slice %137 {offsets = [0, 8], sizes = [16, 8], strides = [1, 1]} : vector<32x32xf32> to vector<16x8xf32>
    %cst_36 = arith.constant dense<0.000000e+00> : vector<8x16xf32>
    %146 = tpu.matmul %144, %145, %cst_36 {dimension_numbers = #tpu.dot_dimension_numbers<[1], [1], [0], [0], [0, 0, 1, 0], [], []>} : vector<8x8xf32>, vector<16x8xf32>, vector<8x16xf32> -> vector<8x16xf32>
    %147 = vector.extract_strided_slice %131 {offsets = [0, 16], sizes = [8, 8], strides = [1, 1]} : vector<16x32xf32> to vector<8x8xf32>
    %148 = vector.extract_strided_slice %137 {offsets = [0, 16], sizes = [16, 8], strides = [1, 1]} : vector<32x32xf32> to vector<16x8xf32>
    %cst_37 = arith.constant dense<0.000000e+00> : vector<8x16xf32>
    %149 = tpu.matmul %147, %148, %cst_37 {dimension_numbers = #tpu.dot_dimension_numbers<[1], [1], [0], [0], [0, 0, 1, 0], [], []>} : vector<8x8xf32>, vector<16x8xf32>, vector<8x16xf32> -> vector<8x16xf32>
    %150 = vector.extract_strided_slice %131 {offsets = [0, 24], sizes = [8, 8], strides = [1, 1]} : vector<16x32xf32> to vector<8x8xf32>
    %151 = vector.extract_strided_slice %137 {offsets = [0, 24], sizes = [16, 8], strides = [1, 1]} : vector<32x32xf32> to vector<16x8xf32>
    %cst_38 = arith.constant dense<0.000000e+00> : vector<8x16xf32>
    %152 = tpu.matmul %150, %151, %cst_38 {dimension_numbers = #tpu.dot_dimension_numbers<[1], [1], [0], [0], [0, 0, 1, 0], [], []>} : vector<8x8xf32>, vector<16x8xf32>, vector<8x16xf32> -> vector<8x16xf32>
    %153 = vector.extract_strided_slice %131 {offsets = [8, 0], sizes = [8, 8], strides = [1, 1]} : vector<16x32xf32> to vector<8x8xf32>
    %154 = vector.extract_strided_slice %137 {offsets = [16, 0], sizes = [16, 8], strides = [1, 1]} : vector<32x32xf32> to vector<16x8xf32>
    %cst_39 = arith.constant dense<0.000000e+00> : vector<8x16xf32>
    %155 = tpu.matmul %153, %154, %cst_39 {dimension_numbers = #tpu.dot_dimension_numbers<[1], [1], [0], [0], [0, 0, 1, 0], [], []>} : vector<8x8xf32>, vector<16x8xf32>, vector<8x16xf32> -> vector<8x16xf32>
    %156 = vector.extract_strided_slice %131 {offsets = [8, 8], sizes = [8, 8], strides = [1, 1]} : vector<16x32xf32> to vector<8x8xf32>
    %157 = vector.extract_strided_slice %137 {offsets = [16, 8], sizes = [16, 8], strides = [1, 1]} : vector<32x32xf32> to vector<16x8xf32>
    %cst_40 = arith.constant dense<0.000000e+00> : vector<8x16xf32>
    %158 = tpu.matmul %156, %157, %cst_40 {dimension_numbers = #tpu.dot_dimension_numbers<[1], [1], [0], [0], [0, 0, 1, 0], [], []>} : vector<8x8xf32>, vector<16x8xf32>, vector<8x16xf32> -> vector<8x16xf32>
    %159 = vector.extract_strided_slice %131 {offsets = [8, 16], sizes = [8, 8], strides = [1, 1]} : vector<16x32xf32> to vector<8x8xf32>
    %160 = vector.extract_strided_slice %137 {offsets = [16, 16], sizes = [16, 8], strides = [1, 1]} : vector<32x32xf32> to vector<16x8xf32>
    %cst_41 = arith.constant dense<0.000000e+00> : vector<8x16xf32>
    %161 = tpu.matmul %159, %160, %cst_41 {dimension_numbers = #tpu.dot_dimension_numbers<[1], [1], [0], [0], [0, 0, 1, 0], [], []>} : vector<8x8xf32>, vector<16x8xf32>, vector<8x16xf32> -> vector<8x16xf32>
    %162 = vector.extract_strided_slice %131 {offsets = [8, 24], sizes = [8, 8], strides = [1, 1]} : vector<16x32xf32> to vector<8x8xf32>
    %163 = vector.extract_strided_slice %137 {offsets = [16, 24], sizes = [16, 8], strides = [1, 1]} : vector<32x32xf32> to vector<16x8xf32>
    %cst_42 = arith.constant dense<0.000000e+00> : vector<8x16xf32>
    %164 = tpu.matmul %162, %163, %cst_42 {dimension_numbers = #tpu.dot_dimension_numbers<[1], [1], [0], [0], [0, 0, 1, 0], [], []>} : vector<8x8xf32>, vector<16x8xf32>, vector<8x16xf32> -> vector<8x16xf32>
    %165 = tpu.concatenate %143, %146, %149, %152, %155, %158, %161, %164 in 0 : vector<8x16xf32>, vector<8x16xf32>, vector<8x16xf32>, vector<8x16xf32>, vector<8x16xf32>, vector<8x16xf32>, vector<8x16xf32>, vector<8x16xf32> -> vector<64x16xf32>
    %cst_43 = arith.constant dense<0xFF800000> : vector<64xf32>
    %166 = vector.multi_reduction <maximumf>, %165, %cst_43 [1] : vector<64x16xf32> to vector<64xf32>
    %167 = vector.shape_cast %166 : vector<64xf32> to vector<64x1xf32>
    %168 = vector.broadcast %167 : vector<64x1xf32> to vector<64x16xf32>
    %169 = arith.subf %165, %168 : vector<64x16xf32>
    %170 = math.exp %169 : vector<64x16xf32>
    %cst_44 = arith.constant dense<0.000000e+00> : vector<64xf32>
    %171 = vector.multi_reduction <add>, %170, %cst_44 [1] : vector<64x16xf32> to vector<64xf32>
    %172 = vector.shape_cast %171 : vector<64xf32> to vector<64x1xf32>
    %173 = tpu.reciprocal %172 {approx = true} : vector<64x1xf32> -> vector<64x1xf32>
    %174 = vector.broadcast %173 : vector<64x1xf32> to vector<64x16xf32>
    %175 = arith.mulf %170, %174 : vector<64x16xf32>
    %176 = vector.extract_strided_slice %175 {offsets = [0, 0], sizes = [8, 16], strides = [1, 1]} : vector<64x16xf32> to vector<8x16xf32>
    %177 = vector.extract_strided_slice %140 {offsets = [0, 0], sizes = [16, 32], strides = [1, 1]} : vector<32x128xf32> to vector<16x32xf32>
    %cst_45 = arith.constant dense<0.000000e+00> : vector<8x32xf32>
    %178 = tpu.matmul %176, %177, %cst_45 {dimension_numbers = #tpu.dot_dimension_numbers<[1], [0], [0], [1], [0, 0, 1, 1], [], []>} : vector<8x16xf32>, vector<16x32xf32>, vector<8x32xf32> -> vector<8x32xf32>
    %179 = vector.extract_strided_slice %175 {offsets = [8, 0], sizes = [8, 16], strides = [1, 1]} : vector<64x16xf32> to vector<8x16xf32>
    %180 = vector.extract_strided_slice %140 {offsets = [0, 32], sizes = [16, 32], strides = [1, 1]} : vector<32x128xf32> to vector<16x32xf32>
    %cst_46 = arith.constant dense<0.000000e+00> : vector<8x32xf32>
    %181 = tpu.matmul %179, %180, %cst_46 {dimension_numbers = #tpu.dot_dimension_numbers<[1], [0], [0], [1], [0, 0, 1, 1], [], []>} : vector<8x16xf32>, vector<16x32xf32>, vector<8x32xf32> -> vector<8x32xf32>
    %182 = arith.addf %178, %181 : vector<8x32xf32>
    %183 = vector.extract_strided_slice %175 {offsets = [16, 0], sizes = [8, 16], strides = [1, 1]} : vector<64x16xf32> to vector<8x16xf32>
    %184 = vector.extract_strided_slice %140 {offsets = [0, 64], sizes = [16, 32], strides = [1, 1]} : vector<32x128xf32> to vector<16x32xf32>
    %cst_47 = arith.constant dense<0.000000e+00> : vector<8x32xf32>
    %185 = tpu.matmul %183, %184, %cst_47 {dimension_numbers = #tpu.dot_dimension_numbers<[1], [0], [0], [1], [0, 0, 1, 1], [], []>} : vector<8x16xf32>, vector<16x32xf32>, vector<8x32xf32> -> vector<8x32xf32>
    %186 = arith.addf %182, %185 : vector<8x32xf32>
    %187 = vector.extract_strided_slice %175 {offsets = [24, 0], sizes = [8, 16], strides = [1, 1]} : vector<64x16xf32> to vector<8x16xf32>
    %188 = vector.extract_strided_slice %140 {offsets = [0, 96], sizes = [16, 32], strides = [1, 1]} : vector<32x128xf32> to vector<16x32xf32>
    %cst_48 = arith.constant dense<0.000000e+00> : vector<8x32xf32>
    %189 = tpu.matmul %187, %188, %cst_48 {dimension_numbers = #tpu.dot_dimension_numbers<[1], [0], [0], [1], [0, 0, 1, 1], [], []>} : vector<8x16xf32>, vector<16x32xf32>, vector<8x32xf32> -> vector<8x32xf32>
    %190 = arith.addf %186, %189 : vector<8x32xf32>
    %191 = vector.extract_strided_slice %175 {offsets = [32, 0], sizes = [8, 16], strides = [1, 1]} : vector<64x16xf32> to vector<8x16xf32>
    %192 = vector.extract_strided_slice %140 {offsets = [16, 0], sizes = [16, 32], strides = [1, 1]} : vector<32x128xf32> to vector<16x32xf32>
    %cst_49 = arith.constant dense<0.000000e+00> : vector<8x32xf32>
    %193 = tpu.matmul %191, %192, %cst_49 {dimension_numbers = #tpu.dot_dimension_numbers<[1], [0], [0], [1], [0, 0, 1, 1], [], []>} : vector<8x16xf32>, vector<16x32xf32>, vector<8x32xf32> -> vector<8x32xf32>
    %194 = vector.extract_strided_slice %175 {offsets = [40, 0], sizes = [8, 16], strides = [1, 1]} : vector<64x16xf32> to vector<8x16xf32>
    %195 = vector.extract_strided_slice %140 {offsets = [16, 32], sizes = [16, 32], strides = [1, 1]} : vector<32x128xf32> to vector<16x32xf32>
    %cst_50 = arith.constant dense<0.000000e+00> : vector<8x32xf32>
    %196 = tpu.matmul %194, %195, %cst_50 {dimension_numbers = #tpu.dot_dimension_numbers<[1], [0], [0], [1], [0, 0, 1, 1], [], []>} : vector<8x16xf32>, vector<16x32xf32>, vector<8x32xf32> -> vector<8x32xf32>
    %197 = arith.addf %193, %196 : vector<8x32xf32>
    %198 = vector.extract_strided_slice %175 {offsets = [48, 0], sizes = [8, 16], strides = [1, 1]} : vector<64x16xf32> to vector<8x16xf32>
    %199 = vector.extract_strided_slice %140 {offsets = [16, 64], sizes = [16, 32], strides = [1, 1]} : vector<32x128xf32> to vector<16x32xf32>
    %cst_51 = arith.constant dense<0.000000e+00> : vector<8x32xf32>
    %200 = tpu.matmul %198, %199, %cst_51 {dimension_numbers = #tpu.dot_dimension_numbers<[1], [0], [0], [1], [0, 0, 1, 1], [], []>} : vector<8x16xf32>, vector<16x32xf32>, vector<8x32xf32> -> vector<8x32xf32>
    %201 = arith.addf %197, %200 : vector<8x32xf32>
    %202 = vector.extract_strided_slice %175 {offsets = [56, 0], sizes = [8, 16], strides = [1, 1]} : vector<64x16xf32> to vector<8x16xf32>
    %203 = vector.extract_strided_slice %140 {offsets = [16, 96], sizes = [16, 32], strides = [1, 1]} : vector<32x128xf32> to vector<16x32xf32>
    %cst_52 = arith.constant dense<0.000000e+00> : vector<8x32xf32>
    %204 = tpu.matmul %202, %203, %cst_52 {dimension_numbers = #tpu.dot_dimension_numbers<[1], [0], [0], [1], [0, 0, 1, 1], [], []>} : vector<8x16xf32>, vector<16x32xf32>, vector<8x32xf32> -> vector<8x32xf32>
    %205 = arith.addf %201, %204 : vector<8x32xf32>
    %206 = tpu.concatenate %190, %205 in 0 : vector<8x32xf32>, vector<8x32xf32> -> vector<16x32xf32>
    %207 = vector.broadcast %17 : vector<1x32xf32> to vector<16x32xf32>
    %208 = arith.addf %206, %207 : vector<16x32xf32>
    %209 = arith.addf %125, %208 : vector<16x32xf32>
    %cst_53 = arith.constant dense<0.000000e+00> : vector<16xf32>
    %210 = vector.multi_reduction <add>, %209, %cst_53 [1] : vector<16x32xf32> to vector<16xf32>
    %211 = vector.shape_cast %210 : vector<16xf32> to vector<16x1xf32>
    %cst_54 = arith.constant 3.200000e+01 : f32
    %212 = vector.broadcast %cst_54 : f32 to vector<16x1xf32>
    %213 = arith.divf %211, %212 : vector<16x1xf32>
    %214 = vector.broadcast %213 : vector<16x1xf32> to vector<16x32xf32>
    %215 = arith.subf %209, %214 : vector<16x32xf32>
    %216 = arith.mulf %215, %215 : vector<16x32xf32>
    %cst_55 = arith.constant dense<0.000000e+00> : vector<16xf32>
    %217 = vector.multi_reduction <add>, %216, %cst_55 [1] : vector<16x32xf32> to vector<16xf32>
    %218 = vector.shape_cast %217 : vector<16xf32> to vector<16x1xf32>
    %cst_56 = arith.constant 3.200000e+01 : f32
    %219 = vector.broadcast %cst_56 : f32 to vector<16x1xf32>
    %220 = arith.divf %218, %219 : vector<16x1xf32>
    %cst_57 = arith.constant 9.99999974E-6 : f32
    %221 = vector.broadcast %cst_57 : f32 to vector<16x1xf32>
    %222 = arith.addf %220, %221 : vector<16x1xf32>
    %223 = math.rsqrt %222 : vector<16x1xf32>
    %224 = vector.broadcast %223 : vector<16x1xf32> to vector<16x32xf32>
    %225 = arith.mulf %215, %224 : vector<16x32xf32>
    %226 = vector.broadcast %22 : vector<1x32xf32> to vector<16x32xf32>
    %227 = arith.mulf %225, %226 : vector<16x32xf32>
    %228 = vector.broadcast %23 : vector<1x32xf32> to vector<16x32xf32>
    %229 = arith.addf %227, %228 : vector<16x32xf32>
    %cst_58 = arith.constant dense<0.000000e+00> : vector<16x64xf32>
    %230 = tpu.matmul %229, %9, %cst_58 {dimension_numbers = #tpu.dot_dimension_numbers<[1], [0], [0], [1], [0, 0, 1, 1], [], []>} : vector<16x32xf32>, vector<32x64xf32>, vector<16x64xf32> -> vector<16x64xf32>
    %231 = vector.broadcast %19 : vector<1x64xf32> to vector<16x64xf32>
    %232 = arith.addf %230, %231 : vector<16x64xf32>
    %cst_59 = arith.constant 0.000000e+00 : f32
    %233 = vector.broadcast %cst_59 : f32 to vector<16x64xf32>
    %234 = arith.maximumf %232, %233 : vector<16x64xf32>
    %cst_60 = arith.constant dense<0.000000e+00> : vector<16x32xf32>
    %235 = tpu.matmul %234, %11, %cst_60 {dimension_numbers = #tpu.dot_dimension_numbers<[1], [0], [0], [1], [0, 0, 1, 1], [], []>} : vector<16x64xf32>, vector<64x32xf32>, vector<16x32xf32> -> vector<16x32xf32>
    %236 = vector.broadcast %18 : vector<1x32xf32> to vector<16x32xf32>
    %237 = arith.addf %235, %236 : vector<16x32xf32>
    %238 = arith.addf %229, %237 : vector<16x32xf32>
    %cst_61 = arith.constant dense<0.000000e+00> : vector<16xf32>
    %239 = vector.multi_reduction <add>, %238, %cst_61 [1] : vector<16x32xf32> to vector<16xf32>
    %240 = vector.shape_cast %239 : vector<16xf32> to vector<16x1xf32>
    %cst_62 = arith.constant 3.200000e+01 : f32
    %241 = vector.broadcast %cst_62 : f32 to vector<16x1xf32>
    %242 = arith.divf %240, %241 : vector<16x1xf32>
    %243 = vector.broadcast %242 : vector<16x1xf32> to vector<16x32xf32>
    %244 = arith.subf %238, %243 : vector<16x32xf32>
    %245 = arith.mulf %244, %244 : vector<16x32xf32>
    %cst_63 = arith.constant dense<0.000000e+00> : vector<16xf32>
    %246 = vector.multi_reduction <add>, %245, %cst_63 [1] : vector<16x32xf32> to vector<16xf32>
    %247 = vector.shape_cast %246 : vector<16xf32> to vector<16x1xf32>
    %cst_64 = arith.constant 3.200000e+01 : f32
    %248 = vector.broadcast %cst_64 : f32 to vector<16x1xf32>
    %249 = arith.divf %247, %248 : vector<16x1xf32>
    %cst_65 = arith.constant 9.99999974E-6 : f32
    %250 = vector.broadcast %cst_65 : f32 to vector<16x1xf32>
    %251 = arith.addf %249, %250 : vector<16x1xf32>
    %252 = math.rsqrt %251 : vector<16x1xf32>
    %253 = vector.broadcast %252 : vector<16x1xf32> to vector<16x32xf32>
    %254 = arith.mulf %244, %253 : vector<16x32xf32>
    %255 = vector.broadcast %24 : vector<1x32xf32> to vector<16x32xf32>
    %256 = arith.mulf %254, %255 : vector<16x32xf32>
    %257 = vector.broadcast %25 : vector<1x32xf32> to vector<16x32xf32>
    %258 = arith.addf %256, %257 : vector<16x32xf32>
    %c0_66 = arith.constant 0 : index
    %c0_67 = arith.constant 0 : index
    %259 = vector.load %arg2[%c0_66, %c0_67] : memref<16x32xf32, #tpu.memory_space<vmem>>, vector<16x32xf32>
    tpu.vector_store %arg2[%c0_66, %c0_67], %258 {strides = array<i32>} : memref<16x32xf32, #tpu.memory_space<vmem>>, vector<16x32xf32>,
    return
  }
}

</mosaic_0001>

<llo_original>
// kernel: tpu_custom_call.1
$region0: #{tpu_custom_call.1}
  #allocation0 [shape = 'u32[]', space=smem, size = 0x4, offset = 0x4, fixed_abs, tag = 'smem constant byte address 0x4 - core index']
  #allocation1 [shape = 'u32[144,128]{1,0:T(1,128)}', space=vmem, size = 0x12000, scoped, tag = 'internal scratch']
  %s0 = inlined_call_operand.hbm [shape: f32[32,128], index: 0, kind: input, shape index: {}]
  %s1 = inlined_call_operand.hbm [shape: f32[200,128], index: 1, kind: input, shape index: {}]
  %s2 = inlined_call_operand.hbm [shape: f32[16,32], index: 2, kind: output, shape index: {}]
  %s3 = sld [smem:[#allocation0]]
  $region26: #{tpu_custom_call.1} parent=0
    _
  %s5 = ssub.s32 1, %s3
  %s6 = scalar_select 0, %s5, %s3
  $region1: #{tpu_custom_call.1} parent=0
    #allocation2 [shape = 'u8[16384]{0}', space=vmem, size = 0x4000, scoped, tag = 'input window, operand 0, single buffered']
    #allocation3 [shape = 's32[1]{0}', space=sflag, size = 0x4, scoped, tag = 'scoped memory for tpu_custom_call.1']
    #allocation4 [shape = 's32[1]{0}', space=sflag, size = 0x4, scoped, tag = 'scoped memory for tpu_custom_call.1']
    #allocation5 [shape = 'u8[102400]{0}', space=vmem, size = 0x19000, scoped, tag = 'input window, operand 1, single buffered']
    #allocation6 [shape = 's32[1]{0}', space=sflag, size = 0x4, scoped, tag = 'scoped memory for tpu_custom_call.1']
    #allocation7 [shape = 'u8[8192]{0}', space=vmem, size = 0x2000, scoped, tag = 'output window, operand 0, single buffered']
    %7 = vsyncpa [#allocation3], 0
    %8 = vsyncpa [#allocation6], 0
    %9 = vsyncpa [#allocation4], 0
    // Predicated region
    $region2: #{tpu_custom_call.1} parent=1 // pred_check
      _
    $region3: #{tpu_custom_call.1} parent=1 // pred_check_branch
      %11 = sbr.rel (0) target = $region5
    $region4: #{tpu_custom_call.1} parent=1 // pred_region
      %s13 = ssub.s32 512, 512
      %14 = vsyncadd [#allocation3], %s13
      %s15 = sshll.u32 [#allocation2], 4
      %s16 = int_to_ptr.vmem [resolvable:$true] %s15
      %21 = dma.hbm_to_vmem [thread:$0]  %s0, 512, %s16, [#allocation3], 128, 128, 8
    $region5: #{tpu_custom_call.1} parent=1 // pred_fallthru
      _
    // Predicated region
    $region6: #{tpu_custom_call.1} parent=1 // pred_check
      _
    $region7: #{tpu_custom_call.1} parent=1 // pred_check_branch
      %23 = sbr.rel (0) target = $region9
    $region8: #{tpu_custom_call.1} parent=1 // pred_region
      %s25 = ssub.s32 3200, 3200
      %26 = vsyncadd [#allocation6], %s25
      %s27 = sshll.u32 [#allocation5], 4
      %s28 = int_to_ptr.vmem [resolvable:$true] %s27
      %33 = dma.hbm_to_vmem [thread:$0]  %s1, 3200, %s28, [#allocation6], 128, 128, 8
    $region9: #{tpu_custom_call.1} parent=1 // pred_fallthru
      _
    // Predicated region
    $region10: #{tpu_custom_call.1} parent=1 // pred_check
      _
    $region11: #{tpu_custom_call.1} parent=1 // pred_check_branch
      %35 = sbr.rel (0) target = $region13
    $region12: #{tpu_custom_call.1} parent=1 // pred_region
      %36 = dma.done [#allocation3], 512
    $region13: #{tpu_custom_call.1} parent=1 // pred_fallthru
      _
    // Predicated region
    $region14: #{tpu_custom_call.1} parent=1 // pred_check
      _
    $region15: #{tpu_custom_call.1} parent=1 // pred_check_branch
      %38 = sbr.rel (0) target = $region17
    $region16: #{tpu_custom_call.1} parent=1 // pred_region
      %39 = dma.done [#allocation6], 3200
    $region17: #{tpu_custom_call.1} parent=1 // pred_fallthru
      _
    %v40 = vld [vmem:[#allocation2] sm:$0xff]
    %v41 = vld [vmem:[#allocation2 + $0x8] sm:$0xff]
    %v42 = vld [vmem:[#allocation2 + $0x10] sm:$0xff]
    %v43 = vld [vmem:[#allocation2 + $0x18] sm:$0xff]
    %v44 = vld [vmem:[#allocation5] sm:$0xff]
    %v45 = vld [vmem:[#allocation5 + $0x8] sm:$0xff]
    %v46 = vld [vmem:[#allocation5 + $0x10] sm:$0xff]
    %v47 = vld [vmem:[#allocation5 + $0x18] sm:$0xff]
    %v48 = vld [vmem:[#allocation5 + $0x20] sm:$0xff]
    %v49 = vld [vmem:[#allocation5 + $0x28] sm:$0xff]
    %v50 = vld [vmem:[#allocation5 + $0x30] sm:$0xff]
    %v51 = vld [vmem:[#allocation5 + $0x38] sm:$0xff]
    %v52 = vld [vmem:[#allocation5 + $0x40] sm:$0xff]
    %v53 = vld [vmem:[#allocation5 + $0x48] sm:$0xff]
    %v54 = vld [vmem:[#allocation5 + $0x50] sm:$0xff]
    %v55 = vld [vmem:[#allocation5 + $0x58] sm:$0xff]
    %v56 = vld [vmem:[#allocation5 + $0x60] sm:$0xff]
    %v57 = vld [vmem:[#allocation5 + $0x68] sm:$0xff]
    %v58 = vld [vmem:[#allocation5 + $0x70] sm:$0xff]
    %v59 = vld [vmem:[#allocation5 + $0x78] sm:$0xff]
    %v60 = vld [vmem:[#allocation5 + $0x80] sm:$0xff]
    %v61 = vld [vmem:[#allocation5 + $0x88] sm:$0xff]
    %v62 = vld [vmem:[#allocation5 + $0x90] sm:$0xff]
    %v63 = vld [vmem:[#allocation5 + $0x98] sm:$0xff]
    %v64 = vld [vmem:[#allocation5 + $0xa0] sm:$0xff]
    %v65 = vld [vmem:[#allocation5 + $0xa8] sm:$0xff]
    %v66 = vld [vmem:[#allocation5 + $0xb0] sm:$0xff]
    %v67 = vld [vmem:[#allocation5 + $0xb8] sm:$0xff]
    %v68 = vld [vmem:[#allocation5 + $0xc0] sm:$0xff]
    %71 = vrot.lane.b32.xlu0 %v40, 96
    %v72 = vpop.permute.xlu0 %71
    %73 = vrot.lane.b32.xlu0 %v41, 96
    %v74 = vpop.permute.xlu0 %73
    %v77 = vadd.f32 %v40, %v72
    %v78 = vadd.f32 %v41, %v74
    %v79 = vlaneseq
    %v80 = vshrl.u32 %v79, 7
    %v81 = vsub.s32 0, %v80
    %v82 = vrot.slane %v68, %v81
    %vm83 = vcmask 261120
    %v85 = vsel %vm83, %v77, 0
    %v88 = vsel %vm83, %v78, 0
    %90 = vmatprep.subr.mxu0 0.0
    %91 = vmatpush1.msra.mxu0 %v44
    %92 = vmatprep.subr.mxu0 0.0
    %93 = vmatpush1.msra.mxu0 %v45
    %94 = vmatprep.subr.mxu0 0.0
    %95 = vmatpush1.msra.mxu0 %v46
    %96 = vmatprep.subr.mxu0 0.0
    %97 = vmatpush1.msra.mxu0 %v47
    %98 = vmatprep.subr.mxu0 0.0
    %99 = vmatpush1.msra.mxu0 0.0
    %100 = vmatprep.subr.mxu0 0.0
    %101 = vmatpush1.msra.mxu0 0.0
    %102 = vmatprep.subr.mxu0 0.0
    %103 = vmatpush1.msra.mxu0 0.0
    %104 = vmatprep.subr.mxu0 0.0
    %105 = vmatpush1.msra.mxu0 0.0
    %106 = vmatprep.subr.mxu0 0.0
    %107 = vmatpush1.msra.mxu0 0.0
    %108 = vmatprep.subr.mxu0 0.0
    %109 = vmatpush1.msra.mxu0 0.0
    %110 = vmatprep.subr.mxu0 0.0
    %111 = vmatpush1.msra.mxu0 0.0
    %112 = vmatprep.subr.mxu0 0.0
    %113 = vmatpush1.msra.mxu0 0.0
    %114 = vmatprep.subr.mxu0 0.0
    %115 = vmatpush1.msra.mxu0 0.0
    %116 = vmatprep.subr.mxu0 0.0
    %117 = vmatpush1.msra.mxu0 0.0
    %118 = vmatprep.subr.mxu0 0.0
    %119 = vmatpush1.msra.mxu0 0.0
    %120 = vmatprep.subr.mxu0 0.0
    %121 = vmatpush1.msra.mxu0 0.0
    %122 = vmatprep.subr.mxu0 0.0
    %123 = vmatpush1.msra.mxu0 0.0
    %124 = vmatprep.subr.mxu0 0.0
    %125 = vmatpush1.msra.mxu0 0.0
    %126 = vmatprep.subr.mxu0 0.0
    %127 = vmatpush1.msra.mxu0 0.0
    %128 = vmatprep.subr.mxu0 0.0
    %129 = vmatpush1.msra.mxu0 0.0
    %130 = vmatprep.subr.mxu0 0.0
    %131 = vmatpush1.msra.mxu0 0.0
    %132 = vmatprep.subr.mxu0 0.0
    %133 = vmatpush1.msra.mxu0 0.0
    %134 = vmatprep.subr.mxu0 0.0
    %135 = vmatpush1.msra.mxu0 0.0
    %136 = vmatprep.subr.mxu0 0.0
    %137 = vmatpush1.msra.mxu0 0.0
    %138 = vmatprep.subr.mxu0 0.0
    %139 = vmatpush1.msra.mxu0 0.0
    %140 = vmatprep.subr.mxu0 0.0
    %141 = vmatpush1.msra.mxu0 0.0
    %142 = vmatprep.subr.mxu0 0.0
    %143 = vmatpush1.msra.mxu0 0.0
    %144 = vmatprep.subr.mxu0 0.0
    %145 = vmatpush1.msra.mxu0 0.0
    %146 = vmatprep.subr.mxu0 0.0
    %147 = vmatpush1.msra.mxu0 0.0
    %148 = vmatprep.subr.mxu0 0.0
    %149 = vmatpush1.msra.mxu0 0.0
    %150 = vmatprep.subr.mxu0 0.0
    %151 = vmatpush1.msra.mxu0 0.0
    %152 = vmatprep.subr.mxu0 0.0
    %153 = vmatpush1.msra.mxu0 0.0
    %154 = vmatprep.mubr.f32.mxu0 0.0
    %155 = vmatmul.mubr.f32.gmra.mrb[0].mxu0 %v85
    %v156 = vpop.f32.mrb[0].mxu0
    %v157 = vadd.f32 %v82, %v156
    %v158 = vpop.f32.mrb[0].mxu0
    %159 = vmatprep.mubr.f32.mxu0 0.0
    %160 = vmatmul.mubr.f32.gmra.mrb[0].mxu0 %v88
    %v161 = vpop.f32.mrb[0].mxu0
    %v162 = vadd.f32 %v82, %v161
    %v163 = vpop.f32.mrb[0].mxu0
    %164 = vdwg.mxu0
    %v165 = vlaneseq
    %v166 = vshrl.u32 %v165, 7
    %v167 = vsub.s32 1, %v166
    %v168 = vrot.slane %v68, %v167
    %v169 = vsel %vm83, %v40, 0
    %v171 = vsel %vm83, %v41, 0
    %173 = vmatprep.subr.mxu0 0.0
    %174 = vmatpush1.msra.mxu0 %v48
    %175 = vmatprep.subr.mxu0 0.0
    %176 = vmatpush1.msra.mxu0 %v49
    %177 = vmatprep.subr.mxu0 0.0
    %178 = vmatpush1.msra.mxu0 %v50
    %179 = vmatprep.subr.mxu0 0.0
    %180 = vmatpush1.msra.mxu0 %v51
    %181 = vmatprep.subr.mxu0 0.0
    %182 = vmatpush1.msra.mxu0 0.0
    %183 = vmatprep.subr.mxu0 0.0
    %184 = vmatpush1.msra.mxu0 0.0
    %185 = vmatprep.subr.mxu0 0.0
    %186 = vmatpush1.msra.mxu0 0.0
    %187 = vmatprep.subr.mxu0 0.0
    %188 = vmatpush1.msra.mxu0 0.0
    %189 = vmatprep.subr.mxu0 0.0
    %190 = vmatpush1.msra.mxu0 0.0
    %191 = vmatprep.subr.mxu0 0.0
    %192 = vmatpush1.msra.mxu0 0.0
    %193 = vmatprep.subr.mxu0 0.0
    %194 = vmatpush1.msra.mxu0 0.0
    %195 = vmatprep.subr.mxu0 0.0
    %196 = vmatpush1.msra.mxu0 0.0
    %197 = vmatprep.subr.mxu0 0.0
    %198 = vmatpush1.msra.mxu0 0.0
    %199 = vmatprep.subr.mxu0 0.0
    %200 = vmatpush1.msra.mxu0 0.0
    %201 = vmatprep.subr.mxu0 0.0
    %202 = vmatpush1.msra.mxu0 0.0
    %203 = vmatprep.subr.mxu0 0.0
    %204 = vmatpush1.msra.mxu0 0.0
    %205 = vmatprep.subr.mxu0 0.0
    %206 = vmatpush1.msra.mxu0 0.0
    %207 = vmatprep.subr.mxu0 0.0
    %208 = vmatpush1.msra.mxu0 0.0
    %209 = vmatprep.subr.mxu0 0.0
    %210 = vmatpush1.msra.mxu0 0.0
    %211 = vmatprep.subr.mxu0 0.0
    %212 = vmatpush1.msra.mxu0 0.0
    %213 = vmatprep.subr.mxu0 0.0
    %214 = vmatpush1.msra.mxu0 0.0
    %215 = vmatprep.subr.mxu0 0.0
    %216 = vmatpush1.msra.mxu0 0.0
    %217 = vmatprep.subr.mxu0 0.0
    %218 = vmatpush1.msra.mxu0 0.0
    %219 = vmatprep.subr.mxu0 0.0
    %220 = vmatpush1.msra.mxu0 0.0
    %221 = vmatprep.subr.mxu0 0.0
    %222 = vmatpush1.msra.mxu0 0.0
    %223 = vmatprep.subr.mxu0 0.0
    %224 = vmatpush1.msra.mxu0 0.0
    %225 = vmatprep.subr.mxu0 0.0
    %226 = vmatpush1.msra.mxu0 0.0
    %227 = vmatprep.subr.mxu0 0.0
    %228 = vmatpush1.msra.mxu0 0.0
    %229 = vmatprep.subr.mxu0 0.0
    %230 = vmatpush1.msra.mxu0 0.0
    %231 = vmatprep.subr.mxu0 0.0
    %232 = vmatpush1.msra.mxu0 0.0
    %233 = vmatprep.subr.mxu0 0.0
    %234 = vmatpush1.msra.mxu0 0.0
    %235 = vmatprep.subr.mxu0 0.0
    %236 = vmatpush1.msra.mxu0 0.0
    %237 = vmatprep.mubr.f32.mxu0 0.0
    %238 = vmatmul.mubr.f32.gmra.mrb[0].mxu0 %v169
    %v239 = vpop.f32.mrb[0].mxu0
    %v240 = vadd.f32 %v168, %v239
    %v241 = vpop.f32.mrb[0].mxu0
    %242 = vmatprep.mubr.f32.mxu0 0.0
    %243 = vmatmul.mubr.f32.gmra.mrb[0].mxu0 %v171
    %v244 = vpop.f32.mrb[0].mxu0
    %v245 = vadd.f32 %v168, %v244
    %v246 = vpop.f32.mrb[0].mxu0
    %247 = vdwg.mxu0
    %249 = vrot.lane.b32.xlu0 %v157, 96
    %v250 = vpop.permute.xlu0 %249
    %vm251 = vcmask 64512
    %v252 = vsel %vm251, %v157, 0
    %v254 = vsel %vm251, %v250, 0
    %256 = vmatprep.subr.mxu0 0.0
    %257 = vmatpush1.xpose.msra.mxu0 %v254
    %258 = vmatprep.subr.mxu0 0.0
    %259 = vmatpush1.xpose.msra.mxu0 0.0
    %260 = vmatprep.subr.mxu0 0.0
    %261 = vmatpush1.xpose.msra.mxu0 0.0
    %262 = vmatprep.subr.mxu0 0.0
    %263 = vmatpush1.xpose.msra.mxu0 0.0
    %264 = vmatprep.subr.mxu0 0.0
    %265 = vmatpush1.xpose.msra.mxu0 0.0
    %266 = vmatprep.subr.mxu0 0.0
    %267 = vmatpush1.xpose.msra.mxu0 0.0
    %268 = vmatprep.subr.mxu0 0.0
    %269 = vmatpush1.xpose.msra.mxu0 0.0
    %270 = vmatprep.subr.mxu0 0.0
    %271 = vmatpush1.xpose.msra.mxu0 0.0
    %272 = vmatprep.subr.mxu0 0.0
    %273 = vmatpush1.xpose.msra.mxu0 0.0
    %274 = vmatprep.subr.mxu0 0.0
    %275 = vmatpush1.xpose.msra.mxu0 0.0
    %276 = vmatprep.subr.mxu0 0.0
    %277 = vmatpush1.xpose.msra.mxu0 0.0
    %278 = vmatprep.subr.mxu0 0.0
    %279 = vmatpush1.xpose.msra.mxu0 0.0
    %280 = vmatprep.subr.mxu0 0.0
    %281 = vmatpush1.xpose.msra.mxu0 0.0
    %282 = vmatprep.subr.mxu0 0.0
    %283 = vmatpush1.xpose.msra.mxu0 0.0
    %284 = vmatprep.subr.mxu0 0.0
    %285 = vmatpush1.xpose.msra.mxu0 0.0
    %286 = vmatprep.subr.mxu0 0.0
    %287 = vmatpush1.xpose.msra.mxu0 0.0
    %288 = vmatprep.subr.mxu0 0.0
    %289 = vmatpush1.xpose.msra.mxu0 0.0
    %290 = vmatprep.subr.mxu0 0.0
    %291 = vmatpush1.xpose.msra.mxu0 0.0
    %292 = vmatprep.subr.mxu0 0.0
    %293 = vmatpush1.xpose.msra.mxu0 0.0
    %294 = vmatprep.subr.mxu0 0.0
    %295 = vmatpush1.xpose.msra.mxu0 0.0
    %296 = vmatprep.subr.mxu0 0.0
    %297 = vmatpush1.xpose.msra.mxu0 0.0
    %298 = vmatprep.subr.mxu0 0.0
    %299 = vmatpush1.xpose.msra.mxu0 0.0
    %300 = vmatprep.subr.mxu0 0.0
    %301 = vmatpush1.xpose.msra.mxu0 0.0
    %302 = vmatprep.subr.mxu0 0.0
    %303 = vmatpush1.xpose.msra.mxu0 0.0
    %304 = vmatprep.subr.mxu0 0.0
    %305 = vmatpush1.xpose.msra.mxu0 0.0
    %306 = vmatprep.subr.mxu0 0.0
    %307 = vmatpush1.xpose.msra.mxu0 0.0
    %308 = vmatprep.subr.mxu0 0.0
    %309 = vmatpush1.xpose.msra.mxu0 0.0
    %310 = vmatprep.subr.mxu0 0.0
    %311 = vmatpush1.xpose.msra.mxu0 0.0
    %312 = vmatprep.subr.mxu0 0.0
    %313 = vmatpush1.xpose.msra.mxu0 0.0
    %314 = vmatprep.subr.mxu0 0.0
    %315 = vmatpush1.xpose.msra.mxu0 0.0
    %316 = vmatprep.subr.mxu0 0.0
    %317 = vmatpush1.xpose.msra.mxu0 0.0
    %318 = vmatprep.subr.mxu0 0.0
    %319 = vmatpush1.xpose.msra.mxu0 0.0
    %320 = vmatprep.mubr.f32.mxu0 0.0
    %321 = vmatmul.mubr.f32.gmra.mrb[0].mxu0 %v252
    %v322 = vpop.f32.mrb[0].mxu0
    %v323 = vadd.f32 0.0, %v322
    %v324 = vpop.f32.mrb[0].mxu0
    %325 = vdwg.mxu0
    %326 = vrot.lane.b32.xlu0 %v157, 120
    %v327 = vpop.permute.xlu0 %326
    %328 = vrot.lane.b32.xlu0 %v157, 88
    %v329 = vpop.permute.xlu0 %328
    %v330 = vsel %vm251, %v327, 0
    %v332 = vsel %vm251, %v329, 0
    %334 = vmatprep.subr.mxu0 0.0
    %335 = vmatpush1.xpose.msra.mxu0 %v332
    %336 = vmatprep.subr.mxu0 0.0
    %337 = vmatpush1.xpose.msra.mxu0 0.0
    %338 = vmatprep.subr.mxu0 0.0
    %339 = vmatpush1.xpose.msra.mxu0 0.0
    %340 = vmatprep.subr.mxu0 0.0
    %341 = vmatpush1.xpose.msra.mxu0 0.0
    %342 = vmatprep.subr.mxu0 0.0
    %343 = vmatpush1.xpose.msra.mxu0 0.0
    %344 = vmatprep.subr.mxu0 0.0
    %345 = vmatpush1.xpose.msra.mxu0 0.0
    %346 = vmatprep.subr.mxu0 0.0
    %347 = vmatpush1.xpose.msra.mxu0 0.0
    %348 = vmatprep.subr.mxu0 0.0
    %349 = vmatpush1.xpose.msra.mxu0 0.0
    %350 = vmatprep.subr.mxu0 0.0
    %351 = vmatpush1.xpose.msra.mxu0 0.0
    %352 = vmatprep.subr.mxu0 0.0
    %353 = vmatpush1.xpose.msra.mxu0 0.0
    %354 = vmatprep.subr.mxu0 0.0
    %355 = vmatpush1.xpose.msra.mxu0 0.0
    %356 = vmatprep.subr.mxu0 0.0
    %357 = vmatpush1.xpose.msra.mxu0 0.0
    %358 = vmatprep.subr.mxu0 0.0
    %359 = vmatpush1.xpose.msra.mxu0 0.0
    %360 = vmatprep.subr.mxu0 0.0
    %361 = vmatpush1.xpose.msra.mxu0 0.0
    %362 = vmatprep.subr.mxu0 0.0
    %363 = vmatpush1.xpose.msra.mxu0 0.0
    %364 = vmatprep.subr.mxu0 0.0
    %365 = vmatpush1.xpose.msra.mxu0 0.0
    %366 = vmatprep.subr.mxu0 0.0
    %367 = vmatpush1.xpose.msra.mxu0 0.0
    %368 = vmatprep.subr.mxu0 0.0
    %369 = vmatpush1.xpose.msra.mxu0 0.0
    %370 = vmatprep.subr.mxu0 0.0
    %371 = vmatpush1.xpose.msra.mxu0 0.0
    %372 = vmatprep.subr.mxu0 0.0
    %373 = vmatpush1.xpose.msra.mxu0 0.0
    %374 = vmatprep.subr.mxu0 0.0
    %375 = vmatpush1.xpose.msra.mxu0 0.0
    %376 = vmatprep.subr.mxu0 0.0
    %377 = vmatpush1.xpose.msra.mxu0 0.0
    %378 = vmatprep.subr.mxu0 0.0
    %379 = vmatpush1.xpose.msra.mxu0 0.0
    %380 = vmatprep.subr.mxu0 0.0
    %381 = vmatpush1.xpose.msra.mxu0 0.0
    %382 = vmatprep.subr.mxu0 0.0
    %383 = vmatpush1.xpose.msra.mxu0 0.0
    %384 = vmatprep.subr.mxu0 0.0
    %385 = vmatpush1.xpose.msra.mxu0 0.0
    %386 = vmatprep.subr.mxu0 0.0
    %387 = vmatpush1.xpose.msra.mxu0 0.0
    %388 = vmatprep.subr.mxu0 0.0
    %389 = vmatpush1.xpose.msra.mxu0 0.0
    %390 = vmatprep.subr.mxu0 0.0
    %391 = vmatpush1.xpose.msra.mxu0 0.0
    %392 = vmatprep.subr.mxu0 0.0
    %393 = vmatpush1.xpose.msra.mxu0 0.0
    %394 = vmatprep.subr.mxu0 0.0
    %395 = vmatpush1.xpose.msra.mxu0 0.0
    %396 = vmatprep.subr.mxu0 0.0
    %397 = vmatpush1.xpose.msra.mxu0 0.0
    %398 = vmatprep.mubr.f32.mxu0 0.0
    %399 = vmatmul.mubr.f32.gmra.mrb[0].mxu0 %v330
    %v400 = vpop.f32.mrb[0].mxu0
    %v401 = vadd.f32 0.0, %v400
    %v402 = vpop.f32.mrb[0].mxu0
    %403 = vdwg.mxu0
    %404 = vrot.lane.b32.xlu0 %v157, 112
    %v405 = vpop.permute.xlu0 %404
    %406 = vrot.lane.b32.xlu0 %v157, 80
    %v407 = vpop.permute.xlu0 %406
    %v408 = vsel %vm251, %v405, 0
    %v410 = vsel %vm251, %v407, 0
    %412 = vmatprep.subr.mxu0 0.0
    %413 = vmatpush1.xpose.msra.mxu0 %v410
    %414 = vmatprep.subr.mxu0 0.0
    %415 = vmatpush1.xpose.msra.mxu0 0.0
    %416 = vmatprep.subr.mxu0 0.0
    %417 = vmatpush1.xpose.msra.mxu0 0.0
    %418 = vmatprep.subr.mxu0 0.0
    %419 = vmatpush1.xpose.msra.mxu0 0.0
    %420 = vmatprep.subr.mxu0 0.0
    %421 = vmatpush1.xpose.msra.mxu0 0.0
    %422 = vmatprep.subr.mxu0 0.0
    %423 = vmatpush1.xpose.msra.mxu0 0.0
    %424 = vmatprep.subr.mxu0 0.0
    %425 = vmatpush1.xpose.msra.mxu0 0.0
    %426 = vmatprep.subr.mxu0 0.0
    %427 = vmatpush1.xpose.msra.mxu0 0.0
    %428 = vmatprep.subr.mxu0 0.0
    %429 = vmatpush1.xpose.msra.mxu0 0.0
    %430 = vmatprep.subr.mxu0 0.0
    %431 = vmatpush1.xpose.msra.mxu0 0.0
    %432 = vmatprep.subr.mxu0 0.0
    %433 = vmatpush1.xpose.msra.mxu0 0.0
    %434 = vmatprep.subr.mxu0 0.0
    %435 = vmatpush1.xpose.msra.mxu0 0.0
    %436 = vmatprep.subr.mxu0 0.0
    %437 = vmatpush1.xpose.msra.mxu0 0.0
    %438 = vmatprep.subr.mxu0 0.0
    %439 = vmatpush1.xpose.msra.mxu0 0.0
    %440 = vmatprep.subr.mxu0 0.0
    %441 = vmatpush1.xpose.msra.mxu0 0.0
    %442 = vmatprep.subr.mxu0 0.0
    %443 = vmatpush1.xpose.msra.mxu0 0.0
    %444 = vmatprep.subr.mxu0 0.0
    %445 = vmatpush1.xpose.msra.mxu0 0.0
    %446 = vmatprep.subr.mxu0 0.0
    %447 = vmatpush1.xpose.msra.mxu0 0.0
    %448 = vmatprep.subr.mxu0 0.0
    %449 = vmatpush1.xpose.msra.mxu0 0.0
    %450 = vmatprep.subr.mxu0 0.0
    %451 = vmatpush1.xpose.msra.mxu0 0.0
    %452 = vmatprep.subr.mxu0 0.0
    %453 = vmatpush1.xpose.msra.mxu0 0.0
    %454 = vmatprep.subr.mxu0 0.0
    %455 = vmatpush1.xpose.msra.mxu0 0.0
    %456 = vmatprep.subr.mxu0 0.0
    %457 = vmatpush1.xpose.msra.mxu0 0.0
    %458 = vmatprep.subr.mxu0 0.0
    %459 = vmatpush1.xpose.msra.mxu0 0.0
    %460 = vmatprep.subr.mxu0 0.0
    %461 = vmatpush1.xpose.msra.mxu0 0.0
    %462 = vmatprep.subr.mxu0 0.0
    %463 = vmatpush1.xpose.msra.mxu0 0.0
    %464 = vmatprep.subr.mxu0 0.0
    %465 = vmatpush1.xpose.msra.mxu0 0.0
    %466 = vmatprep.subr.mxu0 0.0
    %467 = vmatpush1.xpose.msra.mxu0 0.0
    %468 = vmatprep.subr.mxu0 0.0
    %469 = vmatpush1.xpose.msra.mxu0 0.0
    %470 = vmatprep.subr.mxu0 0.0
    %471 = vmatpush1.xpose.msra.mxu0 0.0
    %472 = vmatprep.subr.mxu0 0.0
    %473 = vmatpush1.xpose.msra.mxu0 0.0
    %474 = vmatprep.subr.mxu0 0.0
    %475 = vmatpush1.xpose.msra.mxu0 0.0
    %476 = vmatprep.mubr.f32.mxu0 0.0
    %477 = vmatmul.mubr.f32.gmra.mrb[0].mxu0 %v408
    %v478 = vpop.f32.mrb[0].mxu0
    %v479 = vadd.f32 0.0, %v478
    %v480 = vpop.f32.mrb[0].mxu0
    %481 = vdwg.mxu0
    %482 = vrot.lane.b32.xlu0 %v157, 104
    %v483 = vpop.permute.xlu0 %482
    %484 = vrot.lane.b32.xlu0 %v157, 72
    %v485 = vpop.permute.xlu0 %484
    %v486 = vsel %vm251, %v483, 0
    %v488 = vsel %vm251, %v485, 0
    %490 = vmatprep.subr.mxu0 0.0
    %491 = vmatpush1.xpose.msra.mxu0 %v488
    %492 = vmatprep.subr.mxu0 0.0
    %493 = vmatpush1.xpose.msra.mxu0 0.0
    %494 = vmatprep.subr.mxu0 0.0
    %495 = vmatpush1.xpose.msra.mxu0 0.0
    %496 = vmatprep.subr.mxu0 0.0
    %497 = vmatpush1.xpose.msra.mxu0 0.0
    %498 = vmatprep.subr.mxu0 0.0
    %499 = vmatpush1.xpose.msra.mxu0 0.0
    %500 = vmatprep.subr.mxu0 0.0
    %501 = vmatpush1.xpose.msra.mxu0 0.0
    %502 = vmatprep.subr.mxu0 0.0
    %503 = vmatpush1.xpose.msra.mxu0 0.0
    %504 = vmatprep.subr.mxu0 0.0
    %505 = vmatpush1.xpose.msra.mxu0 0.0
    %506 = vmatprep.subr.mxu0 0.0
    %507 = vmatpush1.xpose.msra.mxu0 0.0
    %508 = vmatprep.subr.mxu0 0.0
    %509 = vmatpush1.xpose.msra.mxu0 0.0
    %510 = vmatprep.subr.mxu0 0.0
    %511 = vmatpush1.xpose.msra.mxu0 0.0
    %512 = vmatprep.subr.mxu0 0.0
    %513 = vmatpush1.xpose.msra.mxu0 0.0
    %514 = vmatprep.subr.mxu0 0.0
    %515 = vmatpush1.xpose.msra.mxu0 0.0
    %516 = vmatprep.subr.mxu0 0.0
    %517 = vmatpush1.xpose.msra.mxu0 0.0
    %518 = vmatprep.subr.mxu0 0.0
    %519 = vmatpush1.xpose.msra.mxu0 0.0
    %520 = vmatprep.subr.mxu0 0.0
    %521 = vmatpush1.xpose.msra.mxu0 0.0
    %522 = vmatprep.subr.mxu0 0.0
    %523 = vmatpush1.xpose.msra.mxu0 0.0
    %524 = vmatprep.subr.mxu0 0.0
    %525 = vmatpush1.xpose.msra.mxu0 0.0
    %526 = vmatprep.subr.mxu0 0.0
    %527 = vmatpush1.xpose.msra.mxu0 0.0
    %528 = vmatprep.subr.mxu0 0.0
    %529 = vmatpush1.xpose.msra.mxu0 0.0
    %530 = vmatprep.subr.mxu0 0.0
    %531 = vmatpush1.xpose.msra.mxu0 0.0
    %532 = vmatprep.subr.mxu0 0.0
    %533 = vmatpush1.xpose.msra.mxu0 0.0
    %534 = vmatprep.subr.mxu0 0.0
    %535 = vmatpush1.xpose.msra.mxu0 0.0
    %536 = vmatprep.subr.mxu0 0.0
    %537 = vmatpush1.xpose.msra.mxu0 0.0
    %538 = vmatprep.subr.mxu0 0.0
    %539 = vmatpush1.xpose.msra.mxu0 0.0
    %540 = vmatprep.subr.mxu0 0.0
    %541 = vmatpush1.xpose.msra.mxu0 0.0
    %542 = vmatprep.subr.mxu0 0.0
    %543 = vmatpush1.xpose.msra.mxu0 0.0
    %544 = vmatprep.subr.mxu0 0.0
    %545 = vmatpush1.xpose.msra.mxu0 0.0
    %546 = vmatprep.subr.mxu0 0.0
    %547 = vmatpush1.xpose.msra.mxu0 0.0
    %548 = vmatprep.subr.mxu0 0.0
    %549 = vmatpush1.xpose.msra.mxu0 0.0
    %550 = vmatprep.subr.mxu0 0.0
    %551 = vmatpush1.xpose.msra.mxu0 0.0
    %552 = vmatprep.subr.mxu0 0.0
    %553 = vmatpush1.xpose.msra.mxu0 0.0
    %554 = vmatprep.mubr.f32.mxu0 0.0
    %555 = vmatmul.mubr.f32.gmra.mrb[0].mxu0 %v486
    %v556 = vpop.f32.mrb[0].mxu0
    %v557 = vadd.f32 0.0, %v556
    %v558 = vpop.f32.mrb[0].mxu0
    %559 = vdwg.mxu0
    %561 = vrot.lane.b32.xlu0 %v162, 96
    %v562 = vpop.permute.xlu0 %561
    %v563 = vsel %vm251, %v162, 0
    %v565 = vsel %vm251, %v562, 0
    %567 = vmatprep.subr.mxu0 0.0
    %568 = vmatpush1.xpose.msra.mxu0 %v565
    %569 = vmatprep.subr.mxu0 0.0
    %570 = vmatpush1.xpose.msra.mxu0 0.0
    %571 = vmatprep.subr.mxu0 0.0
    %572 = vmatpush1.xpose.msra.mxu0 0.0
    %573 = vmatprep.subr.mxu0 0.0
    %574 = vmatpush1.xpose.msra.mxu0 0.0
    %575 = vmatprep.subr.mxu0 0.0
    %576 = vmatpush1.xpose.msra.mxu0 0.0
    %577 = vmatprep.subr.mxu0 0.0
    %578 = vmatpush1.xpose.msra.mxu0 0.0
    %579 = vmatprep.subr.mxu0 0.0
    %580 = vmatpush1.xpose.msra.mxu0 0.0
    %581 = vmatprep.subr.mxu0 0.0
    %582 = vmatpush1.xpose.msra.mxu0 0.0
    %583 = vmatprep.subr.mxu0 0.0
    %584 = vmatpush1.xpose.msra.mxu0 0.0
    %585 = vmatprep.subr.mxu0 0.0
    %586 = vmatpush1.xpose.msra.mxu0 0.0
    %587 = vmatprep.subr.mxu0 0.0
    %588 = vmatpush1.xpose.msra.mxu0 0.0
    %589 = vmatprep.subr.mxu0 0.0
    %590 = vmatpush1.xpose.msra.mxu0 0.0
    %591 = vmatprep.subr.mxu0 0.0
    %592 = vmatpush1.xpose.msra.mxu0 0.0
    %593 = vmatprep.subr.mxu0 0.0
    %594 = vmatpush1.xpose.msra.mxu0 0.0
    %595 = vmatprep.subr.mxu0 0.0
    %596 = vmatpush1.xpose.msra.mxu0 0.0
    %597 = vmatprep.subr.mxu0 0.0
    %598 = vmatpush1.xpose.msra.mxu0 0.0
    %599 = vmatprep.subr.mxu0 0.0
    %600 = vmatpush1.xpose.msra.mxu0 0.0
    %601 = vmatprep.subr.mxu0 0.0
    %602 = vmatpush1.xpose.msra.mxu0 0.0
    %603 = vmatprep.subr.mxu0 0.0
    %604 = vmatpush1.xpose.msra.mxu0 0.0
    %605 = vmatprep.subr.mxu0 0.0
    %606 = vmatpush1.xpose.msra.mxu0 0.0
    %607 = vmatprep.subr.mxu0 0.0
    %608 = vmatpush1.xpose.msra.mxu0 0.0
    %609 = vmatprep.subr.mxu0 0.0
    %610 = vmatpush1.xpose.msra.mxu0 0.0
    %611 = vmatprep.subr.mxu0 0.0
    %612 = vmatpush1.xpose.msra.mxu0 0.0
    %613 = vmatprep.subr.mxu0 0.0
    %614 = vmatpush1.xpose.msra.mxu0 0.0
    %615 = vmatprep.subr.mxu0 0.0
    %616 = vmatpush1.xpose.msra.mxu0 0.0
    %617 = vmatprep.subr.mxu0 0.0
    %618 = vmatpush1.xpose.msra.mxu0 0.0
    %619 = vmatprep.subr.mxu0 0.0
    %620 = vmatpush1.xpose.msra.mxu0 0.0
    %621 = vmatprep.subr.mxu0 0.0
    %622 = vmatpush1.xpose.msra.mxu0 0.0
    %623 = vmatprep.subr.mxu0 0.0
    %624 = vmatpush1.xpose.msra.mxu0 0.0
    %625 = vmatprep.subr.mxu0 0.0
    %626 = vmatpush1.xpose.msra.mxu0 0.0
    %627 = vmatprep.subr.mxu0 0.0
    %628 = vmatpush1.xpose.msra.mxu0 0.0
    %629 = vmatprep.subr.mxu0 0.0
    %630 = vmatpush1.xpose.msra.mxu0 0.0
    %631 = vmatprep.mubr.f32.mxu0 0.0
    %632 = vmatmul.mubr.f32.gmra.mrb[0].mxu0 %v563
    %v633 = vpop.f32.mrb[0].mxu0
    %v634 = vadd.f32 0.0, %v633
    %v635 = vpop.f32.mrb[0].mxu0
    %636 = vdwg.mxu0
    %637 = vrot.lane.b32.xlu0 %v162, 120
    %v638 = vpop.permute.xlu0 %637
    %639 = vrot.lane.b32.xlu0 %v162, 88
    %v640 = vpop.permute.xlu0 %639
    %v641 = vsel %vm251, %v638, 0
    %v643 = vsel %vm251, %v640, 0
    %645 = vmatprep.subr.mxu0 0.0
    %646 = vmatpush1.xpose.msra.mxu0 %v643
    %647 = vmatprep.subr.mxu0 0.0
    %648 = vmatpush1.xpose.msra.mxu0 0.0
    %649 = vmatprep.subr.mxu0 0.0
    %650 = vmatpush1.xpose.msra.mxu0 0.0
    %651 = vmatprep.subr.mxu0 0.0
    %652 = vmatpush1.xpose.msra.mxu0 0.0
    %653 = vmatprep.subr.mxu0 0.0
    %654 = vmatpush1.xpose.msra.mxu0 0.0
    %655 = vmatprep.subr.mxu0 0.0
    %656 = vmatpush1.xpose.msra.mxu0 0.0
    %657 = vmatprep.subr.mxu0 0.0
    %658 = vmatpush1.xpose.msra.mxu0 0.0
    %659 = vmatprep.subr.mxu0 0.0
    %660 = vmatpush1.xpose.msra.mxu0 0.0
    %661 = vmatprep.subr.mxu0 0.0
    %662 = vmatpush1.xpose.msra.mxu0 0.0
    %663 = vmatprep.subr.mxu0 0.0
    %664 = vmatpush1.xpose.msra.mxu0 0.0
    %665 = vmatprep.subr.mxu0 0.0
    %666 = vmatpush1.xpose.msra.mxu0 0.0
    %667 = vmatprep.subr.mxu0 0.0
    %668 = vmatpush1.xpose.msra.mxu0 0.0
    %669 = vmatprep.subr.mxu0 0.0
    %670 = vmatpush1.xpose.msra.mxu0 0.0
    %671 = vmatprep.subr.mxu0 0.0
    %672 = vmatpush1.xpose.msra.mxu0 0.0
    %673 = vmatprep.subr.mxu0 0.0
    %674 = vmatpush1.xpose.msra.mxu0 0.0
    %675 = vmatprep.subr.mxu0 0.0
    %676 = vmatpush1.xpose.msra.mxu0 0.0
    %677 = vmatprep.subr.mxu0 0.0
    %678 = vmatpush1.xpose.msra.mxu0 0.0
    %679 = vmatprep.subr.mxu0 0.0
    %680 = vmatpush1.xpose.msra.mxu0 0.0
    %681 = vmatprep.subr.mxu0 0.0
    %682 = vmatpush1.xpose.msra.mxu0 0.0
    %683 = vmatprep.subr.mxu0 0.0
    %684 = vmatpush1.xpose.msra.mxu0 0.0
    %685 = vmatprep.subr.mxu0 0.0
    %686 = vmatpush1.xpose.msra.mxu0 0.0
    %687 = vmatprep.subr.mxu0 0.0
    %688 = vmatpush1.xpose.msra.mxu0 0.0
    %689 = vmatprep.subr.mxu0 0.0
    %690 = vmatpush1.xpose.msra.mxu0 0.0
    %691 = vmatprep.subr.mxu0 0.0
    %692 = vmatpush1.xpose.msra.mxu0 0.0
    %693 = vmatprep.subr.mxu0 0.0
    %694 = vmatpush1.xpose.msra.mxu0 0.0
    %695 = vmatprep.subr.mxu0 0.0
    %696 = vmatpush1.xpose.msra.mxu0 0.0
    %697 = vmatprep.subr.mxu0 0.0
    %698 = vmatpush1.xpose.msra.mxu0 0.0
    %699 = vmatprep.subr.mxu0 0.0
    %700 = vmatpush1.xpose.msra.mxu0 0.0
    %701 = vmatprep.subr.mxu0 0.0
    %702 = vmatpush1.xpose.msra.mxu0 0.0
    %703 = vmatprep.subr.mxu0 0.0
    %704 = vmatpush1.xpose.msra.mxu0 0.0
    %705 = vmatprep.subr.mxu0 0.0
    %706 = vmatpush1.xpose.msra.mxu0 0.0
    %707 = vmatprep.subr.mxu0 0.0
    %708 = vmatpush1.xpose.msra.mxu0 0.0
    %709 = vmatprep.mubr.f32.mxu0 0.0
    %710 = vmatmul.mubr.f32.gmra.mrb[0].mxu0 %v641
    %v711 = vpop.f32.mrb[0].mxu0
    %v712 = vadd.f32 0.0, %v711
    %v713 = vpop.f32.mrb[0].mxu0
    %714 = vdwg.mxu0
    %715 = vrot.lane.b32.xlu0 %v162, 112
    %v716 = vpop.permute.xlu0 %715
    %717 = vrot.lane.b32.xlu0 %v162, 80
    %v718 = vpop.permute.xlu0 %717
    %v719 = vsel %vm251, %v716, 0
    %v721 = vsel %vm251, %v718, 0
    %723 = vmatprep.subr.mxu0 0.0
    %724 = vmatpush1.xpose.msra.mxu0 %v721
    %725 = vmatprep.subr.mxu0 0.0
    %726 = vmatpush1.xpose.msra.mxu0 0.0
    %727 = vmatprep.subr.mxu0 0.0
    %728 = vmatpush1.xpose.msra.mxu0 0.0
    %729 = vmatprep.subr.mxu0 0.0
    %730 = vmatpush1.xpose.msra.mxu0 0.0
    %731 = vmatprep.subr.mxu0 0.0
    %732 = vmatpush1.xpose.msra.mxu0 0.0
    %733 = vmatprep.subr.mxu0 0.0
    %734 = vmatpush1.xpose.msra.mxu0 0.0
    %735 = vmatprep.subr.mxu0 0.0
    %736 = vmatpush1.xpose.msra.mxu0 0.0
    %737 = vmatprep.subr.mxu0 0.0
    %738 = vmatpush1.xpose.msra.mxu0 0.0
    %739 = vmatprep.subr.mxu0 0.0
    %740 = vmatpush1.xpose.msra.mxu0 0.0
    %741 = vmatprep.subr.mxu0 0.0
    %742 = vmatpush1.xpose.msra.mxu0 0.0
    %743 = vmatprep.subr.mxu0 0.0
    %744 = vmatpush1.xpose.msra.mxu0 0.0
    %745 = vmatprep.subr.mxu0 0.0
    %746 = vmatpush1.xpose.msra.mxu0 0.0
    %747 = vmatprep.subr.mxu0 0.0
    %748 = vmatpush1.xpose.msra.mxu0 0.0
    %749 = vmatprep.subr.mxu0 0.0
    %750 = vmatpush1.xpose.msra.mxu0 0.0
    %751 = vmatprep.subr.mxu0 0.0
    %752 = vmatpush1.xpose.msra.mxu0 0.0
    %753 = vmatprep.subr.mxu0 0.0
    %754 = vmatpush1.xpose.msra.mxu0 0.0
    %755 = vmatprep.subr.mxu0 0.0
    %756 = vmatpush1.xpose.msra.mxu0 0.0
    %757 = vmatprep.subr.mxu0 0.0
    %758 = vmatpush1.xpose.msra.mxu0 0.0
    %759 = vmatprep.subr.mxu0 0.0
    %760 = vmatpush1.xpose.msra.mxu0 0.0
    %761 = vmatprep.subr.mxu0 0.0
    %762 = vmatpush1.xpose.msra.mxu0 0.0
    %763 = vmatprep.subr.mxu0 0.0
    %764 = vmatpush1.xpose.msra.mxu0 0.0
    %765 = vmatprep.subr.mxu0 0.0
    %766 = vmatpush1.xpose.msra.mxu0 0.0
    %767 = vmatprep.subr.mxu0 0.0
    %768 = vmatpush1.xpose.msra.mxu0 0.0
    %769 = vmatprep.subr.mxu0 0.0
    %770 = vmatpush1.xpose.msra.mxu0 0.0
    %771 = vmatprep.subr.mxu0 0.0
    %772 = vmatpush1.xpose.msra.mxu0 0.0
    %773 = vmatprep.subr.mxu0 0.0
    %774 = vmatpush1.xpose.msra.mxu0 0.0
    %775 = vmatprep.subr.mxu0 0.0
    %776 = vmatpush1.xpose.msra.mxu0 0.0
    %777 = vmatprep.subr.mxu0 0.0
    %778 = vmatpush1.xpose.msra.mxu0 0.0
    %779 = vmatprep.subr.mxu0 0.0
    %780 = vmatpush1.xpose.msra.mxu0 0.0
    %781 = vmatprep.subr.mxu0 0.0
    %782 = vmatpush1.xpose.msra.mxu0 0.0
    %783 = vmatprep.subr.mxu0 0.0
    %784 = vmatpush1.xpose.msra.mxu0 0.0
    %785 = vmatprep.subr.mxu0 0.0
    %786 = vmatpush1.xpose.msra.mxu0 0.0
    %787 = vmatprep.mubr.f32.mxu0 0.0
    %788 = vmatmul.mubr.f32.gmra.mrb[0].mxu0 %v719
    %v789 = vpop.f32.mrb[0].mxu0
    %v790 = vadd.f32 0.0, %v789
    %v791 = vpop.f32.mrb[0].mxu0
    %792 = vdwg.mxu0
    %793 = vrot.lane.b32.xlu0 %v162, 104
    %v794 = vpop.permute.xlu0 %793
    %795 = vrot.lane.b32.xlu0 %v162, 72
    %v796 = vpop.permute.xlu0 %795
    %v797 = vsel %vm251, %v794, 0
    %v799 = vsel %vm251, %v796, 0
    %801 = vmatprep.subr.mxu0 0.0
    %802 = vmatpush1.xpose.msra.mxu0 %v799
    %803 = vmatprep.subr.mxu0 0.0
    %804 = vmatpush1.xpose.msra.mxu0 0.0
    %805 = vmatprep.subr.mxu0 0.0
    %806 = vmatpush1.xpose.msra.mxu0 0.0
    %807 = vmatprep.subr.mxu0 0.0
    %808 = vmatpush1.xpose.msra.mxu0 0.0
    %809 = vmatprep.subr.mxu0 0.0
    %810 = vmatpush1.xpose.msra.mxu0 0.0
    %811 = vmatprep.subr.mxu0 0.0
    %812 = vmatpush1.xpose.msra.mxu0 0.0
    %813 = vmatprep.subr.mxu0 0.0
    %814 = vmatpush1.xpose.msra.mxu0 0.0
    %815 = vmatprep.subr.mxu0 0.0
    %816 = vmatpush1.xpose.msra.mxu0 0.0
    %817 = vmatprep.subr.mxu0 0.0
    %818 = vmatpush1.xpose.msra.mxu0 0.0
    %819 = vmatprep.subr.mxu0 0.0
    %820 = vmatpush1.xpose.msra.mxu0 0.0
    %821 = vmatprep.subr.mxu0 0.0
    %822 = vmatpush1.xpose.msra.mxu0 0.0
    %823 = vmatprep.subr.mxu0 0.0
    %824 = vmatpush1.xpose.msra.mxu0 0.0
    %825 = vmatprep.subr.mxu0 0.0
    %826 = vmatpush1.xpose.msra.mxu0 0.0
    %827 = vmatprep.subr.mxu0 0.0
    %828 = vmatpush1.xpose.msra.mxu0 0.0
    %829 = vmatprep.subr.mxu0 0.0
    %830 = vmatpush1.xpose.msra.mxu0 0.0
    %831 = vmatprep.subr.mxu0 0.0
    %832 = vmatpush1.xpose.msra.mxu0 0.0
    %833 = vmatprep.subr.mxu0 0.0
    %834 = vmatpush1.xpose.msra.mxu0 0.0
    %835 = vmatprep.subr.mxu0 0.0
    %836 = vmatpush1.xpose.msra.mxu0 0.0
    %837 = vmatprep.subr.mxu0 0.0
    %838 = vmatpush1.xpose.msra.mxu0 0.0
    %839 = vmatprep.subr.mxu0 0.0
    %840 = vmatpush1.xpose.msra.mxu0 0.0
    %841 = vmatprep.subr.mxu0 0.0
    %842 = vmatpush1.xpose.msra.mxu0 0.0
    %843 = vmatprep.subr.mxu0 0.0
    %844 = vmatpush1.xpose.msra.mxu0 0.0
    %845 = vmatprep.subr.mxu0 0.0
    %846 = vmatpush1.xpose.msra.mxu0 0.0
    %847 = vmatprep.subr.mxu0 0.0
    %848 = vmatpush1.xpose.msra.mxu0 0.0
    %849 = vmatprep.subr.mxu0 0.0
    %850 = vmatpush1.xpose.msra.mxu0 0.0
    %851 = vmatprep.subr.mxu0 0.0
    %852 = vmatpush1.xpose.msra.mxu0 0.0
    %853 = vmatprep.subr.mxu0 0.0
    %854 = vmatpush1.xpose.msra.mxu0 0.0
    %855 = vmatprep.subr.mxu0 0.0
    %856 = vmatpush1.xpose.msra.mxu0 0.0
    %857 = vmatprep.subr.mxu0 0.0
    %858 = vmatpush1.xpose.msra.mxu0 0.0
    %859 = vmatprep.subr.mxu0 0.0
    %860 = vmatpush1.xpose.msra.mxu0 0.0
    %861 = vmatprep.subr.mxu0 0.0
    %862 = vmatpush1.xpose.msra.mxu0 0.0
    %863 = vmatprep.subr.mxu0 0.0
    %864 = vmatpush1.xpose.msra.mxu0 0.0
    %865 = vmatprep.mubr.f32.mxu0 0.0
    %866 = vmatmul.mubr.f32.gmra.mrb[0].mxu0 %v797
    %v867 = vpop.f32.mrb[0].mxu0
    %v868 = vadd.f32 0.0, %v867
    %v869 = vpop.f32.mrb[0].mxu0
    %870 = vdwg.mxu0
    %v871 = vsel %vm251, %v323, -inf
    %872 = vmax.xlane.f32.xlu0 %v871
    %v873 = vpop.xlane.xlu0 %872
    %v874 = vsel %vm251, %v401, -inf
    %875 = vmax.xlane.f32.xlu0 %v874
    %v876 = vpop.xlane.xlu0 %875
    %v877 = vsel %vm251, %v479, -inf
    %878 = vmax.xlane.f32.xlu0 %v877
    %v879 = vpop.xlane.xlu0 %878
    %v880 = vsel %vm251, %v557, -inf
    %881 = vmax.xlane.f32.xlu0 %v880
    %v882 = vpop.xlane.xlu0 %881
    %v883 = vsel %vm251, %v634, -inf
    %884 = vmax.xlane.f32.xlu0 %v883
    %v885 = vpop.xlane.xlu0 %884
    %v886 = vsel %vm251, %v712, -inf
    %887 = vmax.xlane.f32.xlu0 %v886
    %v888 = vpop.xlane.xlu0 %887
    %v889 = vsel %vm251, %v790, -inf
    %890 = vmax.xlane.f32.xlu0 %v889
    %v891 = vpop.xlane.xlu0 %890
    %v892 = vsel %vm251, %v868, -inf
    %893 = vmax.xlane.f32.xlu0 %v892
    %v894 = vpop.xlane.xlu0 %893
    %v895 = vsub.f32 %v323, %v873
    %v896 = vsub.f32 %v401, %v876
    %v897 = vsub.f32 %v479, %v879
    %v898 = vsub.f32 %v557, %v882
    %v899 = vsub.f32 %v634, %v885
    %v900 = vsub.f32 %v712, %v888
    %v901 = vsub.f32 %v790, %v891
    %v902 = vsub.f32 %v868, %v894
    %v903 = vmul.f32 %v895, 1.442695
    %v904 = vpow.pop %v903
    %v905 = vmul.f32 %v896, 1.442695
    %v906 = vpow.pop %v905
    %v907 = vmul.f32 %v897, 1.442695
    %v908 = vpow.pop %v907
    %v909 = vmul.f32 %v898, 1.442695
    %v910 = vpow.pop %v909
    %v911 = vmul.f32 %v899, 1.442695
    %v912 = vpow.pop %v911
    %v913 = vmul.f32 %v900, 1.442695
    %v914 = vpow.pop %v913
    %v915 = vmul.f32 %v901, 1.442695
    %v916 = vpow.pop %v915
    %v917 = vmul.f32 %v902, 1.442695
    %v918 = vpow.pop %v917
    %v919 = vsel %vm251, %v904, 0.0
    %920 = vadd.xlane.f32.xlu0 %v919
    %v921 = vpop.xlane.xlu0 %920
    %v922 = vsel %vm251, %v906, 0.0
    %923 = vadd.xlane.f32.xlu0 %v922
    %v924 = vpop.xlane.xlu0 %923
    %v925 = vsel %vm251, %v908, 0.0
    %926 = vadd.xlane.f32.xlu0 %v925
    %v927 = vpop.xlane.xlu0 %926
    %v928 = vsel %vm251, %v910, 0.0
    %929 = vadd.xlane.f32.xlu0 %v928
    %v930 = vpop.xlane.xlu0 %929
    %v931 = vsel %vm251, %v912, 0.0
    %932 = vadd.xlane.f32.xlu0 %v931
    %v933 = vpop.xlane.xlu0 %932
    %v934 = vsel %vm251, %v914, 0.0
    %935 = vadd.xlane.f32.xlu0 %v934
    %v936 = vpop.xlane.xlu0 %935
    %v937 = vsel %vm251, %v916, 0.0
    %938 = vadd.xlane.f32.xlu0 %v937
    %v939 = vpop.xlane.xlu0 %938
    %v940 = vsel %vm251, %v918, 0.0
    %941 = vadd.xlane.f32.xlu0 %v940
    %v942 = vpop.xlane.xlu0 %941
    %v943 = vrcp.pop %v921
    %v944 = vrcp.pop %v924
    %v945 = vrcp.pop %v927
    %v946 = vrcp.pop %v930
    %v947 = vrcp.pop %v933
    %v948 = vrcp.pop %v936
    %v949 = vrcp.pop %v939
    %v950 = vrcp.pop %v942
    %v951 = vmul.f32 %v904, %v943
    %v952 = vmul.f32 %v906, %v944
    %v953 = vmul.f32 %v908, %v945
    %v954 = vmul.f32 %v910, %v946
    %v955 = vmul.f32 %v912, %v947
    %v956 = vmul.f32 %v914, %v948
    %v957 = vmul.f32 %v916, %v949
    %v958 = vmul.f32 %v918, %v950
    %960 = vrot.lane.b32.xlu0 %v240, 96
    %v961 = vpop.permute.xlu0 %960
    %v964 = vsel %vm251, %v952, 0
    %966 = vmatprep.subr.mxu0 0.0
    %967 = vmatpush1.msra.mxu0 %v961
    %968 = vmatprep.subr.mxu0 0.0
    %969 = vmatpush1.msra.mxu0 0.0
    %970 = vmatprep.subr.mxu0 0.0
    %971 = vmatpush1.msra.mxu0 0.0
    %972 = vmatprep.subr.mxu0 0.0
    %973 = vmatpush1.msra.mxu0 0.0
    %974 = vmatprep.subr.mxu0 0.0
    %975 = vmatpush1.msra.mxu0 0.0
    %976 = vmatprep.subr.mxu0 0.0
    %977 = vmatpush1.msra.mxu0 0.0
    %978 = vmatprep.subr.mxu0 0.0
    %979 = vmatpush1.msra.mxu0 0.0
    %980 = vmatprep.subr.mxu0 0.0
    %981 = vmatpush1.msra.mxu0 0.0
    %982 = vmatprep.subr.mxu0 0.0
    %983 = vmatpush1.msra.mxu0 0.0
    %984 = vmatprep.subr.mxu0 0.0
    %985 = vmatpush1.msra.mxu0 0.0
    %986 = vmatprep.subr.mxu0 0.0
    %987 = vmatpush1.msra.mxu0 0.0
    %988 = vmatprep.subr.mxu0 0.0
    %989 = vmatpush1.msra.mxu0 0.0
    %990 = vmatprep.subr.mxu0 0.0
    %991 = vmatpush1.msra.mxu0 0.0
    %992 = vmatprep.subr.mxu0 0.0
    %993 = vmatpush1.msra.mxu0 0.0
    %994 = vmatprep.subr.mxu0 0.0
    %995 = vmatpush1.msra.mxu0 0.0
    %996 = vmatprep.subr.mxu0 0.0
    %997 = vmatpush1.msra.mxu0 0.0
    %998 = vmatprep.subr.mxu0 0.0
    %999 = vmatpush1.msra.mxu0 0.0
    %1000 = vmatprep.subr.mxu0 0.0
    %1001 = vmatpush1.msra.mxu0 0.0
    %1002 = vmatprep.subr.mxu0 0.0
    %1003 = vmatpush1.msra.mxu0 0.0
    %1004 = vmatprep.subr.mxu0 0.0
    %1005 = vmatpush1.msra.mxu0 0.0
    %1006 = vmatprep.subr.mxu0 0.0
    %1007 = vmatpush1.msra.mxu0 0.0
    %1008 = vmatprep.subr.mxu0 0.0
    %1009 = vmatpush1.msra.mxu0 0.0
    %1010 = vmatprep.subr.mxu0 0.0
    %1011 = vmatpush1.msra.mxu0 0.0
    %1012 = vmatprep.subr.mxu0 0.0
    %1013 = vmatpush1.msra.mxu0 0.0
    %1014 = vmatprep.subr.mxu0 0.0
    %1015 = vmatpush1.msra.mxu0 0.0
    %1016 = vmatprep.subr.mxu0 0.0
    %1017 = vmatpush1.msra.mxu0 0.0
    %1018 = vmatprep.subr.mxu0 0.0
    %1019 = vmatpush1.msra.mxu0 0.0
    %1020 = vmatprep.subr.mxu0 0.0
    %1021 = vmatpush1.msra.mxu0 0.0
    %1022 = vmatprep.subr.mxu0 0.0
    %1023 = vmatpush1.msra.mxu0 0.0
    %1024 = vmatprep.subr.mxu0 0.0
    %1025 = vmatpush1.msra.mxu0 0.0
    %1026 = vmatprep.subr.mxu0 0.0
    %1027 = vmatpush1.msra.mxu0 0.0
    %1028 = vmatprep.subr.mxu0 0.0
    %1029 = vmatpush1.msra.mxu0 0.0
    %1030 = vmatprep.mubr.f32.mxu0 0.0
    %1031 = vmatmul.mubr.f32.gmra.mrb[0].mxu0 %v964
    %v1032 = vpop.f32.mrb[0].mxu0
    %v1033 = vadd.f32 0.0, %v1032
    %v1034 = vpop.f32.mrb[0].mxu0
    %1035 = vdwg.mxu0
    %v1037 = vsel %vm251, %v951, 0
    %1039 = vmatprep.subr.mxu0 0.0
    %1040 = vmatpush1.msra.mxu0 %v240
    %1041 = vmatprep.subr.mxu0 0.0
    %1042 = vmatpush1.msra.mxu0 0.0
    %1043 = vmatprep.subr.mxu0 0.0
    %1044 = vmatpush1.msra.mxu0 0.0
    %1045 = vmatprep.subr.mxu0 0.0
    %1046 = vmatpush1.msra.mxu0 0.0
    %1047 = vmatprep.subr.mxu0 0.0
    %1048 = vmatpush1.msra.mxu0 0.0
    %1049 = vmatprep.subr.mxu0 0.0
    %1050 = vmatpush1.msra.mxu0 0.0
    %1051 = vmatprep.subr.mxu0 0.0
    %1052 = vmatpush1.msra.mxu0 0.0
    %1053 = vmatprep.subr.mxu0 0.0
    %1054 = vmatpush1.msra.mxu0 0.0
    %1055 = vmatprep.subr.mxu0 0.0
    %1056 = vmatpush1.msra.mxu0 0.0
    %1057 = vmatprep.subr.mxu0 0.0
    %1058 = vmatpush1.msra.mxu0 0.0
    %1059 = vmatprep.subr.mxu0 0.0
    %1060 = vmatpush1.msra.mxu0 0.0
    %1061 = vmatprep.subr.mxu0 0.0
    %1062 = vmatpush1.msra.mxu0 0.0
    %1063 = vmatprep.subr.mxu0 0.0
    %1064 = vmatpush1.msra.mxu0 0.0
    %1065 = vmatprep.subr.mxu0 0.0
    %1066 = vmatpush1.msra.mxu0 0.0
    %1067 = vmatprep.subr.mxu0 0.0
    %1068 = vmatpush1.msra.mxu0 0.0
    %1069 = vmatprep.subr.mxu0 0.0
    %1070 = vmatpush1.msra.mxu0 0.0
    %1071 = vmatprep.subr.mxu0 0.0
    %1072 = vmatpush1.msra.mxu0 0.0
    %1073 = vmatprep.subr.mxu0 0.0
    %1074 = vmatpush1.msra.mxu0 0.0
    %1075 = vmatprep.subr.mxu0 0.0
    %1076 = vmatpush1.msra.mxu0 0.0
    %1077 = vmatprep.subr.mxu0 0.0
    %1078 = vmatpush1.msra.mxu0 0.0
    %1079 = vmatprep.subr.mxu0 0.0
    %1080 = vmatpush1.msra.mxu0 0.0
    %1081 = vmatprep.subr.mxu0 0.0
    %1082 = vmatpush1.msra.mxu0 0.0
    %1083 = vmatprep.subr.mxu0 0.0
    %1084 = vmatpush1.msra.mxu0 0.0
    %1085 = vmatprep.subr.mxu0 0.0
    %1086 = vmatpush1.msra.mxu0 0.0
    %1087 = vmatprep.subr.mxu0 0.0
    %1088 = vmatpush1.msra.mxu0 0.0
    %1089 = vmatprep.subr.mxu0 0.0
    %1090 = vmatpush1.msra.mxu0 0.0
    %1091 = vmatprep.subr.mxu0 0.0
    %1092 = vmatpush1.msra.mxu0 0.0
    %1093 = vmatprep.subr.mxu0 0.0
    %1094 = vmatpush1.msra.mxu0 0.0
    %1095 = vmatprep.subr.mxu0 0.0
    %1096 = vmatpush1.msra.mxu0 0.0
    %1097 = vmatprep.subr.mxu0 0.0
    %1098 = vmatpush1.msra.mxu0 0.0
    %1099 = vmatprep.subr.mxu0 0.0
    %1100 = vmatpush1.msra.mxu0 0.0
    %1101 = vmatprep.subr.mxu0 0.0
    %1102 = vmatpush1.msra.mxu0 0.0
    %1103 = vmatprep.mubr.f32.mxu0 0.0
    %1104 = vmatmul.mubr.f32.gmra.mrb[0].mxu0 %v1037
    %v1105 = vpop.f32.mrb[0].mxu0
    %v1106 = vadd.f32 %v1033, %v1105
    %v1107 = vpop.f32.mrb[0].mxu0
    %1108 = vdwg.mxu0
    %1109 = vrot.lane.b32.xlu0 %v240, 64
    %v1110 = vpop.permute.xlu0 %1109
    %v1113 = vsel %vm251, %v953, 0
    %1115 = vmatprep.subr.mxu0 0.0
    %1116 = vmatpush1.msra.mxu0 %v1110
    %1117 = vmatprep.subr.mxu0 0.0
    %1118 = vmatpush1.msra.mxu0 0.0
    %1119 = vmatprep.subr.mxu0 0.0
    %1120 = vmatpush1.msra.mxu0 0.0
    %1121 = vmatprep.subr.mxu0 0.0
    %1122 = vmatpush1.msra.mxu0 0.0
    %1123 = vmatprep.subr.mxu0 0.0
    %1124 = vmatpush1.msra.mxu0 0.0
    %1125 = vmatprep.subr.mxu0 0.0
    %1126 = vmatpush1.msra.mxu0 0.0
    %1127 = vmatprep.subr.mxu0 0.0
    %1128 = vmatpush1.msra.mxu0 0.0
    %1129 = vmatprep.subr.mxu0 0.0
    %1130 = vmatpush1.msra.mxu0 0.0
    %1131 = vmatprep.subr.mxu0 0.0
    %1132 = vmatpush1.msra.mxu0 0.0
    %1133 = vmatprep.subr.mxu0 0.0
    %1134 = vmatpush1.msra.mxu0 0.0
    %1135 = vmatprep.subr.mxu0 0.0
    %1136 = vmatpush1.msra.mxu0 0.0
    %1137 = vmatprep.subr.mxu0 0.0
    %1138 = vmatpush1.msra.mxu0 0.0
    %1139 = vmatprep.subr.mxu0 0.0
    %1140 = vmatpush1.msra.mxu0 0.0
    %1141 = vmatprep.subr.mxu0 0.0
    %1142 = vmatpush1.msra.mxu0 0.0
    %1143 = vmatprep.subr.mxu0 0.0
    %1144 = vmatpush1.msra.mxu0 0.0
    %1145 = vmatprep.subr.mxu0 0.0
    %1146 = vmatpush1.msra.mxu0 0.0
    %1147 = vmatprep.subr.mxu0 0.0
    %1148 = vmatpush1.msra.mxu0 0.0
    %1149 = vmatprep.subr.mxu0 0.0
    %1150 = vmatpush1.msra.mxu0 0.0
    %1151 = vmatprep.subr.mxu0 0.0
    %1152 = vmatpush1.msra.mxu0 0.0
    %1153 = vmatprep.subr.mxu0 0.0
    %1154 = vmatpush1.msra.mxu0 0.0
    %1155 = vmatprep.subr.mxu0 0.0
    %1156 = vmatpush1.msra.mxu0 0.0
    %1157 = vmatprep.subr.mxu0 0.0
    %1158 = vmatpush1.msra.mxu0 0.0
    %1159 = vmatprep.subr.mxu0 0.0
    %1160 = vmatpush1.msra.mxu0 0.0
    %1161 = vmatprep.subr.mxu0 0.0
    %1162 = vmatpush1.msra.mxu0 0.0
    %1163 = vmatprep.subr.mxu0 0.0
    %1164 = vmatpush1.msra.mxu0 0.0
    %1165 = vmatprep.subr.mxu0 0.0
    %1166 = vmatpush1.msra.mxu0 0.0
    %1167 = vmatprep.subr.mxu0 0.0
    %1168 = vmatpush1.msra.mxu0 0.0
    %1169 = vmatprep.subr.mxu0 0.0
    %1170 = vmatpush1.msra.mxu0 0.0
    %1171 = vmatprep.subr.mxu0 0.0
    %1172 = vmatpush1.msra.mxu0 0.0
    %1173 = vmatprep.subr.mxu0 0.0
    %1174 = vmatpush1.msra.mxu0 0.0
    %1175 = vmatprep.subr.mxu0 0.0
    %1176 = vmatpush1.msra.mxu0 0.0
    %1177 = vmatprep.subr.mxu0 0.0
    %1178 = vmatpush1.msra.mxu0 0.0
    %1179 = vmatprep.mubr.f32.mxu0 0.0
    %1180 = vmatmul.mubr.f32.gmra.mrb[0].mxu0 %v1113
    %v1181 = vpop.f32.mrb[0].mxu0
    %v1182 = vadd.f32 0.0, %v1181
    %v1183 = vpop.f32.mrb[0].mxu0
    %1184 = vdwg.mxu0
    %v1185 = vadd.f32 %v1106, %v1182
    %1186 = vrot.lane.b32.xlu0 %v240, 32
    %v1187 = vpop.permute.xlu0 %1186
    %v1190 = vsel %vm251, %v954, 0
    %1192 = vmatprep.subr.mxu0 0.0
    %1193 = vmatpush1.msra.mxu0 %v1187
    %1194 = vmatprep.subr.mxu0 0.0
    %1195 = vmatpush1.msra.mxu0 0.0
    %1196 = vmatprep.subr.mxu0 0.0
    %1197 = vmatpush1.msra.mxu0 0.0
    %1198 = vmatprep.subr.mxu0 0.0
    %1199 = vmatpush1.msra.mxu0 0.0
    %1200 = vmatprep.subr.mxu0 0.0
    %1201 = vmatpush1.msra.mxu0 0.0
    %1202 = vmatprep.subr.mxu0 0.0
    %1203 = vmatpush1.msra.mxu0 0.0
    %1204 = vmatprep.subr.mxu0 0.0
    %1205 = vmatpush1.msra.mxu0 0.0
    %1206 = vmatprep.subr.mxu0 0.0
    %1207 = vmatpush1.msra.mxu0 0.0
    %1208 = vmatprep.subr.mxu0 0.0
    %1209 = vmatpush1.msra.mxu0 0.0
    %1210 = vmatprep.subr.mxu0 0.0
    %1211 = vmatpush1.msra.mxu0 0.0
    %1212 = vmatprep.subr.mxu0 0.0
    %1213 = vmatpush1.msra.mxu0 0.0
    %1214 = vmatprep.subr.mxu0 0.0
    %1215 = vmatpush1.msra.mxu0 0.0
    %1216 = vmatprep.subr.mxu0 0.0
    %1217 = vmatpush1.msra.mxu0 0.0
    %1218 = vmatprep.subr.mxu0 0.0
    %1219 = vmatpush1.msra.mxu0 0.0
    %1220 = vmatprep.subr.mxu0 0.0
    %1221 = vmatpush1.msra.mxu0 0.0
    %1222 = vmatprep.subr.mxu0 0.0
    %1223 = vmatpush1.msra.mxu0 0.0
    %1224 = vmatprep.subr.mxu0 0.0
    %1225 = vmatpush1.msra.mxu0 0.0
    %1226 = vmatprep.subr.mxu0 0.0
    %1227 = vmatpush1.msra.mxu0 0.0
    %1228 = vmatprep.subr.mxu0 0.0
    %1229 = vmatpush1.msra.mxu0 0.0
    %1230 = vmatprep.subr.mxu0 0.0
    %1231 = vmatpush1.msra.mxu0 0.0
    %1232 = vmatprep.subr.mxu0 0.0
    %1233 = vmatpush1.msra.mxu0 0.0
    %1234 = vmatprep.subr.mxu0 0.0
    %1235 = vmatpush1.msra.mxu0 0.0
    %1236 = vmatprep.subr.mxu0 0.0
    %1237 = vmatpush1.msra.mxu0 0.0
    %1238 = vmatprep.subr.mxu0 0.0
    %1239 = vmatpush1.msra.mxu0 0.0
    %1240 = vmatprep.subr.mxu0 0.0
    %1241 = vmatpush1.msra.mxu0 0.0
    %1242 = vmatprep.subr.mxu0 0.0
    %1243 = vmatpush1.msra.mxu0 0.0
    %1244 = vmatprep.subr.mxu0 0.0
    %1245 = vmatpush1.msra.mxu0 0.0
    %1246 = vmatprep.subr.mxu0 0.0
    %1247 = vmatpush1.msra.mxu0 0.0
    %1248 = vmatprep.subr.mxu0 0.0
    %1249 = vmatpush1.msra.mxu0 0.0
    %1250 = vmatprep.subr.mxu0 0.0
    %1251 = vmatpush1.msra.mxu0 0.0
    %1252 = vmatprep.subr.mxu0 0.0
    %1253 = vmatpush1.msra.mxu0 0.0
    %1254 = vmatprep.subr.mxu0 0.0
    %1255 = vmatpush1.msra.mxu0 0.0
    %1256 = vmatprep.mubr.f32.mxu0 0.0
    %1257 = vmatmul.mubr.f32.gmra.mrb[0].mxu0 %v1190
    %v1258 = vpop.f32.mrb[0].mxu0
    %v1259 = vadd.f32 0.0, %v1258
    %v1260 = vpop.f32.mrb[0].mxu0
    %1261 = vdwg.mxu0
    %v1262 = vadd.f32 %v1185, %v1259
    %1264 = vrot.lane.b32.xlu0 %v245, 96
    %v1265 = vpop.permute.xlu0 %1264
    %v1268 = vsel %vm251, %v956, 0
    %1270 = vmatprep.subr.mxu0 0.0
    %1271 = vmatpush1.msra.mxu0 %v1265
    %1272 = vmatprep.subr.mxu0 0.0
    %1273 = vmatpush1.msra.mxu0 0.0
    %1274 = vmatprep.subr.mxu0 0.0
    %1275 = vmatpush1.msra.mxu0 0.0
    %1276 = vmatprep.subr.mxu0 0.0
    %1277 = vmatpush1.msra.mxu0 0.0
    %1278 = vmatprep.subr.mxu0 0.0
    %1279 = vmatpush1.msra.mxu0 0.0
    %1280 = vmatprep.subr.mxu0 0.0
    %1281 = vmatpush1.msra.mxu0 0.0
    %1282 = vmatprep.subr.mxu0 0.0
    %1283 = vmatpush1.msra.mxu0 0.0
    %1284 = vmatprep.subr.mxu0 0.0
    %1285 = vmatpush1.msra.mxu0 0.0
    %1286 = vmatprep.subr.mxu0 0.0
    %1287 = vmatpush1.msra.mxu0 0.0
    %1288 = vmatprep.subr.mxu0 0.0
    %1289 = vmatpush1.msra.mxu0 0.0
    %1290 = vmatprep.subr.mxu0 0.0
    %1291 = vmatpush1.msra.mxu0 0.0
    %1292 = vmatprep.subr.mxu0 0.0
    %1293 = vmatpush1.msra.mxu0 0.0
    %1294 = vmatprep.subr.mxu0 0.0
    %1295 = vmatpush1.msra.mxu0 0.0
    %1296 = vmatprep.subr.mxu0 0.0
    %1297 = vmatpush1.msra.mxu0 0.0
    %1298 = vmatprep.subr.mxu0 0.0
    %1299 = vmatpush1.msra.mxu0 0.0
    %1300 = vmatprep.subr.mxu0 0.0
    %1301 = vmatpush1.msra.mxu0 0.0
    %1302 = vmatprep.subr.mxu0 0.0
    %1303 = vmatpush1.msra.mxu0 0.0
    %1304 = vmatprep.subr.mxu0 0.0
    %1305 = vmatpush1.msra.mxu0 0.0
    %1306 = vmatprep.subr.mxu0 0.0
    %1307 = vmatpush1.msra.mxu0 0.0
    %1308 = vmatprep.subr.mxu0 0.0
    %1309 = vmatpush1.msra.mxu0 0.0
    %1310 = vmatprep.subr.mxu0 0.0
    %1311 = vmatpush1.msra.mxu0 0.0
    %1312 = vmatprep.subr.mxu0 0.0
    %1313 = vmatpush1.msra.mxu0 0.0
    %1314 = vmatprep.subr.mxu0 0.0
    %1315 = vmatpush1.msra.mxu0 0.0
    %1316 = vmatprep.subr.mxu0 0.0
    %1317 = vmatpush1.msra.mxu0 0.0
    %1318 = vmatprep.subr.mxu0 0.0
    %1319 = vmatpush1.msra.mxu0 0.0
    %1320 = vmatprep.subr.mxu0 0.0
    %1321 = vmatpush1.msra.mxu0 0.0
    %1322 = vmatprep.subr.mxu0 0.0
    %1323 = vmatpush1.msra.mxu0 0.0
    %1324 = vmatprep.subr.mxu0 0.0
    %1325 = vmatpush1.msra.mxu0 0.0
    %1326 = vmatprep.subr.mxu0 0.0
    %1327 = vmatpush1.msra.mxu0 0.0
    %1328 = vmatprep.subr.mxu0 0.0
    %1329 = vmatpush1.msra.mxu0 0.0
    %1330 = vmatprep.subr.mxu0 0.0
    %1331 = vmatpush1.msra.mxu0 0.0
    %1332 = vmatprep.subr.mxu0 0.0
    %1333 = vmatpush1.msra.mxu0 0.0
    %1334 = vmatprep.mubr.f32.mxu0 0.0
    %1335 = vmatmul.mubr.f32.gmra.mrb[0].mxu0 %v1268
    %v1336 = vpop.f32.mrb[0].mxu0
    %v1337 = vadd.f32 0.0, %v1336
    %v1338 = vpop.f32.mrb[0].mxu0
    %1339 = vdwg.mxu0
    %v1341 = vsel %vm251, %v955, 0
    %1343 = vmatprep.subr.mxu0 0.0
    %1344 = vmatpush1.msra.mxu0 %v245
    %1345 = vmatprep.subr.mxu0 0.0
    %1346 = vmatpush1.msra.mxu0 0.0
    %1347 = vmatprep.subr.mxu0 0.0
    %1348 = vmatpush1.msra.mxu0 0.0
    %1349 = vmatprep.subr.mxu0 0.0
    %1350 = vmatpush1.msra.mxu0 0.0
    %1351 = vmatprep.subr.mxu0 0.0
    %1352 = vmatpush1.msra.mxu0 0.0
    %1353 = vmatprep.subr.mxu0 0.0
    %1354 = vmatpush1.msra.mxu0 0.0
    %1355 = vmatprep.subr.mxu0 0.0
    %1356 = vmatpush1.msra.mxu0 0.0
    %1357 = vmatprep.subr.mxu0 0.0
    %1358 = vmatpush1.msra.mxu0 0.0
    %1359 = vmatprep.subr.mxu0 0.0
    %1360 = vmatpush1.msra.mxu0 0.0
    %1361 = vmatprep.subr.mxu0 0.0
    %1362 = vmatpush1.msra.mxu0 0.0
    %1363 = vmatprep.subr.mxu0 0.0
    %1364 = vmatpush1.msra.mxu0 0.0
    %1365 = vmatprep.subr.mxu0 0.0
    %1366 = vmatpush1.msra.mxu0 0.0
    %1367 = vmatprep.subr.mxu0 0.0
    %1368 = vmatpush1.msra.mxu0 0.0
    %1369 = vmatprep.subr.mxu0 0.0
    %1370 = vmatpush1.msra.mxu0 0.0
    %1371 = vmatprep.subr.mxu0 0.0
    %1372 = vmatpush1.msra.mxu0 0.0
    %1373 = vmatprep.subr.mxu0 0.0
    %1374 = vmatpush1.msra.mxu0 0.0
    %1375 = vmatprep.subr.mxu0 0.0
    %1376 = vmatpush1.msra.mxu0 0.0
    %1377 = vmatprep.subr.mxu0 0.0
    %1378 = vmatpush1.msra.mxu0 0.0
    %1379 = vmatprep.subr.mxu0 0.0
    %1380 = vmatpush1.msra.mxu0 0.0
    %1381 = vmatprep.subr.mxu0 0.0
    %1382 = vmatpush1.msra.mxu0 0.0
    %1383 = vmatprep.subr.mxu0 0.0
    %1384 = vmatpush1.msra.mxu0 0.0
    %1385 = vmatprep.subr.mxu0 0.0
    %1386 = vmatpush1.msra.mxu0 0.0
    %1387 = vmatprep.subr.mxu0 0.0
    %1388 = vmatpush1.msra.mxu0 0.0
    %1389 = vmatprep.subr.mxu0 0.0
    %1390 = vmatpush1.msra.mxu0 0.0
    %1391 = vmatprep.subr.mxu0 0.0
    %1392 = vmatpush1.msra.mxu0 0.0
    %1393 = vmatprep.subr.mxu0 0.0
    %1394 = vmatpush1.msra.mxu0 0.0
    %1395 = vmatprep.subr.mxu0 0.0
    %1396 = vmatpush1.msra.mxu0 0.0
    %1397 = vmatprep.subr.mxu0 0.0
    %1398 = vmatpush1.msra.mxu0 0.0
    %1399 = vmatprep.subr.mxu0 0.0
    %1400 = vmatpush1.msra.mxu0 0.0
    %1401 = vmatprep.subr.mxu0 0.0
    %1402 = vmatpush1.msra.mxu0 0.0
    %1403 = vmatprep.subr.mxu0 0.0
    %1404 = vmatpush1.msra.mxu0 0.0
    %1405 = vmatprep.subr.mxu0 0.0
    %1406 = vmatpush1.msra.mxu0 0.0
    %1407 = vmatprep.mubr.f32.mxu0 0.0
    %1408 = vmatmul.mubr.f32.gmra.mrb[0].mxu0 %v1341
    %v1409 = vpop.f32.mrb[0].mxu0
    %v1410 = vadd.f32 %v1337, %v1409
    %v1411 = vpop.f32.mrb[0].mxu0
    %1412 = vdwg.mxu0
    %1413 = vrot.lane.b32.xlu0 %v245, 64
    %v1414 = vpop.permute.xlu0 %1413
    %v1417 = vsel %vm251, %v957, 0
    %1419 = vmatprep.subr.mxu0 0.0
    %1420 = vmatpush1.msra.mxu0 %v1414
    %1421 = vmatprep.subr.mxu0 0.0
    %1422 = vmatpush1.msra.mxu0 0.0
    %1423 = vmatprep.subr.mxu0 0.0
    %1424 = vmatpush1.msra.mxu0 0.0
    %1425 = vmatprep.subr.mxu0 0.0
    %1426 = vmatpush1.msra.mxu0 0.0
    %1427 = vmatprep.subr.mxu0 0.0
    %1428 = vmatpush1.msra.mxu0 0.0
    %1429 = vmatprep.subr.mxu0 0.0
    %1430 = vmatpush1.msra.mxu0 0.0
    %1431 = vmatprep.subr.mxu0 0.0
    %1432 = vmatpush1.msra.mxu0 0.0
    %1433 = vmatprep.subr.mxu0 0.0
    %1434 = vmatpush1.msra.mxu0 0.0
    %1435 = vmatprep.subr.mxu0 0.0
    %1436 = vmatpush1.msra.mxu0 0.0
    %1437 = vmatprep.subr.mxu0 0.0
    %1438 = vmatpush1.msra.mxu0 0.0
    %1439 = vmatprep.subr.mxu0 0.0
    %1440 = vmatpush1.msra.mxu0 0.0
    %1441 = vmatprep.subr.mxu0 0.0
    %1442 = vmatpush1.msra.mxu0 0.0
    %1443 = vmatprep.subr.mxu0 0.0
    %1444 = vmatpush1.msra.mxu0 0.0
    %1445 = vmatprep.subr.mxu0 0.0
    %1446 = vmatpush1.msra.mxu0 0.0
    %1447 = vmatprep.subr.mxu0 0.0
    %1448 = vmatpush1.msra.mxu0 0.0
    %1449 = vmatprep.subr.mxu0 0.0
    %1450 = vmatpush1.msra.mxu0 0.0
    %1451 = vmatprep.subr.mxu0 0.0
    %1452 = vmatpush1.msra.mxu0 0.0
    %1453 = vmatprep.subr.mxu0 0.0
    %1454 = vmatpush1.msra.mxu0 0.0
    %1455 = vmatprep.subr.mxu0 0.0
    %1456 = vmatpush1.msra.mxu0 0.0
    %1457 = vmatprep.subr.mxu0 0.0
    %1458 = vmatpush1.msra.mxu0 0.0
    %1459 = vmatprep.subr.mxu0 0.0
    %1460 = vmatpush1.msra.mxu0 0.0
    %1461 = vmatprep.subr.mxu0 0.0
    %1462 = vmatpush1.msra.mxu0 0.0
    %1463 = vmatprep.subr.mxu0 0.0
    %1464 = vmatpush1.msra.mxu0 0.0
    %1465 = vmatprep.subr.mxu0 0.0
    %1466 = vmatpush1.msra.mxu0 0.0
    %1467 = vmatprep.subr.mxu0 0.0
    %1468 = vmatpush1.msra.mxu0 0.0
    %1469 = vmatprep.subr.mxu0 0.0
    %1470 = vmatpush1.msra.mxu0 0.0
    %1471 = vmatprep.subr.mxu0 0.0
    %1472 = vmatpush1.msra.mxu0 0.0
    %1473 = vmatprep.subr.mxu0 0.0
    %1474 = vmatpush1.msra.mxu0 0.0
    %1475 = vmatprep.subr.mxu0 0.0
    %1476 = vmatpush1.msra.mxu0 0.0
    %1477 = vmatprep.subr.mxu0 0.0
    %1478 = vmatpush1.msra.mxu0 0.0
    %1479 = vmatprep.subr.mxu0 0.0
    %1480 = vmatpush1.msra.mxu0 0.0
    %1481 = vmatprep.subr.mxu0 0.0
    %1482 = vmatpush1.msra.mxu0 0.0
    %1483 = vmatprep.mubr.f32.mxu0 0.0
    %1484 = vmatmul.mubr.f32.gmra.mrb[0].mxu0 %v1417
    %v1485 = vpop.f32.mrb[0].mxu0
    %v1486 = vadd.f32 0.0, %v1485
    %v1487 = vpop.f32.mrb[0].mxu0
    %1488 = vdwg.mxu0
    %v1489 = vadd.f32 %v1410, %v1486
    %1490 = vrot.lane.b32.xlu0 %v245, 32
    %v1491 = vpop.permute.xlu0 %1490
    %v1494 = vsel %vm251, %v958, 0
    %1496 = vmatprep.subr.mxu0 0.0
    %1497 = vmatpush1.msra.mxu0 %v1491
    %1498 = vmatprep.subr.mxu0 0.0
    %1499 = vmatpush1.msra.mxu0 0.0
    %1500 = vmatprep.subr.mxu0 0.0
    %1501 = vmatpush1.msra.mxu0 0.0
    %1502 = vmatprep.subr.mxu0 0.0
    %1503 = vmatpush1.msra.mxu0 0.0
    %1504 = vmatprep.subr.mxu0 0.0
    %1505 = vmatpush1.msra.mxu0 0.0
    %1506 = vmatprep.subr.mxu0 0.0
    %1507 = vmatpush1.msra.mxu0 0.0
    %1508 = vmatprep.subr.mxu0 0.0
    %1509 = vmatpush1.msra.mxu0 0.0
    %1510 = vmatprep.subr.mxu0 0.0
    %1511 = vmatpush1.msra.mxu0 0.0
    %1512 = vmatprep.subr.mxu0 0.0
    %1513 = vmatpush1.msra.mxu0 0.0
    %1514 = vmatprep.subr.mxu0 0.0
    %1515 = vmatpush1.msra.mxu0 0.0
    %1516 = vmatprep.subr.mxu0 0.0
    %1517 = vmatpush1.msra.mxu0 0.0
    %1518 = vmatprep.subr.mxu0 0.0
    %1519 = vmatpush1.msra.mxu0 0.0
    %1520 = vmatprep.subr.mxu0 0.0
    %1521 = vmatpush1.msra.mxu0 0.0
    %1522 = vmatprep.subr.mxu0 0.0
    %1523 = vmatpush1.msra.mxu0 0.0
    %1524 = vmatprep.subr.mxu0 0.0
    %1525 = vmatpush1.msra.mxu0 0.0
    %1526 = vmatprep.subr.mxu0 0.0
    %1527 = vmatpush1.msra.mxu0 0.0
    %1528 = vmatprep.subr.mxu0 0.0
    %1529 = vmatpush1.msra.mxu0 0.0
    %1530 = vmatprep.subr.mxu0 0.0
    %1531 = vmatpush1.msra.mxu0 0.0
    %1532 = vmatprep.subr.mxu0 0.0
    %1533 = vmatpush1.msra.mxu0 0.0
    %1534 = vmatprep.subr.mxu0 0.0
    %1535 = vmatpush1.msra.mxu0 0.0
    %1536 = vmatprep.subr.mxu0 0.0
    %1537 = vmatpush1.msra.mxu0 0.0
    %1538 = vmatprep.subr.mxu0 0.0
    %1539 = vmatpush1.msra.mxu0 0.0
    %1540 = vmatprep.subr.mxu0 0.0
    %1541 = vmatpush1.msra.mxu0 0.0
    %1542 = vmatprep.subr.mxu0 0.0
    %1543 = vmatpush1.msra.mxu0 0.0
    %1544 = vmatprep.subr.mxu0 0.0
    %1545 = vmatpush1.msra.mxu0 0.0
    %1546 = vmatprep.subr.mxu0 0.0
    %1547 = vmatpush1.msra.mxu0 0.0
    %1548 = vmatprep.subr.mxu0 0.0
    %1549 = vmatpush1.msra.mxu0 0.0
    %1550 = vmatprep.subr.mxu0 0.0
    %1551 = vmatpush1.msra.mxu0 0.0
    %1552 = vmatprep.subr.mxu0 0.0
    %1553 = vmatpush1.msra.mxu0 0.0
    %1554 = vmatprep.subr.mxu0 0.0
    %1555 = vmatpush1.msra.mxu0 0.0
    %1556 = vmatprep.subr.mxu0 0.0
    %1557 = vmatpush1.msra.mxu0 0.0
    %1558 = vmatprep.subr.mxu0 0.0
    %1559 = vmatpush1.msra.mxu0 0.0
    %1560 = vmatprep.mubr.f32.mxu0 0.0
    %1561 = vmatmul.mubr.f32.gmra.mrb[0].mxu0 %v1494
    %v1562 = vpop.f32.mrb[0].mxu0
    %v1563 = vadd.f32 0.0, %v1562
    %v1564 = vpop.f32.mrb[0].mxu0
    %1565 = vdwg.mxu0
    %v1566 = vadd.f32 %v1489, %v1563
    %v1567 = vlaneseq
    %v1568 = vshrl.u32 %v1567, 7
    %v1569 = vsub.s32 3, %v1568
    %v1570 = vrot.slane %v68, %v1569
    %v1571 = vadd.f32 %v1262, %v1570
    %v1572 = vadd.f32 %v1566, %v1570
    %v1573 = vadd.f32 %v40, %v1571
    %v1574 = vadd.f32 %v41, %v1572
    %v1575 = vsel %vm83, %v1573, 0.0
    %1576 = vadd.xlane.f32.xlu0 %v1575
    %v1577 = vpop.xlane.xlu0 %1576
    %v1578 = vsel %vm83, %v1574, 0.0
    %1579 = vadd.xlane.f32.xlu0 %v1578
    %v1580 = vpop.xlane.xlu0 %1579
    %v1581 = vrcp.pop 32.0
    %v1582 = vmul.f32 %v1577, %v1581
    %v1583 = vmul.f32 %v1580, %v1581
    %v1584 = vsub.f32 %v1573, %v1582
    %v1585 = vsub.f32 %v1574, %v1583
    %v1586 = vmul.f32 %v1584, %v1584
    %v1587 = vmul.f32 %v1585, %v1585
    %v1588 = vsel %vm83, %v1586, 0.0
    %1589 = vadd.xlane.f32.xlu0 %v1588
    %v1590 = vpop.xlane.xlu0 %1589
    %v1591 = vsel %vm83, %v1587, 0.0
    %1592 = vadd.xlane.f32.xlu0 %v1591
    %v1593 = vpop.xlane.xlu0 %1592
    %v1594 = vmul.f32 %v1590, %v1581
    %v1595 = vmul.f32 %v1593, %v1581
    %v1596 = vadd.f32 %v1594, 1e-05
    %v1597 = vadd.f32 %v1595, 1e-05
    %v1598 = vrsqrt.pop %v1596
    %v1599 = vrsqrt.pop %v1597
    %v1600 = vmul.f32 %v1584, %v1598
    %v1601 = vmul.f32 %v1585, %v1599
    %v1602 = vlaneseq
    %v1603 = vshrl.u32 %v1602, 7
    %v1604 = vsub.s32 5, %v1603
    %v1605 = vrot.slane %v68, %v1604
    %v1606 = vmul.f32 %v1600, %v1605
    %v1607 = vmul.f32 %v1601, %v1605
    %1609 = vrot.lane.b32.xlu0 %v1605, 96
    %v1610 = vpop.permute.xlu0 %1609
    %v1612 = vadd.f32 %v1606, %v1610
    %v1613 = vadd.f32 %v1607, %v1610
    %v1614 = vadd.f32 %v1612, %v72
    %v1615 = vadd.f32 %v1613, %v74
    %1620 = vrot.lane.b32.xlu0 %v44, 64
    %v1621 = vpop.permute.xlu0 %1620
    %1622 = vrot.lane.b32.xlu0 %v45, 64
    %v1623 = vpop.permute.xlu0 %1622
    %1624 = vrot.lane.b32.xlu0 %v46, 64
    %v1625 = vpop.permute.xlu0 %1624
    %1626 = vrot.lane.b32.xlu0 %v47, 64
    %v1627 = vpop.permute.xlu0 %1626
    %1633 = vrot.lane.b32.xlu0 %v82, 64
    %v1634 = vpop.permute.xlu0 %1633
    %v1637 = vsel %vm83, %v1614, 0
    %v1640 = vsel %vm83, %v1615, 0
    %1642 = vmatprep.subr.mxu0 0.0
    %1643 = vmatpush1.msra.mxu0 %v1621
    %1644 = vmatprep.subr.mxu0 0.0
    %1645 = vmatpush1.msra.mxu0 %v1623
    %1646 = vmatprep.subr.mxu0 0.0
    %1647 = vmatpush1.msra.mxu0 %v1625
    %1648 = vmatprep.subr.mxu0 0.0
    %1649 = vmatpush1.msra.mxu0 %v1627
    %1650 = vmatprep.subr.mxu0 0.0
    %1651 = vmatpush1.msra.mxu0 0.0
    %1652 = vmatprep.subr.mxu0 0.0
    %1653 = vmatpush1.msra.mxu0 0.0
    %1654 = vmatprep.subr.mxu0 0.0
    %1655 = vmatpush1.msra.mxu0 0.0
    %1656 = vmatprep.subr.mxu0 0.0
    %1657 = vmatpush1.msra.mxu0 0.0
    %1658 = vmatprep.subr.mxu0 0.0
    %1659 = vmatpush1.msra.mxu0 0.0
    %1660 = vmatprep.subr.mxu0 0.0
    %1661 = vmatpush1.msra.mxu0 0.0
    %1662 = vmatprep.subr.mxu0 0.0
    %1663 = vmatpush1.msra.mxu0 0.0
    %1664 = vmatprep.subr.mxu0 0.0
    %1665 = vmatpush1.msra.mxu0 0.0
    %1666 = vmatprep.subr.mxu0 0.0
    %1667 = vmatpush1.msra.mxu0 0.0
    %1668 = vmatprep.subr.mxu0 0.0
    %1669 = vmatpush1.msra.mxu0 0.0
    %1670 = vmatprep.subr.mxu0 0.0
    %1671 = vmatpush1.msra.mxu0 0.0
    %1672 = vmatprep.subr.mxu0 0.0
    %1673 = vmatpush1.msra.mxu0 0.0
    %1674 = vmatprep.subr.mxu0 0.0
    %1675 = vmatpush1.msra.mxu0 0.0
    %1676 = vmatprep.subr.mxu0 0.0
    %1677 = vmatpush1.msra.mxu0 0.0
    %1678 = vmatprep.subr.mxu0 0.0
    %1679 = vmatpush1.msra.mxu0 0.0
    %1680 = vmatprep.subr.mxu0 0.0
    %1681 = vmatpush1.msra.mxu0 0.0
    %1682 = vmatprep.subr.mxu0 0.0
    %1683 = vmatpush1.msra.mxu0 0.0
    %1684 = vmatprep.subr.mxu0 0.0
    %1685 = vmatpush1.msra.mxu0 0.0
    %1686 = vmatprep.subr.mxu0 0.0
    %1687 = vmatpush1.msra.mxu0 0.0
    %1688 = vmatprep.subr.mxu0 0.0
    %1689 = vmatpush1.msra.mxu0 0.0
    %1690 = vmatprep.subr.mxu0 0.0
    %1691 = vmatpush1.msra.mxu0 0.0
    %1692 = vmatprep.subr.mxu0 0.0
    %1693 = vmatpush1.msra.mxu0 0.0
    %1694 = vmatprep.subr.mxu0 0.0
    %1695 = vmatpush1.msra.mxu0 0.0
    %1696 = vmatprep.subr.mxu0 0.0
    %1697 = vmatpush1.msra.mxu0 0.0
    %1698 = vmatprep.subr.mxu0 0.0
    %1699 = vmatpush1.msra.mxu0 0.0
    %1700 = vmatprep.subr.mxu0 0.0
    %1701 = vmatpush1.msra.mxu0 0.0
    %1702 = vmatprep.subr.mxu0 0.0
    %1703 = vmatpush1.msra.mxu0 0.0
    %1704 = vmatprep.subr.mxu0 0.0
    %1705 = vmatpush1.msra.mxu0 0.0
    %1706 = vmatprep.mubr.f32.mxu0 0.0
    %1707 = vmatmul.mubr.f32.gmra.mrb[0].mxu0 %v1637
    %v1708 = vpop.f32.mrb[0].mxu0
    %v1709 = vadd.f32 %v1634, %v1708
    %v1710 = vpop.f32.mrb[0].mxu0
    %1711 = vmatprep.mubr.f32.mxu0 0.0
    %1712 = vmatmul.mubr.f32.gmra.mrb[0].mxu0 %v1640
    %v1713 = vpop.f32.mrb[0].mxu0
    %v1714 = vadd.f32 %v1634, %v1713
    %v1715 = vpop.f32.mrb[0].mxu0
    %1716 = vdwg.mxu0
    %1719 = vrot.lane.b32.xlu0 %v42, 96
    %v1720 = vpop.permute.xlu0 %1719
    %1721 = vrot.lane.b32.xlu0 %v43, 96
    %v1722 = vpop.permute.xlu0 %1721
    %v1725 = vadd.f32 %v42, %v1720
    %v1726 = vadd.f32 %v43, %v1722
    %1729 = vrot.lane.b32.xlu0 %v77, 64
    %v1730 = vpop.permute.xlu0 %1729
    %1731 = vrot.lane.b32.xlu0 %v78, 64
    %v1732 = vpop.permute.xlu0 %1731
    %1733 = vrot.lane.b32.xlu0 %v1725, 64
    %v1734 = vpop.permute.xlu0 %1733
    %1735 = vrot.lane.b32.xlu0 %v1726, 64
    %v1736 = vpop.permute.xlu0 %1735
    %1737 = vrot.lane.b32.xlu0 %v44, 32
    %v1738 = vpop.permute.xlu0 %1737
    %1739 = vrot.lane.b32.xlu0 %v45, 32
    %v1740 = vpop.permute.xlu0 %1739
    %1741 = vrot.lane.b32.xlu0 %v46, 32
    %v1742 = vpop.permute.xlu0 %1741
    %1743 = vrot.lane.b32.xlu0 %v47, 32
    %v1744 = vpop.permute.xlu0 %1743
    %1749 = vrot.lane.b32.xlu0 %v82, 32
    %v1750 = vpop.permute.xlu0 %1749
    %v1752 = vsel %vm83, %v1730, 0
    %v1754 = vsel %vm83, %v1732, 0
    %v1756 = vsel %vm83, %v1734, 0
    %v1758 = vsel %vm83, %v1736, 0
    %1760 = vmatprep.subr.mxu0 0.0
    %1761 = vmatpush1.msra.mxu0 %v1738
    %1762 = vmatprep.subr.mxu0 0.0
    %1763 = vmatpush1.msra.mxu0 %v1740
    %1764 = vmatprep.subr.mxu0 0.0
    %1765 = vmatpush1.msra.mxu0 %v1742
    %1766 = vmatprep.subr.mxu0 0.0
    %1767 = vmatpush1.msra.mxu0 %v1744
    %1768 = vmatprep.subr.mxu0 0.0
    %1769 = vmatpush1.msra.mxu0 0.0
    %1770 = vmatprep.subr.mxu0 0.0
    %1771 = vmatpush1.msra.mxu0 0.0
    %1772 = vmatprep.subr.mxu0 0.0
    %1773 = vmatpush1.msra.mxu0 0.0
    %1774 = vmatprep.subr.mxu0 0.0
    %1775 = vmatpush1.msra.mxu0 0.0
    %1776 = vmatprep.subr.mxu0 0.0
    %1777 = vmatpush1.msra.mxu0 0.0
    %1778 = vmatprep.subr.mxu0 0.0
    %1779 = vmatpush1.msra.mxu0 0.0
    %1780 = vmatprep.subr.mxu0 0.0
    %1781 = vmatpush1.msra.mxu0 0.0
    %1782 = vmatprep.subr.mxu0 0.0
    %1783 = vmatpush1.msra.mxu0 0.0
    %1784 = vmatprep.subr.mxu0 0.0
    %1785 = vmatpush1.msra.mxu0 0.0
    %1786 = vmatprep.subr.mxu0 0.0
    %1787 = vmatpush1.msra.mxu0 0.0
    %1788 = vmatprep.subr.mxu0 0.0
    %1789 = vmatpush1.msra.mxu0 0.0
    %1790 = vmatprep.subr.mxu0 0.0
    %1791 = vmatpush1.msra.mxu0 0.0
    %1792 = vmatprep.subr.mxu0 0.0
    %1793 = vmatpush1.msra.mxu0 0.0
    %1794 = vmatprep.subr.mxu0 0.0
    %1795 = vmatpush1.msra.mxu0 0.0
    %1796 = vmatprep.subr.mxu0 0.0
    %1797 = vmatpush1.msra.mxu0 0.0
    %1798 = vmatprep.subr.mxu0 0.0
    %1799 = vmatpush1.msra.mxu0 0.0
    %1800 = vmatprep.subr.mxu0 0.0
    %1801 = vmatpush1.msra.mxu0 0.0
    %1802 = vmatprep.subr.mxu0 0.0
    %1803 = vmatpush1.msra.mxu0 0.0
    %1804 = vmatprep.subr.mxu0 0.0
    %1805 = vmatpush1.msra.mxu0 0.0
    %1806 = vmatprep.subr.mxu0 0.0
    %1807 = vmatpush1.msra.mxu0 0.0
    %1808 = vmatprep.subr.mxu0 0.0
    %1809 = vmatpush1.msra.mxu0 0.0
    %1810 = vmatprep.subr.mxu0 0.0
    %1811 = vmatpush1.msra.mxu0 0.0
    %1812 = vmatprep.subr.mxu0 0.0
    %1813 = vmatpush1.msra.mxu0 0.0
    %1814 = vmatprep.subr.mxu0 0.0
    %1815 = vmatpush1.msra.mxu0 0.0
    %1816 = vmatprep.subr.mxu0 0.0
    %1817 = vmatpush1.msra.mxu0 0.0
    %1818 = vmatprep.subr.mxu0 0.0
    %1819 = vmatpush1.msra.mxu0 0.0
    %1820 = vmatprep.subr.mxu0 0.0
    %1821 = vmatpush1.msra.mxu0 0.0
    %1822 = vmatprep.subr.mxu0 0.0
    %1823 = vmatpush1.msra.mxu0 0.0
    %1824 = vmatprep.mubr.f32.mxu0 0.0
    %1825 = vmatmul.mubr.f32.gmra.mrb[0].mxu0 %v1752
    %v1826 = vpop.f32.mrb[0].mxu0
    %v1827 = vadd.f32 %v1750, %v1826
    %v1828 = vpop.f32.mrb[0].mxu0
    %1829 = vmatprep.mubr.f32.mxu0 0.0
    %1830 = vmatmul.mubr.f32.gmra.mrb[0].mxu0 %v1754
    %v1831 = vpop.f32.mrb[0].mxu0
    %v1832 = vadd.f32 %v1750, %v1831
    %v1833 = vpop.f32.mrb[0].mxu0
    %1834 = vmatprep.mubr.f32.mxu0 0.0
    %1835 = vmatmul.mubr.f32.gmra.mrb[0].mxu0 %v1756
    %v1836 = vpop.f32.mrb[0].mxu0
    %v1837 = vadd.f32 %v1750, %v1836
    %v1838 = vpop.f32.mrb[0].mxu0
    %1839 = vmatprep.mubr.f32.mxu0 0.0
    %1840 = vmatmul.mubr.f32.gmra.mrb[0].mxu0 %v1758
    %v1841 = vpop.f32.mrb[0].mxu0
    %v1842 = vadd.f32 %v1750, %v1841
    %v1843 = vpop.f32.mrb[0].mxu0
    %1844 = vdwg.mxu0
    %v1845 = vlaneseq
    %v1846 = vshrl.u32 %v1845, 7
    %v1847 = vsub.s32 2, %v1846
    %v1848 = vrot.slane %v68, %v1847
    %1849 = vrot.lane.b32.xlu0 %v40, 64
    %v1850 = vpop.permute.xlu0 %1849
    %1851 = vrot.lane.b32.xlu0 %v41, 64
    %v1852 = vpop.permute.xlu0 %1851
    %1853 = vrot.lane.b32.xlu0 %v42, 64
    %v1854 = vpop.permute.xlu0 %1853
    %1855 = vrot.lane.b32.xlu0 %v43, 64
    %v1856 = vpop.permute.xlu0 %1855
    %v1857 = vsel %vm83, %v1850, 0
    %v1859 = vsel %vm83, %v1852, 0
    %v1861 = vsel %vm83, %v1854, 0
    %v1863 = vsel %vm83, %v1856, 0
    %1865 = vmatprep.subr.mxu0 0.0
    %1866 = vmatpush1.msra.mxu0 %v52
    %1867 = vmatprep.subr.mxu0 0.0
    %1868 = vmatpush1.msra.mxu0 %v53
    %1869 = vmatprep.subr.mxu0 0.0
    %1870 = vmatpush1.msra.mxu0 %v54
    %1871 = vmatprep.subr.mxu0 0.0
    %1872 = vmatpush1.msra.mxu0 %v55
    %1873 = vmatprep.subr.mxu0 0.0
    %1874 = vmatpush1.msra.mxu0 0.0
    %1875 = vmatprep.subr.mxu0 0.0
    %1876 = vmatpush1.msra.mxu0 0.0
    %1877 = vmatprep.subr.mxu0 0.0
    %1878 = vmatpush1.msra.mxu0 0.0
    %1879 = vmatprep.subr.mxu0 0.0
    %1880 = vmatpush1.msra.mxu0 0.0
    %1881 = vmatprep.subr.mxu0 0.0
    %1882 = vmatpush1.msra.mxu0 0.0
    %1883 = vmatprep.subr.mxu0 0.0
    %1884 = vmatpush1.msra.mxu0 0.0
    %1885 = vmatprep.subr.mxu0 0.0
    %1886 = vmatpush1.msra.mxu0 0.0
    %1887 = vmatprep.subr.mxu0 0.0
    %1888 = vmatpush1.msra.mxu0 0.0
    %1889 = vmatprep.subr.mxu0 0.0
    %1890 = vmatpush1.msra.mxu0 0.0
    %1891 = vmatprep.subr.mxu0 0.0
    %1892 = vmatpush1.msra.mxu0 0.0
    %1893 = vmatprep.subr.mxu0 0.0
    %1894 = vmatpush1.msra.mxu0 0.0
    %1895 = vmatprep.subr.mxu0 0.0
    %1896 = vmatpush1.msra.mxu0 0.0
    %1897 = vmatprep.subr.mxu0 0.0
    %1898 = vmatpush1.msra.mxu0 0.0
    %1899 = vmatprep.subr.mxu0 0.0
    %1900 = vmatpush1.msra.mxu0 0.0
    %1901 = vmatprep.subr.mxu0 0.0
    %1902 = vmatpush1.msra.mxu0 0.0
    %1903 = vmatprep.subr.mxu0 0.0
    %1904 = vmatpush1.msra.mxu0 0.0
    %1905 = vmatprep.subr.mxu0 0.0
    %1906 = vmatpush1.msra.mxu0 0.0
    %1907 = vmatprep.subr.mxu0 0.0
    %1908 = vmatpush1.msra.mxu0 0.0
    %1909 = vmatprep.subr.mxu0 0.0
    %1910 = vmatpush1.msra.mxu0 0.0
    %1911 = vmatprep.subr.mxu0 0.0
    %1912 = vmatpush1.msra.mxu0 0.0
    %1913 = vmatprep.subr.mxu0 0.0
    %1914 = vmatpush1.msra.mxu0 0.0
    %1915 = vmatprep.subr.mxu0 0.0
    %1916 = vmatpush1.msra.mxu0 0.0
    %1917 = vmatprep.subr.mxu0 0.0
    %1918 = vmatpush1.msra.mxu0 0.0
    %1919 = vmatprep.subr.mxu0 0.0
    %1920 = vmatpush1.msra.mxu0 0.0
    %1921 = vmatprep.subr.mxu0 0.0
    %1922 = vmatpush1.msra.mxu0 0.0
    %1923 = vmatprep.subr.mxu0 0.0
    %1924 = vmatpush1.msra.mxu0 0.0
    %1925 = vmatprep.subr.mxu0 0.0
    %1926 = vmatpush1.msra.mxu0 0.0
    %1927 = vmatprep.subr.mxu0 0.0
    %1928 = vmatpush1.msra.mxu0 0.0
    %1929 = vmatprep.mubr.f32.mxu0 0.0
    %1930 = vmatmul.mubr.f32.gmra.mrb[0].mxu0 %v1857
    %v1931 = vpop.f32.mrb[0].mxu0
    %v1932 = vadd.f32 %v1848, %v1931
    %v1933 = vpop.f32.mrb[0].mxu0
    %1934 = vmatprep.mubr.f32.mxu0 0.0
    %1935 = vmatmul.mubr.f32.gmra.mrb[0].mxu0 %v1859
    %v1936 = vpop.f32.mrb[0].mxu0
    %v1937 = vadd.f32 %v1848, %v1936
    %v1938 = vpop.f32.mrb[0].mxu0
    %1939 = vmatprep.mubr.f32.mxu0 0.0
    %1940 = vmatmul.mubr.f32.gmra.mrb[0].mxu0 %v1861
    %v1941 = vpop.f32.mrb[0].mxu0
    %v1942 = vadd.f32 %v1848, %v1941
    %v1943 = vpop.f32.mrb[0].mxu0
    %1944 = vmatprep.mubr.f32.mxu0 0.0
    %1945 = vmatmul.mubr.f32.gmra.mrb[0].mxu0 %v1863
    %v1946 = vpop.f32.mrb[0].mxu0
    %v1947 = vadd.f32 %v1848, %v1946
    %v1948 = vpop.f32.mrb[0].mxu0
    %1949 = vdwg.mxu0
    %v1951 = vsel %vm251, %v1709, 0
    %v1954 = vsel %vm251, %v1827, 0
    %v1957 = vsel %vm251, %v1832, 0
    %1959 = vmatprep.subr.mxu0 0.0
    %1960 = vmatpush1.xpose.msra.mxu0 %v1954
    %1961 = vmatprep.subr.mxu0 0.0
    %1962 = vmatpush1.xpose.msra.mxu0 %v1957
    %1963 = vmatprep.subr.mxu0 0.0
    %1964 = vmatpush1.xpose.msra.mxu0 0.0
    %1965 = vmatprep.subr.mxu0 0.0
    %1966 = vmatpush1.xpose.msra.mxu0 0.0
    %1967 = vmatprep.subr.mxu0 0.0
    %1968 = vmatpush1.xpose.msra.mxu0 0.0
    %1969 = vmatprep.subr.mxu0 0.0
    %1970 = vmatpush1.xpose.msra.mxu0 0.0
    %1971 = vmatprep.subr.mxu0 0.0
    %1972 = vmatpush1.xpose.msra.mxu0 0.0
    %1973 = vmatprep.subr.mxu0 0.0
    %1974 = vmatpush1.xpose.msra.mxu0 0.0
    %1975 = vmatprep.subr.mxu0 0.0
    %1976 = vmatpush1.xpose.msra.mxu0 0.0
    %1977 = vmatprep.subr.mxu0 0.0
    %1978 = vmatpush1.xpose.msra.mxu0 0.0
    %1979 = vmatprep.subr.mxu0 0.0
    %1980 = vmatpush1.xpose.msra.mxu0 0.0
    %1981 = vmatprep.subr.mxu0 0.0
    %1982 = vmatpush1.xpose.msra.mxu0 0.0
    %1983 = vmatprep.subr.mxu0 0.0
    %1984 = vmatpush1.xpose.msra.mxu0 0.0
    %1985 = vmatprep.subr.mxu0 0.0
    %1986 = vmatpush1.xpose.msra.mxu0 0.0
    %1987 = vmatprep.subr.mxu0 0.0
    %1988 = vmatpush1.xpose.msra.mxu0 0.0
    %1989 = vmatprep.subr.mxu0 0.0
    %1990 = vmatpush1.xpose.msra.mxu0 0.0
    %1991 = vmatprep.subr.mxu0 0.0
    %1992 = vmatpush1.xpose.msra.mxu0 0.0
    %1993 = vmatprep.subr.mxu0 0.0
    %1994 = vmatpush1.xpose.msra.mxu0 0.0
    %1995 = vmatprep.subr.mxu0 0.0
    %1996 = vmatpush1.xpose.msra.mxu0 0.0
    %1997 = vmatprep.subr.mxu0 0.0
    %1998 = vmatpush1.xpose.msra.mxu0 0.0
    %1999 = vmatprep.subr.mxu0 0.0
    %2000 = vmatpush1.xpose.msra.mxu0 0.0
    %2001 = vmatprep.subr.mxu0 0.0
    %2002 = vmatpush1.xpose.msra.mxu0 0.0
    %2003 = vmatprep.subr.mxu0 0.0
    %2004 = vmatpush1.xpose.msra.mxu0 0.0
    %2005 = vmatprep.subr.mxu0 0.0
    %2006 = vmatpush1.xpose.msra.mxu0 0.0
    %2007 = vmatprep.subr.mxu0 0.0
    %2008 = vmatpush1.xpose.msra.mxu0 0.0
    %2009 = vmatprep.subr.mxu0 0.0
    %2010 = vmatpush1.xpose.msra.mxu0 0.0
    %2011 = vmatprep.subr.mxu0 0.0
    %2012 = vmatpush1.xpose.msra.mxu0 0.0
    %2013 = vmatprep.subr.mxu0 0.0
    %2014 = vmatpush1.xpose.msra.mxu0 0.0
    %2015 = vmatprep.subr.mxu0 0.0
    %2016 = vmatpush1.xpose.msra.mxu0 0.0
    %2017 = vmatprep.subr.mxu0 0.0
    %2018 = vmatpush1.xpose.msra.mxu0 0.0
    %2019 = vmatprep.subr.mxu0 0.0
    %2020 = vmatpush1.xpose.msra.mxu0 0.0
    %2021 = vmatprep.subr.mxu0 0.0
    %2022 = vmatpush1.xpose.msra.mxu0 0.0
    %2023 = vmatprep.mubr.f32.mxu0 0.0
    %2024 = vmatmul.mubr.f32.gmra.mrb[0].mxu0 %v1951
    %v2025 = vpop.f32.mrb[0].mxu0
    %v2026 = vadd.f32 0.0, %v2025
    %v2027 = vpop.f32.mrb[0].mxu0
    %2028 = vdwg.mxu0
    %2029 = vrot.lane.b32.xlu0 %v1709, 120
    %v2030 = vpop.permute.xlu0 %2029
    %2031 = vrot.lane.b32.xlu0 %v1827, 120
    %v2032 = vpop.permute.xlu0 %2031
    %2033 = vrot.lane.b32.xlu0 %v1832, 120
    %v2034 = vpop.permute.xlu0 %2033
    %v2035 = vsel %vm251, %v2030, 0
    %v2037 = vsel %vm251, %v2032, 0
    %v2039 = vsel %vm251, %v2034, 0
    %2041 = vmatprep.subr.mxu0 0.0
    %2042 = vmatpush1.xpose.msra.mxu0 %v2037
    %2043 = vmatprep.subr.mxu0 0.0
    %2044 = vmatpush1.xpose.msra.mxu0 %v2039
    %2045 = vmatprep.subr.mxu0 0.0
    %2046 = vmatpush1.xpose.msra.mxu0 0.0
    %2047 = vmatprep.subr.mxu0 0.0
    %2048 = vmatpush1.xpose.msra.mxu0 0.0
    %2049 = vmatprep.subr.mxu0 0.0
    %2050 = vmatpush1.xpose.msra.mxu0 0.0
    %2051 = vmatprep.subr.mxu0 0.0
    %2052 = vmatpush1.xpose.msra.mxu0 0.0
    %2053 = vmatprep.subr.mxu0 0.0
    %2054 = vmatpush1.xpose.msra.mxu0 0.0
    %2055 = vmatprep.subr.mxu0 0.0
    %2056 = vmatpush1.xpose.msra.mxu0 0.0
    %2057 = vmatprep.subr.mxu0 0.0
    %2058 = vmatpush1.xpose.msra.mxu0 0.0
    %2059 = vmatprep.subr.mxu0 0.0
    %2060 = vmatpush1.xpose.msra.mxu0 0.0
    %2061 = vmatprep.subr.mxu0 0.0
    %2062 = vmatpush1.xpose.msra.mxu0 0.0
    %2063 = vmatprep.subr.mxu0 0.0
    %2064 = vmatpush1.xpose.msra.mxu0 0.0
    %2065 = vmatprep.subr.mxu0 0.0
    %2066 = vmatpush1.xpose.msra.mxu0 0.0
    %2067 = vmatprep.subr.mxu0 0.0
    %2068 = vmatpush1.xpose.msra.mxu0 0.0
    %2069 = vmatprep.subr.mxu0 0.0
    %2070 = vmatpush1.xpose.msra.mxu0 0.0
    %2071 = vmatprep.subr.mxu0 0.0
    %2072 = vmatpush1.xpose.msra.mxu0 0.0
    %2073 = vmatprep.subr.mxu0 0.0
    %2074 = vmatpush1.xpose.msra.mxu0 0.0
    %2075 = vmatprep.subr.mxu0 0.0
    %2076 = vmatpush1.xpose.msra.mxu0 0.0
    %2077 = vmatprep.subr.mxu0 0.0
    %2078 = vmatpush1.xpose.msra.mxu0 0.0
    %2079 = vmatprep.subr.mxu0 0.0
    %2080 = vmatpush1.xpose.msra.mxu0 0.0
    %2081 = vmatprep.subr.mxu0 0.0
    %2082 = vmatpush1.xpose.msra.mxu0 0.0
    %2083 = vmatprep.subr.mxu0 0.0
    %2084 = vmatpush1.xpose.msra.mxu0 0.0
    %2085 = vmatprep.subr.mxu0 0.0
    %2086 = vmatpush1.xpose.msra.mxu0 0.0
    %2087 = vmatprep.subr.mxu0 0.0
    %2088 = vmatpush1.xpose.msra.mxu0 0.0
    %2089 = vmatprep.subr.mxu0 0.0
    %2090 = vmatpush1.xpose.msra.mxu0 0.0
    %2091 = vmatprep.subr.mxu0 0.0
    %2092 = vmatpush1.xpose.msra.mxu0 0.0
    %2093 = vmatprep.subr.mxu0 0.0
    %2094 = vmatpush1.xpose.msra.mxu0 0.0
    %2095 = vmatprep.subr.mxu0 0.0
    %2096 = vmatpush1.xpose.msra.mxu0 0.0
    %2097 = vmatprep.subr.mxu0 0.0
    %2098 = vmatpush1.xpose.msra.mxu0 0.0
    %2099 = vmatprep.subr.mxu0 0.0
    %2100 = vmatpush1.xpose.msra.mxu0 0.0
    %2101 = vmatprep.subr.mxu0 0.0
    %2102 = vmatpush1.xpose.msra.mxu0 0.0
    %2103 = vmatprep.subr.mxu0 0.0
    %2104 = vmatpush1.xpose.msra.mxu0 0.0
    %2105 = vmatprep.mubr.f32.mxu0 0.0
    %2106 = vmatmul.mubr.f32.gmra.mrb[0].mxu0 %v2035
    %v2107 = vpop.f32.mrb[0].mxu0
    %v2108 = vadd.f32 0.0, %v2107
    %v2109 = vpop.f32.mrb[0].mxu0
    %2110 = vdwg.mxu0
    %2111 = vrot.lane.b32.xlu0 %v1709, 112
    %v2112 = vpop.permute.xlu0 %2111
    %2113 = vrot.lane.b32.xlu0 %v1827, 112
    %v2114 = vpop.permute.xlu0 %2113
    %2115 = vrot.lane.b32.xlu0 %v1832, 112
    %v2116 = vpop.permute.xlu0 %2115
    %v2117 = vsel %vm251, %v2112, 0
    %v2119 = vsel %vm251, %v2114, 0
    %v2121 = vsel %vm251, %v2116, 0
    %2123 = vmatprep.subr.mxu0 0.0
    %2124 = vmatpush1.xpose.msra.mxu0 %v2119
    %2125 = vmatprep.subr.mxu0 0.0
    %2126 = vmatpush1.xpose.msra.mxu0 %v2121
    %2127 = vmatprep.subr.mxu0 0.0
    %2128 = vmatpush1.xpose.msra.mxu0 0.0
    %2129 = vmatprep.subr.mxu0 0.0
    %2130 = vmatpush1.xpose.msra.mxu0 0.0
    %2131 = vmatprep.subr.mxu0 0.0
    %2132 = vmatpush1.xpose.msra.mxu0 0.0
    %2133 = vmatprep.subr.mxu0 0.0
    %2134 = vmatpush1.xpose.msra.mxu0 0.0
    %2135 = vmatprep.subr.mxu0 0.0
    %2136 = vmatpush1.xpose.msra.mxu0 0.0
    %2137 = vmatprep.subr.mxu0 0.0
    %2138 = vmatpush1.xpose.msra.mxu0 0.0
    %2139 = vmatprep.subr.mxu0 0.0
    %2140 = vmatpush1.xpose.msra.mxu0 0.0
    %2141 = vmatprep.subr.mxu0 0.0
    %2142 = vmatpush1.xpose.msra.mxu0 0.0
    %2143 = vmatprep.subr.mxu0 0.0
    %2144 = vmatpush1.xpose.msra.mxu0 0.0
    %2145 = vmatprep.subr.mxu0 0.0
    %2146 = vmatpush1.xpose.msra.mxu0 0.0
    %2147 = vmatprep.subr.mxu0 0.0
    %2148 = vmatpush1.xpose.msra.mxu0 0.0
    %2149 = vmatprep.subr.mxu0 0.0
    %2150 = vmatpush1.xpose.msra.mxu0 0.0
    %2151 = vmatprep.subr.mxu0 0.0
    %2152 = vmatpush1.xpose.msra.mxu0 0.0
    %2153 = vmatprep.subr.mxu0 0.0
    %2154 = vmatpush1.xpose.msra.mxu0 0.0
    %2155 = vmatprep.subr.mxu0 0.0
    %2156 = vmatpush1.xpose.msra.mxu0 0.0
    %2157 = vmatprep.subr.mxu0 0.0
    %2158 = vmatpush1.xpose.msra.mxu0 0.0
    %2159 = vmatprep.subr.mxu0 0.0
    %2160 = vmatpush1.xpose.msra.mxu0 0.0
    %2161 = vmatprep.subr.mxu0 0.0
    %2162 = vmatpush1.xpose.msra.mxu0 0.0
    %2163 = vmatprep.subr.mxu0 0.0
    %2164 = vmatpush1.xpose.msra.mxu0 0.0
    %2165 = vmatprep.subr.mxu0 0.0
    %2166 = vmatpush1.xpose.msra.mxu0 0.0
    %2167 = vmatprep.subr.mxu0 0.0
    %2168 = vmatpush1.xpose.msra.mxu0 0.0
    %2169 = vmatprep.subr.mxu0 0.0
    %2170 = vmatpush1.xpose.msra.mxu0 0.0
    %2171 = vmatprep.subr.mxu0 0.0
    %2172 = vmatpush1.xpose.msra.mxu0 0.0
    %2173 = vmatprep.subr.mxu0 0.0
    %2174 = vmatpush1.xpose.msra.mxu0 0.0
    %2175 = vmatprep.subr.mxu0 0.0
    %2176 = vmatpush1.xpose.msra.mxu0 0.0
    %2177 = vmatprep.subr.mxu0 0.0
    %2178 = vmatpush1.xpose.msra.mxu0 0.0
    %2179 = vmatprep.subr.mxu0 0.0
    %2180 = vmatpush1.xpose.msra.mxu0 0.0
    %2181 = vmatprep.subr.mxu0 0.0
    %2182 = vmatpush1.xpose.msra.mxu0 0.0
    %2183 = vmatprep.subr.mxu0 0.0
    %2184 = vmatpush1.xpose.msra.mxu0 0.0
    %2185 = vmatprep.subr.mxu0 0.0
    %2186 = vmatpush1.xpose.msra.mxu0 0.0
    %2187 = vmatprep.mubr.f32.mxu0 0.0
    %2188 = vmatmul.mubr.f32.gmra.mrb[0].mxu0 %v2117
    %v2189 = vpop.f32.mrb[0].mxu0
    %v2190 = vadd.f32 0.0, %v2189
    %v2191 = vpop.f32.mrb[0].mxu0
    %2192 = vdwg.mxu0
    %2193 = vrot.lane.b32.xlu0 %v1709, 104
    %v2194 = vpop.permute.xlu0 %2193
    %2195 = vrot.lane.b32.xlu0 %v1827, 104
    %v2196 = vpop.permute.xlu0 %2195
    %2197 = vrot.lane.b32.xlu0 %v1832, 104
    %v2198 = vpop.permute.xlu0 %2197
    %v2199 = vsel %vm251, %v2194, 0
    %v2201 = vsel %vm251, %v2196, 0
    %v2203 = vsel %vm251, %v2198, 0
    %2205 = vmatprep.subr.mxu0 0.0
    %2206 = vmatpush1.xpose.msra.mxu0 %v2201
    %2207 = vmatprep.subr.mxu0 0.0
    %2208 = vmatpush1.xpose.msra.mxu0 %v2203
    %2209 = vmatprep.subr.mxu0 0.0
    %2210 = vmatpush1.xpose.msra.mxu0 0.0
    %2211 = vmatprep.subr.mxu0 0.0
    %2212 = vmatpush1.xpose.msra.mxu0 0.0
    %2213 = vmatprep.subr.mxu0 0.0
    %2214 = vmatpush1.xpose.msra.mxu0 0.0
    %2215 = vmatprep.subr.mxu0 0.0
    %2216 = vmatpush1.xpose.msra.mxu0 0.0
    %2217 = vmatprep.subr.mxu0 0.0
    %2218 = vmatpush1.xpose.msra.mxu0 0.0
    %2219 = vmatprep.subr.mxu0 0.0
    %2220 = vmatpush1.xpose.msra.mxu0 0.0
    %2221 = vmatprep.subr.mxu0 0.0
    %2222 = vmatpush1.xpose.msra.mxu0 0.0
    %2223 = vmatprep.subr.mxu0 0.0
    %2224 = vmatpush1.xpose.msra.mxu0 0.0
    %2225 = vmatprep.subr.mxu0 0.0
    %2226 = vmatpush1.xpose.msra.mxu0 0.0
    %2227 = vmatprep.subr.mxu0 0.0
    %2228 = vmatpush1.xpose.msra.mxu0 0.0
    %2229 = vmatprep.subr.mxu0 0.0
    %2230 = vmatpush1.xpose.msra.mxu0 0.0
    %2231 = vmatprep.subr.mxu0 0.0
    %2232 = vmatpush1.xpose.msra.mxu0 0.0
    %2233 = vmatprep.subr.mxu0 0.0
    %2234 = vmatpush1.xpose.msra.mxu0 0.0
    %2235 = vmatprep.subr.mxu0 0.0
    %2236 = vmatpush1.xpose.msra.mxu0 0.0
    %2237 = vmatprep.subr.mxu0 0.0
    %2238 = vmatpush1.xpose.msra.mxu0 0.0
    %2239 = vmatprep.subr.mxu0 0.0
    %2240 = vmatpush1.xpose.msra.mxu0 0.0
    %2241 = vmatprep.subr.mxu0 0.0
    %2242 = vmatpush1.xpose.msra.mxu0 0.0
    %2243 = vmatprep.subr.mxu0 0.0
    %2244 = vmatpush1.xpose.msra.mxu0 0.0
    %2245 = vmatprep.subr.mxu0 0.0
    %2246 = vmatpush1.xpose.msra.mxu0 0.0
    %2247 = vmatprep.subr.mxu0 0.0
    %2248 = vmatpush1.xpose.msra.mxu0 0.0
    %2249 = vmatprep.subr.mxu0 0.0
    %2250 = vmatpush1.xpose.msra.mxu0 0.0
    %2251 = vmatprep.subr.mxu0 0.0
    %2252 = vmatpush1.xpose.msra.mxu0 0.0
    %2253 = vmatprep.subr.mxu0 0.0
    %2254 = vmatpush1.xpose.msra.mxu0 0.0
    %2255 = vmatprep.subr.mxu0 0.0
    %2256 = vmatpush1.xpose.msra.mxu0 0.0
    %2257 = vmatprep.subr.mxu0 0.0
    %2258 = vmatpush1.xpose.msra.mxu0 0.0
    %2259 = vmatprep.subr.mxu0 0.0
    %2260 = vmatpush1.xpose.msra.mxu0 0.0
    %2261 = vmatprep.subr.mxu0 0.0
    %2262 = vmatpush1.xpose.msra.mxu0 0.0
    %2263 = vmatprep.subr.mxu0 0.0
    %2264 = vmatpush1.xpose.msra.mxu0 0.0
    %2265 = vmatprep.subr.mxu0 0.0
    %2266 = vmatpush1.xpose.msra.mxu0 0.0
    %2267 = vmatprep.subr.mxu0 0.0
    %2268 = vmatpush1.xpose.msra.mxu0 0.0
    %2269 = vmatprep.mubr.f32.mxu0 0.0
    %2270 = vmatmul.mubr.f32.gmra.mrb[0].mxu0 %v2199
    %v2271 = vpop.f32.mrb[0].mxu0
    %v2272 = vadd.f32 0.0, %v2271
    %v2273 = vpop.f32.mrb[0].mxu0
    %2274 = vdwg.mxu0
    %v2276 = vsel %vm251, %v1714, 0
    %v2279 = vsel %vm251, %v1837, 0
    %v2282 = vsel %vm251, %v1842, 0
    %2284 = vmatprep.subr.mxu0 0.0
    %2285 = vmatpush1.xpose.msra.mxu0 %v2279
    %2286 = vmatprep.subr.mxu0 0.0
    %2287 = vmatpush1.xpose.msra.mxu0 %v2282
    %2288 = vmatprep.subr.mxu0 0.0
    %2289 = vmatpush1.xpose.msra.mxu0 0.0
    %2290 = vmatprep.subr.mxu0 0.0
    %2291 = vmatpush1.xpose.msra.mxu0 0.0
    %2292 = vmatprep.subr.mxu0 0.0
    %2293 = vmatpush1.xpose.msra.mxu0 0.0
    %2294 = vmatprep.subr.mxu0 0.0
    %2295 = vmatpush1.xpose.msra.mxu0 0.0
    %2296 = vmatprep.subr.mxu0 0.0
    %2297 = vmatpush1.xpose.msra.mxu0 0.0
    %2298 = vmatprep.subr.mxu0 0.0
    %2299 = vmatpush1.xpose.msra.mxu0 0.0
    %2300 = vmatprep.subr.mxu0 0.0
    %2301 = vmatpush1.xpose.msra.mxu0 0.0
    %2302 = vmatprep.subr.mxu0 0.0
    %2303 = vmatpush1.xpose.msra.mxu0 0.0
    %2304 = vmatprep.subr.mxu0 0.0
    %2305 = vmatpush1.xpose.msra.mxu0 0.0
    %2306 = vmatprep.subr.mxu0 0.0
    %2307 = vmatpush1.xpose.msra.mxu0 0.0
    %2308 = vmatprep.subr.mxu0 0.0
    %2309 = vmatpush1.xpose.msra.mxu0 0.0
    %2310 = vmatprep.subr.mxu0 0.0
    %2311 = vmatpush1.xpose.msra.mxu0 0.0
    %2312 = vmatprep.subr.mxu0 0.0
    %2313 = vmatpush1.xpose.msra.mxu0 0.0
    %2314 = vmatprep.subr.mxu0 0.0
    %2315 = vmatpush1.xpose.msra.mxu0 0.0
    %2316 = vmatprep.subr.mxu0 0.0
    %2317 = vmatpush1.xpose.msra.mxu0 0.0
    %2318 = vmatprep.subr.mxu0 0.0
    %2319 = vmatpush1.xpose.msra.mxu0 0.0
    %2320 = vmatprep.subr.mxu0 0.0
    %2321 = vmatpush1.xpose.msra.mxu0 0.0
    %2322 = vmatprep.subr.mxu0 0.0
    %2323 = vmatpush1.xpose.msra.mxu0 0.0
    %2324 = vmatprep.subr.mxu0 0.0
    %2325 = vmatpush1.xpose.msra.mxu0 0.0
    %2326 = vmatprep.subr.mxu0 0.0
    %2327 = vmatpush1.xpose.msra.mxu0 0.0
    %2328 = vmatprep.subr.mxu0 0.0
    %2329 = vmatpush1.xpose.msra.mxu0 0.0
    %2330 = vmatprep.subr.mxu0 0.0
    %2331 = vmatpush1.xpose.msra.mxu0 0.0
    %2332 = vmatprep.subr.mxu0 0.0
    %2333 = vmatpush1.xpose.msra.mxu0 0.0
    %2334 = vmatprep.subr.mxu0 0.0
    %2335 = vmatpush1.xpose.msra.mxu0 0.0
    %2336 = vmatprep.subr.mxu0 0.0
    %2337 = vmatpush1.xpose.msra.mxu0 0.0
    %2338 = vmatprep.subr.mxu0 0.0
    %2339 = vmatpush1.xpose.msra.mxu0 0.0
    %2340 = vmatprep.subr.mxu0 0.0
    %2341 = vmatpush1.xpose.msra.mxu0 0.0
    %2342 = vmatprep.subr.mxu0 0.0
    %2343 = vmatpush1.xpose.msra.mxu0 0.0
    %2344 = vmatprep.subr.mxu0 0.0
    %2345 = vmatpush1.xpose.msra.mxu0 0.0
    %2346 = vmatprep.subr.mxu0 0.0
    %2347 = vmatpush1.xpose.msra.mxu0 0.0
    %2348 = vmatprep.mubr.f32.mxu0 0.0
    %2349 = vmatmul.mubr.f32.gmra.mrb[0].mxu0 %v2276
    %v2350 = vpop.f32.mrb[0].mxu0
    %v2351 = vadd.f32 0.0, %v2350
    %v2352 = vpop.f32.mrb[0].mxu0
    %2353 = vdwg.mxu0
    %2354 = vrot.lane.b32.xlu0 %v1714, 120
    %v2355 = vpop.permute.xlu0 %2354
    %2356 = vrot.lane.b32.xlu0 %v1837, 120
    %v2357 = vpop.permute.xlu0 %2356
    %2358 = vrot.lane.b32.xlu0 %v1842, 120
    %v2359 = vpop.permute.xlu0 %2358
    %v2360 = vsel %vm251, %v2355, 0
    %v2362 = vsel %vm251, %v2357, 0
    %v2364 = vsel %vm251, %v2359, 0
    %2366 = vmatprep.subr.mxu0 0.0
    %2367 = vmatpush1.xpose.msra.mxu0 %v2362
    %2368 = vmatprep.subr.mxu0 0.0
    %2369 = vmatpush1.xpose.msra.mxu0 %v2364
    %2370 = vmatprep.subr.mxu0 0.0
    %2371 = vmatpush1.xpose.msra.mxu0 0.0
    %2372 = vmatprep.subr.mxu0 0.0
    %2373 = vmatpush1.xpose.msra.mxu0 0.0
    %2374 = vmatprep.subr.mxu0 0.0
    %2375 = vmatpush1.xpose.msra.mxu0 0.0
    %2376 = vmatprep.subr.mxu0 0.0
    %2377 = vmatpush1.xpose.msra.mxu0 0.0
    %2378 = vmatprep.subr.mxu0 0.0
    %2379 = vmatpush1.xpose.msra.mxu0 0.0
    %2380 = vmatprep.subr.mxu0 0.0
    %2381 = vmatpush1.xpose.msra.mxu0 0.0
    %2382 = vmatprep.subr.mxu0 0.0
    %2383 = vmatpush1.xpose.msra.mxu0 0.0
    %2384 = vmatprep.subr.mxu0 0.0
    %2385 = vmatpush1.xpose.msra.mxu0 0.0
    %2386 = vmatprep.subr.mxu0 0.0
    %2387 = vmatpush1.xpose.msra.mxu0 0.0
    %2388 = vmatprep.subr.mxu0 0.0
    %2389 = vmatpush1.xpose.msra.mxu0 0.0
    %2390 = vmatprep.subr.mxu0 0.0
    %2391 = vmatpush1.xpose.msra.mxu0 0.0
    %2392 = vmatprep.subr.mxu0 0.0
    %2393 = vmatpush1.xpose.msra.mxu0 0.0
    %2394 = vmatprep.subr.mxu0 0.0
    %2395 = vmatpush1.xpose.msra.mxu0 0.0
    %2396 = vmatprep.subr.mxu0 0.0
    %2397 = vmatpush1.xpose.msra.mxu0 0.0
    %2398 = vmatprep.subr.mxu0 0.0
    %2399 = vmatpush1.xpose.msra.mxu0 0.0
    %2400 = vmatprep.subr.mxu0 0.0
    %2401 = vmatpush1.xpose.msra.mxu0 0.0
    %2402 = vmatprep.subr.mxu0 0.0
    %2403 = vmatpush1.xpose.msra.mxu0 0.0
    %2404 = vmatprep.subr.mxu0 0.0
    %2405 = vmatpush1.xpose.msra.mxu0 0.0
    %2406 = vmatprep.subr.mxu0 0.0
    %2407 = vmatpush1.xpose.msra.mxu0 0.0
    %2408 = vmatprep.subr.mxu0 0.0
    %2409 = vmatpush1.xpose.msra.mxu0 0.0
    %2410 = vmatprep.subr.mxu0 0.0
    %2411 = vmatpush1.xpose.msra.mxu0 0.0
    %2412 = vmatprep.subr.mxu0 0.0
    %2413 = vmatpush1.xpose.msra.mxu0 0.0
    %2414 = vmatprep.subr.mxu0 0.0
    %2415 = vmatpush1.xpose.msra.mxu0 0.0
    %2416 = vmatprep.subr.mxu0 0.0
    %2417 = vmatpush1.xpose.msra.mxu0 0.0
    %2418 = vmatprep.subr.mxu0 0.0
    %2419 = vmatpush1.xpose.msra.mxu0 0.0
    %2420 = vmatprep.subr.mxu0 0.0
    %2421 = vmatpush1.xpose.msra.mxu0 0.0
    %2422 = vmatprep.subr.mxu0 0.0
    %2423 = vmatpush1.xpose.msra.mxu0 0.0
    %2424 = vmatprep.subr.mxu0 0.0
    %2425 = vmatpush1.xpose.msra.mxu0 0.0
    %2426 = vmatprep.subr.mxu0 0.0
    %2427 = vmatpush1.xpose.msra.mxu0 0.0
    %2428 = vmatprep.subr.mxu0 0.0
    %2429 = vmatpush1.xpose.msra.mxu0 0.0
    %2430 = vmatprep.mubr.f32.mxu0 0.0
    %2431 = vmatmul.mubr.f32.gmra.mrb[0].mxu0 %v2360
    %v2432 = vpop.f32.mrb[0].mxu0
    %v2433 = vadd.f32 0.0, %v2432
    %v2434 = vpop.f32.mrb[0].mxu0
    %2435 = vdwg.mxu0
    %2436 = vrot.lane.b32.xlu0 %v1714, 112
    %v2437 = vpop.permute.xlu0 %2436
    %2438 = vrot.lane.b32.xlu0 %v1837, 112
    %v2439 = vpop.permute.xlu0 %2438
    %2440 = vrot.lane.b32.xlu0 %v1842, 112
    %v2441 = vpop.permute.xlu0 %2440
    %v2442 = vsel %vm251, %v2437, 0
    %v2444 = vsel %vm251, %v2439, 0
    %v2446 = vsel %vm251, %v2441, 0
    %2448 = vmatprep.subr.mxu0 0.0
    %2449 = vmatpush1.xpose.msra.mxu0 %v2444
    %2450 = vmatprep.subr.mxu0 0.0
    %2451 = vmatpush1.xpose.msra.mxu0 %v2446
    %2452 = vmatprep.subr.mxu0 0.0
    %2453 = vmatpush1.xpose.msra.mxu0 0.0
    %2454 = vmatprep.subr.mxu0 0.0
    %2455 = vmatpush1.xpose.msra.mxu0 0.0
    %2456 = vmatprep.subr.mxu0 0.0
    %2457 = vmatpush1.xpose.msra.mxu0 0.0
    %2458 = vmatprep.subr.mxu0 0.0
    %2459 = vmatpush1.xpose.msra.mxu0 0.0
    %2460 = vmatprep.subr.mxu0 0.0
    %2461 = vmatpush1.xpose.msra.mxu0 0.0
    %2462 = vmatprep.subr.mxu0 0.0
    %2463 = vmatpush1.xpose.msra.mxu0 0.0
    %2464 = vmatprep.subr.mxu0 0.0
    %2465 = vmatpush1.xpose.msra.mxu0 0.0
    %2466 = vmatprep.subr.mxu0 0.0
    %2467 = vmatpush1.xpose.msra.mxu0 0.0
    %2468 = vmatprep.subr.mxu0 0.0
    %2469 = vmatpush1.xpose.msra.mxu0 0.0
    %2470 = vmatprep.subr.mxu0 0.0
    %2471 = vmatpush1.xpose.msra.mxu0 0.0
    %2472 = vmatprep.subr.mxu0 0.0
    %2473 = vmatpush1.xpose.msra.mxu0 0.0
    %2474 = vmatprep.subr.mxu0 0.0
    %2475 = vmatpush1.xpose.msra.mxu0 0.0
    %2476 = vmatprep.subr.mxu0 0.0
    %2477 = vmatpush1.xpose.msra.mxu0 0.0
    %2478 = vmatprep.subr.mxu0 0.0
    %2479 = vmatpush1.xpose.msra.mxu0 0.0
    %2480 = vmatprep.subr.mxu0 0.0
    %2481 = vmatpush1.xpose.msra.mxu0 0.0
    %2482 = vmatprep.subr.mxu0 0.0
    %2483 = vmatpush1.xpose.msra.mxu0 0.0
    %2484 = vmatprep.subr.mxu0 0.0
    %2485 = vmatpush1.xpose.msra.mxu0 0.0
    %2486 = vmatprep.subr.mxu0 0.0
    %2487 = vmatpush1.xpose.msra.mxu0 0.0
    %2488 = vmatprep.subr.mxu0 0.0
    %2489 = vmatpush1.xpose.msra.mxu0 0.0
    %2490 = vmatprep.subr.mxu0 0.0
    %2491 = vmatpush1.xpose.msra.mxu0 0.0
    %2492 = vmatprep.subr.mxu0 0.0
    %2493 = vmatpush1.xpose.msra.mxu0 0.0
    %2494 = vmatprep.subr.mxu0 0.0
    %2495 = vmatpush1.xpose.msra.mxu0 0.0
    %2496 = vmatprep.subr.mxu0 0.0
    %2497 = vmatpush1.xpose.msra.mxu0 0.0
    %2498 = vmatprep.subr.mxu0 0.0
    %2499 = vmatpush1.xpose.msra.mxu0 0.0
    %2500 = vmatprep.subr.mxu0 0.0
    %2501 = vmatpush1.xpose.msra.mxu0 0.0
    %2502 = vmatprep.subr.mxu0 0.0
    %2503 = vmatpush1.xpose.msra.mxu0 0.0
    %2504 = vmatprep.subr.mxu0 0.0
    %2505 = vmatpush1.xpose.msra.mxu0 0.0
    %2506 = vmatprep.subr.mxu0 0.0
    %2507 = vmatpush1.xpose.msra.mxu0 0.0
    %2508 = vmatprep.subr.mxu0 0.0
    %2509 = vmatpush1.xpose.msra.mxu0 0.0
    %2510 = vmatprep.subr.mxu0 0.0
    %2511 = vmatpush1.xpose.msra.mxu0 0.0
    %2512 = vmatprep.mubr.f32.mxu0 0.0
    %2513 = vmatmul.mubr.f32.gmra.mrb[0].mxu0 %v2442
    %v2514 = vpop.f32.mrb[0].mxu0
    %v2515 = vadd.f32 0.0, %v2514
    %v2516 = vpop.f32.mrb[0].mxu0
    %2517 = vdwg.mxu0
    %2518 = vrot.lane.b32.xlu0 %v1714, 104
    %v2519 = vpop.permute.xlu0 %2518
    %2520 = vrot.lane.b32.xlu0 %v1837, 104
    %v2521 = vpop.permute.xlu0 %2520
    %2522 = vrot.lane.b32.xlu0 %v1842, 104
    %v2523 = vpop.permute.xlu0 %2522
    %v2524 = vsel %vm251, %v2519, 0
    %v2526 = vsel %vm251, %v2521, 0
    %v2528 = vsel %vm251, %v2523, 0
    %2530 = vmatprep.subr.mxu0 0.0
    %2531 = vmatpush1.xpose.msra.mxu0 %v2526
    %2532 = vmatprep.subr.mxu0 0.0
    %2533 = vmatpush1.xpose.msra.mxu0 %v2528
    %2534 = vmatprep.subr.mxu0 0.0
    %2535 = vmatpush1.xpose.msra.mxu0 0.0
    %2536 = vmatprep.subr.mxu0 0.0
    %2537 = vmatpush1.xpose.msra.mxu0 0.0
    %2538 = vmatprep.subr.mxu0 0.0
    %2539 = vmatpush1.xpose.msra.mxu0 0.0
    %2540 = vmatprep.subr.mxu0 0.0
    %2541 = vmatpush1.xpose.msra.mxu0 0.0
    %2542 = vmatprep.subr.mxu0 0.0
    %2543 = vmatpush1.xpose.msra.mxu0 0.0
    %2544 = vmatprep.subr.mxu0 0.0
    %2545 = vmatpush1.xpose.msra.mxu0 0.0
    %2546 = vmatprep.subr.mxu0 0.0
    %2547 = vmatpush1.xpose.msra.mxu0 0.0
    %2548 = vmatprep.subr.mxu0 0.0
    %2549 = vmatpush1.xpose.msra.mxu0 0.0
    %2550 = vmatprep.subr.mxu0 0.0
    %2551 = vmatpush1.xpose.msra.mxu0 0.0
    %2552 = vmatprep.subr.mxu0 0.0
    %2553 = vmatpush1.xpose.msra.mxu0 0.0
    %2554 = vmatprep.subr.mxu0 0.0
    %2555 = vmatpush1.xpose.msra.mxu0 0.0
    %2556 = vmatprep.subr.mxu0 0.0
    %2557 = vmatpush1.xpose.msra.mxu0 0.0
    %2558 = vmatprep.subr.mxu0 0.0
    %2559 = vmatpush1.xpose.msra.mxu0 0.0
    %2560 = vmatprep.subr.mxu0 0.0
    %2561 = vmatpush1.xpose.msra.mxu0 0.0
    %2562 = vmatprep.subr.mxu0 0.0
    %2563 = vmatpush1.xpose.msra.mxu0 0.0
    %2564 = vmatprep.subr.mxu0 0.0
    %2565 = vmatpush1.xpose.msra.mxu0 0.0
    %2566 = vmatprep.subr.mxu0 0.0
    %2567 = vmatpush1.xpose.msra.mxu0 0.0
    %2568 = vmatprep.subr.mxu0 0.0
    %2569 = vmatpush1.xpose.msra.mxu0 0.0
    %2570 = vmatprep.subr.mxu0 0.0
    %2571 = vmatpush1.xpose.msra.mxu0 0.0
    %2572 = vmatprep.subr.mxu0 0.0
    %2573 = vmatpush1.xpose.msra.mxu0 0.0
    %2574 = vmatprep.subr.mxu0 0.0
    %2575 = vmatpush1.xpose.msra.mxu0 0.0
    %2576 = vmatprep.subr.mxu0 0.0
    %2577 = vmatpush1.xpose.msra.mxu0 0.0
    %2578 = vmatprep.subr.mxu0 0.0
    %2579 = vmatpush1.xpose.msra.mxu0 0.0
    %2580 = vmatprep.subr.mxu0 0.0
    %2581 = vmatpush1.xpose.msra.mxu0 0.0
    %2582 = vmatprep.subr.mxu0 0.0
    %2583 = vmatpush1.xpose.msra.mxu0 0.0
    %2584 = vmatprep.subr.mxu0 0.0
    %2585 = vmatpush1.xpose.msra.mxu0 0.0
    %2586 = vmatprep.subr.mxu0 0.0
    %2587 = vmatpush1.xpose.msra.mxu0 0.0
    %2588 = vmatprep.subr.mxu0 0.0
    %2589 = vmatpush1.xpose.msra.mxu0 0.0
    %2590 = vmatprep.subr.mxu0 0.0
    %2591 = vmatpush1.xpose.msra.mxu0 0.0
    %2592 = vmatprep.subr.mxu0 0.0
    %2593 = vmatpush1.xpose.msra.mxu0 0.0
    %2594 = vmatprep.mubr.f32.mxu0 0.0
    %2595 = vmatmul.mubr.f32.gmra.mrb[0].mxu0 %v2524
    %v2596 = vpop.f32.mrb[0].mxu0
    %v2597 = vadd.f32 0.0, %v2596
    %v2598 = vpop.f32.mrb[0].mxu0
    %2599 = vdwg.mxu0
    %vm2600 = vcmask 130048
    %v2601 = vsel %vm2600, %v2026, -inf
    %2602 = vmax.xlane.f32.xlu0 %v2601
    %v2603 = vpop.xlane.xlu0 %2602
    %v2604 = vsel %vm2600, %v2108, -inf
    %2605 = vmax.xlane.f32.xlu0 %v2604
    %v2606 = vpop.xlane.xlu0 %2605
    %v2607 = vsel %vm2600, %v2190, -inf
    %2608 = vmax.xlane.f32.xlu0 %v2607
    %v2609 = vpop.xlane.xlu0 %2608
    %v2610 = vsel %vm2600, %v2272, -inf
    %2611 = vmax.xlane.f32.xlu0 %v2610
    %v2612 = vpop.xlane.xlu0 %2611
    %v2613 = vsel %vm2600, %v2351, -inf
    %2614 = vmax.xlane.f32.xlu0 %v2613
    %v2615 = vpop.xlane.xlu0 %2614
    %v2616 = vsel %vm2600, %v2433, -inf
    %2617 = vmax.xlane.f32.xlu0 %v2616
    %v2618 = vpop.xlane.xlu0 %2617
    %v2619 = vsel %vm2600, %v2515, -inf
    %2620 = vmax.xlane.f32.xlu0 %v2619
    %v2621 = vpop.xlane.xlu0 %2620
    %v2622 = vsel %vm2600, %v2597, -inf
    %2623 = vmax.xlane.f32.xlu0 %v2622
    %v2624 = vpop.xlane.xlu0 %2623
    %v2625 = vsub.f32 %v2026, %v2603
    %v2626 = vsub.f32 %v2108, %v2606
    %v2627 = vsub.f32 %v2190, %v2609
    %v2628 = vsub.f32 %v2272, %v2612
    %v2629 = vsub.f32 %v2351, %v2615
    %v2630 = vsub.f32 %v2433, %v2618
    %v2631 = vsub.f32 %v2515, %v2621
    %v2632 = vsub.f32 %v2597, %v2624
    %v2633 = vmul.f32 %v2625, 1.442695
    %v2634 = vpow.pop %v2633
    %v2635 = vmul.f32 %v2626, 1.442695
    %v2636 = vpow.pop %v2635
    %v2637 = vmul.f32 %v2627, 1.442695
    %v2638 = vpow.pop %v2637
    %v2639 = vmul.f32 %v2628, 1.442695
    %v2640 = vpow.pop %v2639
    %v2641 = vmul.f32 %v2629, 1.442695
    %v2642 = vpow.pop %v2641
    %v2643 = vmul.f32 %v2630, 1.442695
    %v2644 = vpow.pop %v2643
    %v2645 = vmul.f32 %v2631, 1.442695
    %v2646 = vpow.pop %v2645
    %v2647 = vmul.f32 %v2632, 1.442695
    %v2648 = vpow.pop %v2647
    %v2649 = vsel %vm2600, %v2634, 0.0
    %2650 = vadd.xlane.f32.xlu0 %v2649
    %v2651 = vpop.xlane.xlu0 %2650
    %v2652 = vsel %vm2600, %v2636, 0.0
    %2653 = vadd.xlane.f32.xlu0 %v2652
    %v2654 = vpop.xlane.xlu0 %2653
    %v2655 = vsel %vm2600, %v2638, 0.0
    %2656 = vadd.xlane.f32.xlu0 %v2655
    %v2657 = vpop.xlane.xlu0 %2656
    %v2658 = vsel %vm2600, %v2640, 0.0
    %2659 = vadd.xlane.f32.xlu0 %v2658
    %v2660 = vpop.xlane.xlu0 %2659
    %v2661 = vsel %vm2600, %v2642, 0.0
    %2662 = vadd.xlane.f32.xlu0 %v2661
    %v2663 = vpop.xlane.xlu0 %2662
    %v2664 = vsel %vm2600, %v2644, 0.0
    %2665 = vadd.xlane.f32.xlu0 %v2664
    %v2666 = vpop.xlane.xlu0 %2665
    %v2667 = vsel %vm2600, %v2646, 0.0
    %2668 = vadd.xlane.f32.xlu0 %v2667
    %v2669 = vpop.xlane.xlu0 %2668
    %v2670 = vsel %vm2600, %v2648, 0.0
    %2671 = vadd.xlane.f32.xlu0 %v2670
    %v2672 = vpop.xlane.xlu0 %2671
    %v2673 = vrcp.pop %v2651
    %v2674 = vrcp.pop %v2654
    %v2675 = vrcp.pop %v2657
    %v2676 = vrcp.pop %v2660
    %v2677 = vrcp.pop %v2663
    %v2678 = vrcp.pop %v2666
    %v2679 = vrcp.pop %v2669
    %v2680 = vrcp.pop %v2672
    %v2681 = vmul.f32 %v2634, %v2673
    %v2682 = vmul.f32 %v2636, %v2674
    %v2683 = vmul.f32 %v2638, %v2675
    %v2684 = vmul.f32 %v2640, %v2676
    %v2685 = vmul.f32 %v2642, %v2677
    %v2686 = vmul.f32 %v2644, %v2678
    %v2687 = vmul.f32 %v2646, %v2679
    %v2688 = vmul.f32 %v2648, %v2680
    %2691 = vrot.lane.b32.xlu0 %v1932, 96
    %v2692 = vpop.permute.xlu0 %2691
    %2693 = vrot.lane.b32.xlu0 %v1937, 96
    %v2694 = vpop.permute.xlu0 %2693
    %v2698 = vsel %vm2600, %v2682, 0
    %2700 = vmatprep.subr.mxu0 0.0
    %2701 = vmatpush1.msra.mxu0 %v2692
    %2702 = vmatprep.subr.mxu0 0.0
    %2703 = vmatpush1.msra.mxu0 %v2694
    %2704 = vmatprep.subr.mxu0 0.0
    %2705 = vmatpush1.msra.mxu0 0.0
    %2706 = vmatprep.subr.mxu0 0.0
    %2707 = vmatpush1.msra.mxu0 0.0
    %2708 = vmatprep.subr.mxu0 0.0
    %2709 = vmatpush1.msra.mxu0 0.0
    %2710 = vmatprep.subr.mxu0 0.0
    %2711 = vmatpush1.msra.mxu0 0.0
    %2712 = vmatprep.subr.mxu0 0.0
    %2713 = vmatpush1.msra.mxu0 0.0
    %2714 = vmatprep.subr.mxu0 0.0
    %2715 = vmatpush1.msra.mxu0 0.0
    %2716 = vmatprep.subr.mxu0 0.0
    %2717 = vmatpush1.msra.mxu0 0.0
    %2718 = vmatprep.subr.mxu0 0.0
    %2719 = vmatpush1.msra.mxu0 0.0
    %2720 = vmatprep.subr.mxu0 0.0
    %2721 = vmatpush1.msra.mxu0 0.0
    %2722 = vmatprep.subr.mxu0 0.0
    %2723 = vmatpush1.msra.mxu0 0.0
    %2724 = vmatprep.subr.mxu0 0.0
    %2725 = vmatpush1.msra.mxu0 0.0
    %2726 = vmatprep.subr.mxu0 0.0
    %2727 = vmatpush1.msra.mxu0 0.0
    %2728 = vmatprep.subr.mxu0 0.0
    %2729 = vmatpush1.msra.mxu0 0.0
    %2730 = vmatprep.subr.mxu0 0.0
    %2731 = vmatpush1.msra.mxu0 0.0
    %2732 = vmatprep.subr.mxu0 0.0
    %2733 = vmatpush1.msra.mxu0 0.0
    %2734 = vmatprep.subr.mxu0 0.0
    %2735 = vmatpush1.msra.mxu0 0.0
    %2736 = vmatprep.subr.mxu0 0.0
    %2737 = vmatpush1.msra.mxu0 0.0
    %2738 = vmatprep.subr.mxu0 0.0
    %2739 = vmatpush1.msra.mxu0 0.0
    %2740 = vmatprep.subr.mxu0 0.0
    %2741 = vmatpush1.msra.mxu0 0.0
    %2742 = vmatprep.subr.mxu0 0.0
    %2743 = vmatpush1.msra.mxu0 0.0
    %2744 = vmatprep.subr.mxu0 0.0
    %2745 = vmatpush1.msra.mxu0 0.0
    %2746 = vmatprep.subr.mxu0 0.0
    %2747 = vmatpush1.msra.mxu0 0.0
    %2748 = vmatprep.subr.mxu0 0.0
    %2749 = vmatpush1.msra.mxu0 0.0
    %2750 = vmatprep.subr.mxu0 0.0
    %2751 = vmatpush1.msra.mxu0 0.0
    %2752 = vmatprep.subr.mxu0 0.0
    %2753 = vmatpush1.msra.mxu0 0.0
    %2754 = vmatprep.subr.mxu0 0.0
    %2755 = vmatpush1.msra.mxu0 0.0
    %2756 = vmatprep.subr.mxu0 0.0
    %2757 = vmatpush1.msra.mxu0 0.0
    %2758 = vmatprep.subr.mxu0 0.0
    %2759 = vmatpush1.msra.mxu0 0.0
    %2760 = vmatprep.subr.mxu0 0.0
    %2761 = vmatpush1.msra.mxu0 0.0
    %2762 = vmatprep.subr.mxu0 0.0
    %2763 = vmatpush1.msra.mxu0 0.0
    %2764 = vmatprep.mubr.f32.mxu0 0.0
    %2765 = vmatmul.mubr.f32.gmra.mrb[0].mxu0 %v2698
    %v2766 = vpop.f32.mrb[0].mxu0
    %v2767 = vadd.f32 0.0, %v2766
    %v2768 = vpop.f32.mrb[0].mxu0
    %2769 = vdwg.mxu0
    %v2771 = vsel %vm2600, %v2681, 0
    %2773 = vmatprep.subr.mxu0 0.0
    %2774 = vmatpush1.msra.mxu0 %v1932
    %2775 = vmatprep.subr.mxu0 0.0
    %2776 = vmatpush1.msra.mxu0 %v1937
    %2777 = vmatprep.subr.mxu0 0.0
    %2778 = vmatpush1.msra.mxu0 0.0
    %2779 = vmatprep.subr.mxu0 0.0
    %2780 = vmatpush1.msra.mxu0 0.0
    %2781 = vmatprep.subr.mxu0 0.0
    %2782 = vmatpush1.msra.mxu0 0.0
    %2783 = vmatprep.subr.mxu0 0.0
    %2784 = vmatpush1.msra.mxu0 0.0
    %2785 = vmatprep.subr.mxu0 0.0
    %2786 = vmatpush1.msra.mxu0 0.0
    %2787 = vmatprep.subr.mxu0 0.0
    %2788 = vmatpush1.msra.mxu0 0.0
    %2789 = vmatprep.subr.mxu0 0.0
    %2790 = vmatpush1.msra.mxu0 0.0
    %2791 = vmatprep.subr.mxu0 0.0
    %2792 = vmatpush1.msra.mxu0 0.0
    %2793 = vmatprep.subr.mxu0 0.0
    %2794 = vmatpush1.msra.mxu0 0.0
    %2795 = vmatprep.subr.mxu0 0.0
    %2796 = vmatpush1.msra.mxu0 0.0
    %2797 = vmatprep.subr.mxu0 0.0
    %2798 = vmatpush1.msra.mxu0 0.0
    %2799 = vmatprep.subr.mxu0 0.0
    %2800 = vmatpush1.msra.mxu0 0.0
    %2801 = vmatprep.subr.mxu0 0.0
    %2802 = vmatpush1.msra.mxu0 0.0
    %2803 = vmatprep.subr.mxu0 0.0
    %2804 = vmatpush1.msra.mxu0 0.0
    %2805 = vmatprep.subr.mxu0 0.0
    %2806 = vmatpush1.msra.mxu0 0.0
    %2807 = vmatprep.subr.mxu0 0.0
    %2808 = vmatpush1.msra.mxu0 0.0
    %2809 = vmatprep.subr.mxu0 0.0
    %2810 = vmatpush1.msra.mxu0 0.0
    %2811 = vmatprep.subr.mxu0 0.0
    %2812 = vmatpush1.msra.mxu0 0.0
    %2813 = vmatprep.subr.mxu0 0.0
    %2814 = vmatpush1.msra.mxu0 0.0
    %2815 = vmatprep.subr.mxu0 0.0
    %2816 = vmatpush1.msra.mxu0 0.0
    %2817 = vmatprep.subr.mxu0 0.0
    %2818 = vmatpush1.msra.mxu0 0.0
    %2819 = vmatprep.subr.mxu0 0.0
    %2820 = vmatpush1.msra.mxu0 0.0
    %2821 = vmatprep.subr.mxu0 0.0
    %2822 = vmatpush1.msra.mxu0 0.0
    %2823 = vmatprep.subr.mxu0 0.0
    %2824 = vmatpush1.msra.mxu0 0.0
    %2825 = vmatprep.subr.mxu0 0.0
    %2826 = vmatpush1.msra.mxu0 0.0
    %2827 = vmatprep.subr.mxu0 0.0
    %2828 = vmatpush1.msra.mxu0 0.0
    %2829 = vmatprep.subr.mxu0 0.0
    %2830 = vmatpush1.msra.mxu0 0.0
    %2831 = vmatprep.subr.mxu0 0.0
    %2832 = vmatpush1.msra.mxu0 0.0
    %2833 = vmatprep.subr.mxu0 0.0
    %2834 = vmatpush1.msra.mxu0 0.0
    %2835 = vmatprep.subr.mxu0 0.0
    %2836 = vmatpush1.msra.mxu0 0.0
    %2837 = vmatprep.mubr.f32.mxu0 0.0
    %2838 = vmatmul.mubr.f32.gmra.mrb[0].mxu0 %v2771
    %v2839 = vpop.f32.mrb[0].mxu0
    %v2840 = vadd.f32 %v2767, %v2839
    %v2841 = vpop.f32.mrb[0].mxu0
    %2842 = vdwg.mxu0
    %2843 = vrot.lane.b32.xlu0 %v1932, 64
    %v2844 = vpop.permute.xlu0 %2843
    %2845 = vrot.lane.b32.xlu0 %v1937, 64
    %v2846 = vpop.permute.xlu0 %2845
    %v2850 = vsel %vm2600, %v2683, 0
    %2852 = vmatprep.subr.mxu0 0.0
    %2853 = vmatpush1.msra.mxu0 %v2844
    %2854 = vmatprep.subr.mxu0 0.0
    %2855 = vmatpush1.msra.mxu0 %v2846
    %2856 = vmatprep.subr.mxu0 0.0
    %2857 = vmatpush1.msra.mxu0 0.0
    %2858 = vmatprep.subr.mxu0 0.0
    %2859 = vmatpush1.msra.mxu0 0.0
    %2860 = vmatprep.subr.mxu0 0.0
    %2861 = vmatpush1.msra.mxu0 0.0
    %2862 = vmatprep.subr.mxu0 0.0
    %2863 = vmatpush1.msra.mxu0 0.0
    %2864 = vmatprep.subr.mxu0 0.0
    %2865 = vmatpush1.msra.mxu0 0.0
    %2866 = vmatprep.subr.mxu0 0.0
    %2867 = vmatpush1.msra.mxu0 0.0
    %2868 = vmatprep.subr.mxu0 0.0
    %2869 = vmatpush1.msra.mxu0 0.0
    %2870 = vmatprep.subr.mxu0 0.0
    %2871 = vmatpush1.msra.mxu0 0.0
    %2872 = vmatprep.subr.mxu0 0.0
    %2873 = vmatpush1.msra.mxu0 0.0
    %2874 = vmatprep.subr.mxu0 0.0
    %2875 = vmatpush1.msra.mxu0 0.0
    %2876 = vmatprep.subr.mxu0 0.0
    %2877 = vmatpush1.msra.mxu0 0.0
    %2878 = vmatprep.subr.mxu0 0.0
    %2879 = vmatpush1.msra.mxu0 0.0
    %2880 = vmatprep.subr.mxu0 0.0
    %2881 = vmatpush1.msra.mxu0 0.0
    %2882 = vmatprep.subr.mxu0 0.0
    %2883 = vmatpush1.msra.mxu0 0.0
    %2884 = vmatprep.subr.mxu0 0.0
    %2885 = vmatpush1.msra.mxu0 0.0
    %2886 = vmatprep.subr.mxu0 0.0
    %2887 = vmatpush1.msra.mxu0 0.0
    %2888 = vmatprep.subr.mxu0 0.0
    %2889 = vmatpush1.msra.mxu0 0.0
    %2890 = vmatprep.subr.mxu0 0.0
    %2891 = vmatpush1.msra.mxu0 0.0
    %2892 = vmatprep.subr.mxu0 0.0
    %2893 = vmatpush1.msra.mxu0 0.0
    %2894 = vmatprep.subr.mxu0 0.0
    %2895 = vmatpush1.msra.mxu0 0.0
    %2896 = vmatprep.subr.mxu0 0.0
    %2897 = vmatpush1.msra.mxu0 0.0
    %2898 = vmatprep.subr.mxu0 0.0
    %2899 = vmatpush1.msra.mxu0 0.0
    %2900 = vmatprep.subr.mxu0 0.0
    %2901 = vmatpush1.msra.mxu0 0.0
    %2902 = vmatprep.subr.mxu0 0.0
    %2903 = vmatpush1.msra.mxu0 0.0
    %2904 = vmatprep.subr.mxu0 0.0
    %2905 = vmatpush1.msra.mxu0 0.0
    %2906 = vmatprep.subr.mxu0 0.0
    %2907 = vmatpush1.msra.mxu0 0.0
    %2908 = vmatprep.subr.mxu0 0.0
    %2909 = vmatpush1.msra.mxu0 0.0
    %2910 = vmatprep.subr.mxu0 0.0
    %2911 = vmatpush1.msra.mxu0 0.0
    %2912 = vmatprep.subr.mxu0 0.0
    %2913 = vmatpush1.msra.mxu0 0.0
    %2914 = vmatprep.subr.mxu0 0.0
    %2915 = vmatpush1.msra.mxu0 0.0
    %2916 = vmatprep.mubr.f32.mxu0 0.0
    %2917 = vmatmul.mubr.f32.gmra.mrb[0].mxu0 %v2850
    %v2918 = vpop.f32.mrb[0].mxu0
    %v2919 = vadd.f32 0.0, %v2918
    %v2920 = vpop.f32.mrb[0].mxu0
    %2921 = vdwg.mxu0
    %v2922 = vadd.f32 %v2840, %v2919
    %2923 = vrot.lane.b32.xlu0 %v1932, 32
    %v2924 = vpop.permute.xlu0 %2923
    %2925 = vrot.lane.b32.xlu0 %v1937, 32
    %v2926 = vpop.permute.xlu0 %2925
    %v2930 = vsel %vm2600, %v2684, 0
    %2932 = vmatprep.subr.mxu0 0.0
    %2933 = vmatpush1.msra.mxu0 %v2924
    %2934 = vmatprep.subr.mxu0 0.0
    %2935 = vmatpush1.msra.mxu0 %v2926
    %2936 = vmatprep.subr.mxu0 0.0
    %2937 = vmatpush1.msra.mxu0 0.0
    %2938 = vmatprep.subr.mxu0 0.0
    %2939 = vmatpush1.msra.mxu0 0.0
    %2940 = vmatprep.subr.mxu0 0.0
    %2941 = vmatpush1.msra.mxu0 0.0
    %2942 = vmatprep.subr.mxu0 0.0
    %2943 = vmatpush1.msra.mxu0 0.0
    %2944 = vmatprep.subr.mxu0 0.0
    %2945 = vmatpush1.msra.mxu0 0.0
    %2946 = vmatprep.subr.mxu0 0.0
    %2947 = vmatpush1.msra.mxu0 0.0
    %2948 = vmatprep.subr.mxu0 0.0
    %2949 = vmatpush1.msra.mxu0 0.0
    %2950 = vmatprep.subr.mxu0 0.0
    %2951 = vmatpush1.msra.mxu0 0.0
    %2952 = vmatprep.subr.mxu0 0.0
    %2953 = vmatpush1.msra.mxu0 0.0
    %2954 = vmatprep.subr.mxu0 0.0
    %2955 = vmatpush1.msra.mxu0 0.0
    %2956 = vmatprep.subr.mxu0 0.0
    %2957 = vmatpush1.msra.mxu0 0.0
    %2958 = vmatprep.subr.mxu0 0.0
    %2959 = vmatpush1.msra.mxu0 0.0
    %2960 = vmatprep.subr.mxu0 0.0
    %2961 = vmatpush1.msra.mxu0 0.0
    %2962 = vmatprep.subr.mxu0 0.0
    %2963 = vmatpush1.msra.mxu0 0.0
    %2964 = vmatprep.subr.mxu0 0.0
    %2965 = vmatpush1.msra.mxu0 0.0
    %2966 = vmatprep.subr.mxu0 0.0
    %2967 = vmatpush1.msra.mxu0 0.0
    %2968 = vmatprep.subr.mxu0 0.0
    %2969 = vmatpush1.msra.mxu0 0.0
    %2970 = vmatprep.subr.mxu0 0.0
    %2971 = vmatpush1.msra.mxu0 0.0
    %2972 = vmatprep.subr.mxu0 0.0
    %2973 = vmatpush1.msra.mxu0 0.0
    %2974 = vmatprep.subr.mxu0 0.0
    %2975 = vmatpush1.msra.mxu0 0.0
    %2976 = vmatprep.subr.mxu0 0.0
    %2977 = vmatpush1.msra.mxu0 0.0
    %2978 = vmatprep.subr.mxu0 0.0
    %2979 = vmatpush1.msra.mxu0 0.0
    %2980 = vmatprep.subr.mxu0 0.0
    %2981 = vmatpush1.msra.mxu0 0.0
    %2982 = vmatprep.subr.mxu0 0.0
    %2983 = vmatpush1.msra.mxu0 0.0
    %2984 = vmatprep.subr.mxu0 0.0
    %2985 = vmatpush1.msra.mxu0 0.0
    %2986 = vmatprep.subr.mxu0 0.0
    %2987 = vmatpush1.msra.mxu0 0.0
    %2988 = vmatprep.subr.mxu0 0.0
    %2989 = vmatpush1.msra.mxu0 0.0
    %2990 = vmatprep.subr.mxu0 0.0
    %2991 = vmatpush1.msra.mxu0 0.0
    %2992 = vmatprep.subr.mxu0 0.0
    %2993 = vmatpush1.msra.mxu0 0.0
    %2994 = vmatprep.subr.mxu0 0.0
    %2995 = vmatpush1.msra.mxu0 0.0
    %2996 = vmatprep.mubr.f32.mxu0 0.0
    %2997 = vmatmul.mubr.f32.gmra.mrb[0].mxu0 %v2930
    %v2998 = vpop.f32.mrb[0].mxu0
    %v2999 = vadd.f32 0.0, %v2998
    %v3000 = vpop.f32.mrb[0].mxu0
    %3001 = vdwg.mxu0
    %v3002 = vadd.f32 %v2922, %v2999
    %3005 = vrot.lane.b32.xlu0 %v1942, 96
    %v3006 = vpop.permute.xlu0 %3005
    %3007 = vrot.lane.b32.xlu0 %v1947, 96
    %v3008 = vpop.permute.xlu0 %3007
    %v3012 = vsel %vm2600, %v2686, 0
    %3014 = vmatprep.subr.mxu0 0.0
    %3015 = vmatpush1.msra.mxu0 %v3006
    %3016 = vmatprep.subr.mxu0 0.0
    %3017 = vmatpush1.msra.mxu0 %v3008
    %3018 = vmatprep.subr.mxu0 0.0
    %3019 = vmatpush1.msra.mxu0 0.0
    %3020 = vmatprep.subr.mxu0 0.0
    %3021 = vmatpush1.msra.mxu0 0.0
    %3022 = vmatprep.subr.mxu0 0.0
    %3023 = vmatpush1.msra.mxu0 0.0
    %3024 = vmatprep.subr.mxu0 0.0
    %3025 = vmatpush1.msra.mxu0 0.0
    %3026 = vmatprep.subr.mxu0 0.0
    %3027 = vmatpush1.msra.mxu0 0.0
    %3028 = vmatprep.subr.mxu0 0.0
    %3029 = vmatpush1.msra.mxu0 0.0
    %3030 = vmatprep.subr.mxu0 0.0
    %3031 = vmatpush1.msra.mxu0 0.0
    %3032 = vmatprep.subr.mxu0 0.0
    %3033 = vmatpush1.msra.mxu0 0.0
    %3034 = vmatprep.subr.mxu0 0.0
    %3035 = vmatpush1.msra.mxu0 0.0
    %3036 = vmatprep.subr.mxu0 0.0
    %3037 = vmatpush1.msra.mxu0 0.0
    %3038 = vmatprep.subr.mxu0 0.0
    %3039 = vmatpush1.msra.mxu0 0.0
    %3040 = vmatprep.subr.mxu0 0.0
    %3041 = vmatpush1.msra.mxu0 0.0
    %3042 = vmatprep.subr.mxu0 0.0
    %3043 = vmatpush1.msra.mxu0 0.0
    %3044 = vmatprep.subr.mxu0 0.0
    %3045 = vmatpush1.msra.mxu0 0.0
    %3046 = vmatprep.subr.mxu0 0.0
    %3047 = vmatpush1.msra.mxu0 0.0
    %3048 = vmatprep.subr.mxu0 0.0
    %3049 = vmatpush1.msra.mxu0 0.0
    %3050 = vmatprep.subr.mxu0 0.0
    %3051 = vmatpush1.msra.mxu0 0.0
    %3052 = vmatprep.subr.mxu0 0.0
    %3053 = vmatpush1.msra.mxu0 0.0
    %3054 = vmatprep.subr.mxu0 0.0
    %3055 = vmatpush1.msra.mxu0 0.0
    %3056 = vmatprep.subr.mxu0 0.0
    %3057 = vmatpush1.msra.mxu0 0.0
    %3058 = vmatprep.subr.mxu0 0.0
    %3059 = vmatpush1.msra.mxu0 0.0
    %3060 = vmatprep.subr.mxu0 0.0
    %3061 = vmatpush1.msra.mxu0 0.0
    %3062 = vmatprep.subr.mxu0 0.0
    %3063 = vmatpush1.msra.mxu0 0.0
    %3064 = vmatprep.subr.mxu0 0.0
    %3065 = vmatpush1.msra.mxu0 0.0
    %3066 = vmatprep.subr.mxu0 0.0
    %3067 = vmatpush1.msra.mxu0 0.0
    %3068 = vmatprep.subr.mxu0 0.0
    %3069 = vmatpush1.msra.mxu0 0.0
    %3070 = vmatprep.subr.mxu0 0.0
    %3071 = vmatpush1.msra.mxu0 0.0
    %3072 = vmatprep.subr.mxu0 0.0
    %3073 = vmatpush1.msra.mxu0 0.0
    %3074 = vmatprep.subr.mxu0 0.0
    %3075 = vmatpush1.msra.mxu0 0.0
    %3076 = vmatprep.subr.mxu0 0.0
    %3077 = vmatpush1.msra.mxu0 0.0
    %3078 = vmatprep.mubr.f32.mxu0 0.0
    %3079 = vmatmul.mubr.f32.gmra.mrb[0].mxu0 %v3012
    %v3080 = vpop.f32.mrb[0].mxu0
    %v3081 = vadd.f32 0.0, %v3080
    %v3082 = vpop.f32.mrb[0].mxu0
    %3083 = vdwg.mxu0
    %v3085 = vsel %vm2600, %v2685, 0
    %3087 = vmatprep.subr.mxu0 0.0
    %3088 = vmatpush1.msra.mxu0 %v1942
    %3089 = vmatprep.subr.mxu0 0.0
    %3090 = vmatpush1.msra.mxu0 %v1947
    %3091 = vmatprep.subr.mxu0 0.0
    %3092 = vmatpush1.msra.mxu0 0.0
    %3093 = vmatprep.subr.mxu0 0.0
    %3094 = vmatpush1.msra.mxu0 0.0
    %3095 = vmatprep.subr.mxu0 0.0
    %3096 = vmatpush1.msra.mxu0 0.0
    %3097 = vmatprep.subr.mxu0 0.0
    %3098 = vmatpush1.msra.mxu0 0.0
    %3099 = vmatprep.subr.mxu0 0.0
    %3100 = vmatpush1.msra.mxu0 0.0
    %3101 = vmatprep.subr.mxu0 0.0
    %3102 = vmatpush1.msra.mxu0 0.0
    %3103 = vmatprep.subr.mxu0 0.0
    %3104 = vmatpush1.msra.mxu0 0.0
    %3105 = vmatprep.subr.mxu0 0.0
    %3106 = vmatpush1.msra.mxu0 0.0
    %3107 = vmatprep.subr.mxu0 0.0
    %3108 = vmatpush1.msra.mxu0 0.0
    %3109 = vmatprep.subr.mxu0 0.0
    %3110 = vmatpush1.msra.mxu0 0.0
    %3111 = vmatprep.subr.mxu0 0.0
    %3112 = vmatpush1.msra.mxu0 0.0
    %3113 = vmatprep.subr.mxu0 0.0
    %3114 = vmatpush1.msra.mxu0 0.0
    %3115 = vmatprep.subr.mxu0 0.0
    %3116 = vmatpush1.msra.mxu0 0.0
    %3117 = vmatprep.subr.mxu0 0.0
    %3118 = vmatpush1.msra.mxu0 0.0
    %3119 = vmatprep.subr.mxu0 0.0
    %3120 = vmatpush1.msra.mxu0 0.0
    %3121 = vmatprep.subr.mxu0 0.0
    %3122 = vmatpush1.msra.mxu0 0.0
    %3123 = vmatprep.subr.mxu0 0.0
    %3124 = vmatpush1.msra.mxu0 0.0
    %3125 = vmatprep.subr.mxu0 0.0
    %3126 = vmatpush1.msra.mxu0 0.0
    %3127 = vmatprep.subr.mxu0 0.0
    %3128 = vmatpush1.msra.mxu0 0.0
    %3129 = vmatprep.subr.mxu0 0.0
    %3130 = vmatpush1.msra.mxu0 0.0
    %3131 = vmatprep.subr.mxu0 0.0
    %3132 = vmatpush1.msra.mxu0 0.0
    %3133 = vmatprep.subr.mxu0 0.0
    %3134 = vmatpush1.msra.mxu0 0.0
    %3135 = vmatprep.subr.mxu0 0.0
    %3136 = vmatpush1.msra.mxu0 0.0
    %3137 = vmatprep.subr.mxu0 0.0
    %3138 = vmatpush1.msra.mxu0 0.0
    %3139 = vmatprep.subr.mxu0 0.0
    %3140 = vmatpush1.msra.mxu0 0.0
    %3141 = vmatprep.subr.mxu0 0.0
    %3142 = vmatpush1.msra.mxu0 0.0
    %3143 = vmatprep.subr.mxu0 0.0
    %3144 = vmatpush1.msra.mxu0 0.0
    %3145 = vmatprep.subr.mxu0 0.0
    %3146 = vmatpush1.msra.mxu0 0.0
    %3147 = vmatprep.subr.mxu0 0.0
    %3148 = vmatpush1.msra.mxu0 0.0
    %3149 = vmatprep.subr.mxu0 0.0
    %3150 = vmatpush1.msra.mxu0 0.0
    %3151 = vmatprep.mubr.f32.mxu0 0.0
    %3152 = vmatmul.mubr.f32.gmra.mrb[0].mxu0 %v3085
    %v3153 = vpop.f32.mrb[0].mxu0
    %v3154 = vadd.f32 %v3081, %v3153
    %v3155 = vpop.f32.mrb[0].mxu0
    %3156 = vdwg.mxu0
    %3157 = vrot.lane.b32.xlu0 %v1942, 64
    %v3158 = vpop.permute.xlu0 %3157
    %3159 = vrot.lane.b32.xlu0 %v1947, 64
    %v3160 = vpop.permute.xlu0 %3159
    %v3164 = vsel %vm2600, %v2687, 0
    %3166 = vmatprep.subr.mxu0 0.0
    %3167 = vmatpush1.msra.mxu0 %v3158
    %3168 = vmatprep.subr.mxu0 0.0
    %3169 = vmatpush1.msra.mxu0 %v3160
    %3170 = vmatprep.subr.mxu0 0.0
    %3171 = vmatpush1.msra.mxu0 0.0
    %3172 = vmatprep.subr.mxu0 0.0
    %3173 = vmatpush1.msra.mxu0 0.0
    %3174 = vmatprep.subr.mxu0 0.0
    %3175 = vmatpush1.msra.mxu0 0.0
    %3176 = vmatprep.subr.mxu0 0.0
    %3177 = vmatpush1.msra.mxu0 0.0
    %3178 = vmatprep.subr.mxu0 0.0
    %3179 = vmatpush1.msra.mxu0 0.0
    %3180 = vmatprep.subr.mxu0 0.0
    %3181 = vmatpush1.msra.mxu0 0.0
    %3182 = vmatprep.subr.mxu0 0.0
    %3183 = vmatpush1.msra.mxu0 0.0
    %3184 = vmatprep.subr.mxu0 0.0
    %3185 = vmatpush1.msra.mxu0 0.0
    %3186 = vmatprep.subr.mxu0 0.0
    %3187 = vmatpush1.msra.mxu0 0.0
    %3188 = vmatprep.subr.mxu0 0.0
    %3189 = vmatpush1.msra.mxu0 0.0
    %3190 = vmatprep.subr.mxu0 0.0
    %3191 = vmatpush1.msra.mxu0 0.0
    %3192 = vmatprep.subr.mxu0 0.0
    %3193 = vmatpush1.msra.mxu0 0.0
    %3194 = vmatprep.subr.mxu0 0.0
    %3195 = vmatpush1.msra.mxu0 0.0
    %3196 = vmatprep.subr.mxu0 0.0
    %3197 = vmatpush1.msra.mxu0 0.0
    %3198 = vmatprep.subr.mxu0 0.0
    %3199 = vmatpush1.msra.mxu0 0.0
    %3200 = vmatprep.subr.mxu0 0.0
    %3201 = vmatpush1.msra.mxu0 0.0
    %3202 = vmatprep.subr.mxu0 0.0
    %3203 = vmatpush1.msra.mxu0 0.0
    %3204 = vmatprep.subr.mxu0 0.0
    %3205 = vmatpush1.msra.mxu0 0.0
    %3206 = vmatprep.subr.mxu0 0.0
    %3207 = vmatpush1.msra.mxu0 0.0
    %3208 = vmatprep.subr.mxu0 0.0
    %3209 = vmatpush1.msra.mxu0 0.0
    %3210 = vmatprep.subr.mxu0 0.0
    %3211 = vmatpush1.msra.mxu0 0.0
    %3212 = vmatprep.subr.mxu0 0.0
    %3213 = vmatpush1.msra.mxu0 0.0
    %3214 = vmatprep.subr.mxu0 0.0
    %3215 = vmatpush1.msra.mxu0 0.0
    %3216 = vmatprep.subr.mxu0 0.0
    %3217 = vmatpush1.msra.mxu0 0.0
    %3218 = vmatprep.subr.mxu0 0.0
    %3219 = vmatpush1.msra.mxu0 0.0
    %3220 = vmatprep.subr.mxu0 0.0
    %3221 = vmatpush1.msra.mxu0 0.0
    %3222 = vmatprep.subr.mxu0 0.0
    %3223 = vmatpush1.msra.mxu0 0.0
    %3224 = vmatprep.subr.mxu0 0.0
    %3225 = vmatpush1.msra.mxu0 0.0
    %3226 = vmatprep.subr.mxu0 0.0
    %3227 = vmatpush1.msra.mxu0 0.0
    %3228 = vmatprep.subr.mxu0 0.0
    %3229 = vmatpush1.msra.mxu0 0.0
    %3230 = vmatprep.mubr.f32.mxu0 0.0
    %3231 = vmatmul.mubr.f32.gmra.mrb[0].mxu0 %v3164
    %v3232 = vpop.f32.mrb[0].mxu0
    %v3233 = vadd.f32 0.0, %v3232
    %v3234 = vpop.f32.mrb[0].mxu0
    %3235 = vdwg.mxu0
    %v3236 = vadd.f32 %v3154, %v3233
    %3237 = vrot.lane.b32.xlu0 %v1942, 32
    %v3238 = vpop.permute.xlu0 %3237
    %3239 = vrot.lane.b32.xlu0 %v1947, 32
    %v3240 = vpop.permute.xlu0 %3239
    %v3244 = vsel %vm2600, %v2688, 0
    %3246 = vmatprep.subr.mxu0 0.0
    %3247 = vmatpush1.msra.mxu0 %v3238
    %3248 = vmatprep.subr.mxu0 0.0
    %3249 = vmatpush1.msra.mxu0 %v3240
    %3250 = vmatprep.subr.mxu0 0.0
    %3251 = vmatpush1.msra.mxu0 0.0
    %3252 = vmatprep.subr.mxu0 0.0
    %3253 = vmatpush1.msra.mxu0 0.0
    %3254 = vmatprep.subr.mxu0 0.0
    %3255 = vmatpush1.msra.mxu0 0.0
    %3256 = vmatprep.subr.mxu0 0.0
    %3257 = vmatpush1.msra.mxu0 0.0
    %3258 = vmatprep.subr.mxu0 0.0
    %3259 = vmatpush1.msra.mxu0 0.0
    %3260 = vmatprep.subr.mxu0 0.0
    %3261 = vmatpush1.msra.mxu0 0.0
    %3262 = vmatprep.subr.mxu0 0.0
    %3263 = vmatpush1.msra.mxu0 0.0
    %3264 = vmatprep.subr.mxu0 0.0
    %3265 = vmatpush1.msra.mxu0 0.0
    %3266 = vmatprep.subr.mxu0 0.0
    %3267 = vmatpush1.msra.mxu0 0.0
    %3268 = vmatprep.subr.mxu0 0.0
    %3269 = vmatpush1.msra.mxu0 0.0
    %3270 = vmatprep.subr.mxu0 0.0
    %3271 = vmatpush1.msra.mxu0 0.0
    %3272 = vmatprep.subr.mxu0 0.0
    %3273 = vmatpush1.msra.mxu0 0.0
    %3274 = vmatprep.subr.mxu0 0.0
    %3275 = vmatpush1.msra.mxu0 0.0
    %3276 = vmatprep.subr.mxu0 0.0
    %3277 = vmatpush1.msra.mxu0 0.0
    %3278 = vmatprep.subr.mxu0 0.0
    %3279 = vmatpush1.msra.mxu0 0.0
    %3280 = vmatprep.subr.mxu0 0.0
    %3281 = vmatpush1.msra.mxu0 0.0
    %3282 = vmatprep.subr.mxu0 0.0
    %3283 = vmatpush1.msra.mxu0 0.0
    %3284 = vmatprep.subr.mxu0 0.0
    %3285 = vmatpush1.msra.mxu0 0.0
    %3286 = vmatprep.subr.mxu0 0.0
    %3287 = vmatpush1.msra.mxu0 0.0
    %3288 = vmatprep.subr.mxu0 0.0
    %3289 = vmatpush1.msra.mxu0 0.0
    %3290 = vmatprep.subr.mxu0 0.0
    %3291 = vmatpush1.msra.mxu0 0.0
    %3292 = vmatprep.subr.mxu0 0.0
    %3293 = vmatpush1.msra.mxu0 0.0
    %3294 = vmatprep.subr.mxu0 0.0
    %3295 = vmatpush1.msra.mxu0 0.0
    %3296 = vmatprep.subr.mxu0 0.0
    %3297 = vmatpush1.msra.mxu0 0.0
    %3298 = vmatprep.subr.mxu0 0.0
    %3299 = vmatpush1.msra.mxu0 0.0
    %3300 = vmatprep.subr.mxu0 0.0
    %3301 = vmatpush1.msra.mxu0 0.0
    %3302 = vmatprep.subr.mxu0 0.0
    %3303 = vmatpush1.msra.mxu0 0.0
    %3304 = vmatprep.subr.mxu0 0.0
    %3305 = vmatpush1.msra.mxu0 0.0
    %3306 = vmatprep.subr.mxu0 0.0
    %3307 = vmatpush1.msra.mxu0 0.0
    %3308 = vmatprep.subr.mxu0 0.0
    %3309 = vmatpush1.msra.mxu0 0.0
    %3310 = vmatprep.mubr.f32.mxu0 0.0
    %3311 = vmatmul.mubr.f32.gmra.mrb[0].mxu0 %v3244
    %v3312 = vpop.f32.mrb[0].mxu0
    %v3313 = vadd.f32 0.0, %v3312
    %v3314 = vpop.f32.mrb[0].mxu0
    %3315 = vdwg.mxu0
    %v3316 = vadd.f32 %v3236, %v3313
    %3318 = vrot.lane.b32.xlu0 %v1570, 96
    %v3319 = vpop.permute.xlu0 %3318
    %v3321 = vadd.f32 %v3002, %v3319
    %v3322 = vadd.f32 %v3316, %v3319
    %v3323 = vadd.f32 %v1612, %v3321
    %v3324 = vadd.f32 %v1613, %v3322
    %v3325 = vsel %vm83, %v3323, 0.0
    %3326 = vadd.xlane.f32.xlu0 %v3325
    %v3327 = vpop.xlane.xlu0 %3326
    %v3328 = vsel %vm83, %v3324, 0.0
    %3329 = vadd.xlane.f32.xlu0 %v3328
    %v3330 = vpop.xlane.xlu0 %3329
    %v3331 = vmul.f32 %v3327, %v1581
    %v3332 = vmul.f32 %v3330, %v1581
    %v3333 = vsub.f32 %v3323, %v3331
    %v3334 = vsub.f32 %v3324, %v3332
    %v3335 = vmul.f32 %v3333, %v3333
    %v3336 = vmul.f32 %v3334, %v3334
    %v3337 = vsel %vm83, %v3335, 0.0
    %3338 = vadd.xlane.f32.xlu0 %v3337
    %v3339 = vpop.xlane.xlu0 %3338
    %v3340 = vsel %vm83, %v3336, 0.0
    %3341 = vadd.xlane.f32.xlu0 %v3340
    %v3342 = vpop.xlane.xlu0 %3341
    %v3343 = vmul.f32 %v3339, %v1581
    %v3344 = vmul.f32 %v3342, %v1581
    %v3345 = vadd.f32 %v3343, 1e-05
    %v3346 = vadd.f32 %v3344, 1e-05
    %v3347 = vrsqrt.pop %v3345
    %v3348 = vrsqrt.pop %v3346
    %v3349 = vmul.f32 %v3333, %v3347
    %v3350 = vmul.f32 %v3334, %v3348
    %3351 = vrot.lane.b32.xlu0 %v1605, 64
    %v3352 = vpop.permute.xlu0 %3351
    %v3354 = vmul.f32 %v3349, %v3352
    %v3355 = vmul.f32 %v3350, %v3352
    %3356 = vrot.lane.b32.xlu0 %v1605, 32
    %v3357 = vpop.permute.xlu0 %3356
    %v3359 = vadd.f32 %v3354, %v3357
    %v3360 = vadd.f32 %v3355, %v3357
    %v3361 = vlaneseq
    %v3362 = vshrl.u32 %v3361, 7
    %v3363 = vsub.s32 4, %v3362
    %v3364 = vrot.slane %v68, %v3363
    %v3366 = vsel %vm83, %v3359, 0
    %v3369 = vsel %vm83, %v3360, 0
    %3371 = vmatprep.subr.mxu0 0.0
    %3372 = vmatpush1.msra.mxu0 %v56
    %3373 = vmatprep.subr.mxu0 0.0
    %3374 = vmatpush1.msra.mxu0 %v57
    %3375 = vmatprep.subr.mxu0 0.0
    %3376 = vmatpush1.msra.mxu0 %v58
    %3377 = vmatprep.subr.mxu0 0.0
    %3378 = vmatpush1.msra.mxu0 %v59
    %3379 = vmatprep.subr.mxu0 0.0
    %3380 = vmatpush1.msra.mxu0 0.0
    %3381 = vmatprep.subr.mxu0 0.0
    %3382 = vmatpush1.msra.mxu0 0.0
    %3383 = vmatprep.subr.mxu0 0.0
    %3384 = vmatpush1.msra.mxu0 0.0
    %3385 = vmatprep.subr.mxu0 0.0
    %3386 = vmatpush1.msra.mxu0 0.0
    %3387 = vmatprep.subr.mxu0 0.0
    %3388 = vmatpush1.msra.mxu0 0.0
    %3389 = vmatprep.subr.mxu0 0.0
    %3390 = vmatpush1.msra.mxu0 0.0
    %3391 = vmatprep.subr.mxu0 0.0
    %3392 = vmatpush1.msra.mxu0 0.0
    %3393 = vmatprep.subr.mxu0 0.0
    %3394 = vmatpush1.msra.mxu0 0.0
    %3395 = vmatprep.subr.mxu0 0.0
    %3396 = vmatpush1.msra.mxu0 0.0
    %3397 = vmatprep.subr.mxu0 0.0
    %3398 = vmatpush1.msra.mxu0 0.0
    %3399 = vmatprep.subr.mxu0 0.0
    %3400 = vmatpush1.msra.mxu0 0.0
    %3401 = vmatprep.subr.mxu0 0.0
    %3402 = vmatpush1.msra.mxu0 0.0
    %3403 = vmatprep.subr.mxu0 0.0
    %3404 = vmatpush1.msra.mxu0 0.0
    %3405 = vmatprep.subr.mxu0 0.0
    %3406 = vmatpush1.msra.mxu0 0.0
    %3407 = vmatprep.subr.mxu0 0.0
    %3408 = vmatpush1.msra.mxu0 0.0
    %3409 = vmatprep.subr.mxu0 0.0
    %3410 = vmatpush1.msra.mxu0 0.0
    %3411 = vmatprep.subr.mxu0 0.0
    %3412 = vmatpush1.msra.mxu0 0.0
    %3413 = vmatprep.subr.mxu0 0.0
    %3414 = vmatpush1.msra.mxu0 0.0
    %3415 = vmatprep.subr.mxu0 0.0
    %3416 = vmatpush1.msra.mxu0 0.0
    %3417 = vmatprep.subr.mxu0 0.0
    %3418 = vmatpush1.msra.mxu0 0.0
    %3419 = vmatprep.subr.mxu0 0.0
    %3420 = vmatpush1.msra.mxu0 0.0
    %3421 = vmatprep.subr.mxu0 0.0
    %3422 = vmatpush1.msra.mxu0 0.0
    %3423 = vmatprep.subr.mxu0 0.0
    %3424 = vmatpush1.msra.mxu0 0.0
    %3425 = vmatprep.subr.mxu0 0.0
    %3426 = vmatpush1.msra.mxu0 0.0
    %3427 = vmatprep.subr.mxu0 0.0
    %3428 = vmatpush1.msra.mxu0 0.0
    %3429 = vmatprep.subr.mxu0 0.0
    %3430 = vmatpush1.msra.mxu0 0.0
    %3431 = vmatprep.subr.mxu0 0.0
    %3432 = vmatpush1.msra.mxu0 0.0
    %3433 = vmatprep.subr.mxu0 0.0
    %3434 = vmatpush1.msra.mxu0 0.0
    %3435 = vmatprep.mubr.f32.mxu0 0.0
    %3436 = vmatmul.mubr.f32.gmra.mrb[0].mxu0 %v3366
    %v3437 = vpop.f32.mrb[0].mxu0
    %v3438 = vadd.f32 %v3364, %v3437
    %v3439 = vpop.f32.mrb[0].mxu0
    %3440 = vmatprep.mubr.f32.mxu0 0.0
    %3441 = vmatmul.mubr.f32.gmra.mrb[0].mxu0 %v3369
    %v3442 = vpop.f32.mrb[0].mxu0
    %v3443 = vadd.f32 %v3364, %v3442
    %v3444 = vpop.f32.mrb[0].mxu0
    %3445 = vdwg.mxu0
    %v3446 = vmax.f32 %v3438, 0.0
    %v3447 = vmax.f32 %v3443, 0.0
    %3448 = vrot.lane.b32.xlu0 %v1570, 64
    %v3449 = vpop.permute.xlu0 %3448
    %vm3451 = vcmask 523264
    %v3453 = vsel %vm3451, %v3446, 0
    %v3456 = vsel %vm3451, %v3447, 0
    %3458 = vmatprep.subr.mxu0 0.0
    %3459 = vmatpush1.msra.mxu0 %v60
    %3460 = vmatprep.subr.mxu0 0.0
    %3461 = vmatpush1.msra.mxu0 %v61
    %3462 = vmatprep.subr.mxu0 0.0
    %3463 = vmatpush1.msra.mxu0 %v62
    %3464 = vmatprep.subr.mxu0 0.0
    %3465 = vmatpush1.msra.mxu0 %v63
    %3466 = vmatprep.subr.mxu0 0.0
    %3467 = vmatpush1.msra.mxu0 %v64
    %3468 = vmatprep.subr.mxu0 0.0
    %3469 = vmatpush1.msra.mxu0 %v65
    %3470 = vmatprep.subr.mxu0 0.0
    %3471 = vmatpush1.msra.mxu0 %v66
    %3472 = vmatprep.subr.mxu0 0.0
    %3473 = vmatpush1.msra.mxu0 %v67
    %3474 = vmatprep.subr.mxu0 0.0
    %3475 = vmatpush1.msra.mxu0 0.0
    %3476 = vmatprep.subr.mxu0 0.0
    %3477 = vmatpush1.msra.mxu0 0.0
    %3478 = vmatprep.subr.mxu0 0.0
    %3479 = vmatpush1.msra.mxu0 0.0
    %3480 = vmatprep.subr.mxu0 0.0
    %3481 = vmatpush1.msra.mxu0 0.0
    %3482 = vmatprep.subr.mxu0 0.0
    %3483 = vmatpush1.msra.mxu0 0.0
    %3484 = vmatprep.subr.mxu0 0.0
    %3485 = vmatpush1.msra.mxu0 0.0
    %3486 = vmatprep.subr.mxu0 0.0
    %3487 = vmatpush1.msra.mxu0 0.0
    %3488 = vmatprep.subr.mxu0 0.0
    %3489 = vmatpush1.msra.mxu0 0.0
    %3490 = vmatprep.subr.mxu0 0.0
    %3491 = vmatpush1.msra.mxu0 0.0
    %3492 = vmatprep.subr.mxu0 0.0
    %3493 = vmatpush1.msra.mxu0 0.0
    %3494 = vmatprep.subr.mxu0 0.0
    %3495 = vmatpush1.msra.mxu0 0.0
    %3496 = vmatprep.subr.mxu0 0.0
    %3497 = vmatpush1.msra.mxu0 0.0
    %3498 = vmatprep.subr.mxu0 0.0
    %3499 = vmatpush1.msra.mxu0 0.0
    %3500 = vmatprep.subr.mxu0 0.0
    %3501 = vmatpush1.msra.mxu0 0.0
    %3502 = vmatprep.subr.mxu0 0.0
    %3503 = vmatpush1.msra.mxu0 0.0
    %3504 = vmatprep.subr.mxu0 0.0
    %3505 = vmatpush1.msra.mxu0 0.0
    %3506 = vmatprep.subr.mxu0 0.0
    %3507 = vmatpush1.msra.mxu0 0.0
    %3508 = vmatprep.subr.mxu0 0.0
    %3509 = vmatpush1.msra.mxu0 0.0
    %3510 = vmatprep.subr.mxu0 0.0
    %3511 = vmatpush1.msra.mxu0 0.0
    %3512 = vmatprep.subr.mxu0 0.0
    %3513 = vmatpush1.msra.mxu0 0.0
    %3514 = vmatprep.subr.mxu0 0.0
    %3515 = vmatpush1.msra.mxu0 0.0
    %3516 = vmatprep.subr.mxu0 0.0
    %3517 = vmatpush1.msra.mxu0 0.0
    %3518 = vmatprep.subr.mxu0 0.0
    %3519 = vmatpush1.msra.mxu0 0.0
    %3520 = vmatprep.subr.mxu0 0.0
    %3521 = vmatpush1.msra.mxu0 0.0
    %3522 = vmatprep.mubr.f32.mxu0 0.0
    %3523 = vmatmul.mubr.f32.gmra.mrb[0].mxu0 %v3453
    %v3524 = vpop.f32.mrb[0].mxu0
    %v3525 = vadd.f32 %v3449, %v3524
    %v3526 = vpop.f32.mrb[0].mxu0
    %3527 = vmatprep.mubr.f32.mxu0 0.0
    %3528 = vmatmul.mubr.f32.gmra.mrb[0].mxu0 %v3456
    %v3529 = vpop.f32.mrb[0].mxu0
    %v3530 = vadd.f32 %v3449, %v3529
    %v3531 = vpop.f32.mrb[0].mxu0
    %3532 = vdwg.mxu0
    %v3533 = vadd.f32 %v3359, %v3525
    %v3534 = vadd.f32 %v3360, %v3530
    %v3535 = vsel %vm83, %v3533, 0.0
    %3536 = vadd.xlane.f32.xlu0 %v3535
    %v3537 = vpop.xlane.xlu0 %3536
    %v3538 = vsel %vm83, %v3534, 0.0
    %3539 = vadd.xlane.f32.xlu0 %v3538
    %v3540 = vpop.xlane.xlu0 %3539
    %v3541 = vmul.f32 %v3537, %v1581
    %v3542 = vmul.f32 %v3540, %v1581
    %v3543 = vsub.f32 %v3533, %v3541
    %v3544 = vsub.f32 %v3534, %v3542
    %v3545 = vmul.f32 %v3543, %v3543
    %v3546 = vmul.f32 %v3544, %v3544
    %v3547 = vsel %vm83, %v3545, 0.0
    %3548 = vadd.xlane.f32.xlu0 %v3547
    %v3549 = vpop.xlane.xlu0 %3548
    %v3550 = vsel %vm83, %v3546, 0.0
    %3551 = vadd.xlane.f32.xlu0 %v3550
    %v3552 = vpop.xlane.xlu0 %3551
    %v3553 = vmul.f32 %v3549, %v1581
    %v3554 = vmul.f32 %v3552, %v1581
    %v3555 = vadd.f32 %v3553, 1e-05
    %v3556 = vadd.f32 %v3554, 1e-05
    %v3557 = vrsqrt.pop %v3555
    %v3558 = vrsqrt.pop %v3556
    %v3559 = vmul.f32 %v3543, %v3557
    %v3560 = vmul.f32 %v3544, %v3558
    %v3561 = vlaneseq
    %v3562 = vshrl.u32 %v3561, 7
    %v3563 = vsub.s32 6, %v3562
    %v3564 = vrot.slane %v68, %v3563
    %v3565 = vmul.f32 %v3559, %v3564
    %v3566 = vmul.f32 %v3560, %v3564
    %3568 = vrot.lane.b32.xlu0 %v3564, 96
    %v3569 = vpop.permute.xlu0 %3568
    %v3571 = vadd.f32 %v3565, %v3569
    %v3572 = vadd.f32 %v3566, %v3569
    %3573 = vst.msk [vmem:[#allocation7] sm:$0xff] %vm83, %v3571
    %3574 = vst.msk [vmem:[#allocation7 + $0x8] sm:$0xff] %vm83, %v3572
    // Predicated region
    $region18: #{tpu_custom_call.1} parent=1 // pred_check
      _
    $region19: #{tpu_custom_call.1} parent=1 // pred_check_branch
      %3576 = sbr.rel (0) target = $region21
    $region20: #{tpu_custom_call.1} parent=1 // pred_region
      %s3578 = ssub.s32 256, 256
      %3579 = vsyncadd [#allocation4], %s3578
      %s3580 = sshll.u32 [#allocation7], 4
      %s3581 = int_to_ptr.vmem [resolvable:$true] %s3580
      %3586 = dma.vmem_to_hbm [thread:$0]  %s3581, 256, %s2, [#allocation4], 128, 128, 8
    $region21: #{tpu_custom_call.1} parent=1 // pred_fallthru
      _
    // Predicated region
    $region22: #{tpu_custom_call.1} parent=1 // pred_check
      _
    $region23: #{tpu_custom_call.1} parent=1 // pred_check_branch
      %3588 = sbr.rel (0) target = $region25
    $region24: #{tpu_custom_call.1} parent=1 // pred_region
      %3589 = dma.done [#allocation4], 256
    $region25: #{tpu_custom_call.1} parent=1 // pred_fallthru
      _
    %3590 = vsyncpa [#allocation3], 1
    %3591 = vsyncpa [#allocation6], 1
    %3592 = vsyncpa [#allocation4], 1

</llo_original>
